<compile_context>
chip_gen: v6e
topology: v6e:2x2x1
jax: 0.10.0
libtpu: 0.0.40
codegen_flags: <defaults>
</compile_context>

<pallas_src>
import functools

import jax
import jax.numpy as jnp
from jax import lax
from jax.experimental import pallas as pl
from jax.experimental.pallas import tpu as pltpu

NUM_HEADS = 4
LN_EPS = 1e-5
BF16 = jnp.bfloat16
F32 = jnp.float32


# -----------------------------------------------------------------------------
# Math helpers (pure jnp; shared by the Pallas kernel body and the JAX reference)
# -----------------------------------------------------------------------------
def _mm(a, w):
    """MXU matmul: bf16 operands, f32 accumulation."""
    return jnp.dot(a.astype(BF16), w.astype(BF16), preferred_element_type=F32)


def _layer_norm(x, gamma, beta):
    mu = jnp.mean(x, axis=-1, keepdims=True)
    var = jnp.mean((x - mu) ** 2, axis=-1, keepdims=True)
    return (x - mu) * lax.rsqrt(var + LN_EPS) * gamma[None, :] + beta[None, :]


def _attn(q_in, k_in, v_in, w_qkv, b_qkv, w_o, b_o, recip, fuse_qk):
    """Multi-head attention with fused lane-dense projections.

    w_qkv: (C, 3C) bf16, columns = [Wq | Wk | Wv] (head-major inside each block)
    b_qkv: (3C,) f32          w_o: (C, C) bf16          b_o: (C,) f32
    fuse_qk=True requires q_in and k_in to be the same tensor (self-attention).
    """
    c = q_in.shape[-1]
    h, d = NUM_HEADS, c // NUM_HEADS
    scale = 1.0 / float(d) ** 0.5

    if fuse_qk:                       # self-attn: one (n,C)x(C,2C) dot for Q and K
        qk = _mm(q_in, w_qkv[:, :2 * c]) + b_qkv[None, :2 * c]
        q2, k2 = qk[:, :c], qk[:, c:]
    else:                             # cross-attn: distinct q / k inputs
        q2 = _mm(q_in, w_qkv[:, :c]) + b_qkv[None, :c]
        k2 = _mm(k_in, w_qkv[:, c:2 * c]) + b_qkv[None, c:2 * c]
    v2 = _mm(v_in, w_qkv[:, 2 * c:]) + b_qkv[None, 2 * c:]

    # Head split via static lane slices + leading-dim stack (no minor-dim reshape),
    # then head-batched score / context matmuls.
    q3 = jnp.stack([q2[:, i * d:(i + 1) * d] for i in range(h)], axis=0)   # (H, nq, d)
    k3 = jnp.stack([k2[:, i * d:(i + 1) * d] for i in range(h)], axis=0)   # (H, nk, d)
    v3 = jnp.stack([v2[:, i * d:(i + 1) * d] for i in range(h)], axis=0)   # (H, nk, d)

    s = jnp.einsum('hqd,hkd->hqk', q3.astype(BF16), k3.astype(BF16),
                   preferred_element_type=F32) * scale
    s = s - jnp.max(s, axis=-1, keepdims=True)                 # f32 softmax
    p = jnp.exp(s)
    p = p * recip(jnp.sum(p, axis=-1, keepdims=True))
    ctx3 = jnp.einsum('hqk,hkd->hqd', p.astype(BF16), v3.astype(BF16),
                      preferred_element_type=F32)                          # (H, nq, d)

    ctx = jnp.concatenate([ctx3[i] for i in range(h)], axis=-1)            # (nq, C) head-major
    return _mm(ctx, w_o) + b_o[None, :]


def _decoder_layer(x, qpos, mem, kv_in, w_qkv, b_qkv, w_o, w1, b1, w2, vec, recip):
    """One DETR decoder layer (post-norm).  Returns (x_next, post_normed_intermediate).

    w_qkv: (2, C, 3C)   b_qkv: (2, 3C)   w_o: (2, C, C)       [0]=self, [1]=cross
    w1: (C, F)  b1: (1, F)  w2: (F, C)
    vec: (11, C) rows = [bo_self, bo_cross, g1,b1, g2,b2, g3,b3, g_post,b_post, ffn_b2]
    """
    # self attention: q = k = x + query_pos, v = x ; residual + LN
    qk_in = x + qpos
    sa = _attn(qk_in, qk_in, x, w_qkv[0], b_qkv[0], w_o[0], vec[0], recip, fuse_qk=True)
    x = _layer_norm(x + sa, vec[2], vec[3])

    # cross attention: q = x + query_pos, k = memory + key_pos, v = memory ; residual + LN
    ca = _attn(x + qpos, kv_in, mem, w_qkv[1], b_qkv[1], w_o[1], vec[1], recip, fuse_qk=False)
    x = _layer_norm(x + ca, vec[4], vec[5])

    # FFN: Linear -> ReLU -> Linear ; residual + LN
    hdn = jnp.maximum(_mm(x, w1) + b1, 0.0)
    y = _mm(hdn, w2) + vec[10][None, :]
    x = _layer_norm(x + y, vec[6], vec[7])

    return x, _layer_norm(x, vec[8], vec[9])


# -----------------------------------------------------------------------------
# Pallas kernel: whole decoder stack for one batch element, layers unrolled.
# -----------------------------------------------------------------------------
def decoder_stack_kernel(tgt_ref, qpos_ref, mem_ref, kpos_ref,
                         w_qkv_ref, w_o_ref, w1_ref, b1_ref, w2_ref,
                         b_qkv_ref, vec_ref, out_ref):
    recip = functools.partial(pl.reciprocal, approx=True)
    num_layers = w_qkv_ref.shape[0]
    nq = tgt_ref.shape[1]

    x = tgt_ref[0]                       # (nq, C) f32 — stays on-chip across layers
    qpos = qpos_ref[0]
    mem = mem_ref[0]                     # (nk, C)
    kv_in = mem + kpos_ref[0]            # hoisted: computed once, reused by every layer

    rows = []
    for l in range(num_layers):          # fully unrolled layer loop
        x, inter = _decoder_layer(
            x, qpos, mem, kv_in,
            w_qkv_ref[l], b_qkv_ref[l], w_o_ref[l],
            w1_ref[l], b1_ref[l], w2_ref[l], vec_ref[l], recip)
        # flatten (nq, C) -> (1, nq*C) via lane concatenation (lane-dense store)
        rows.append(jnp.concatenate([inter[i:i + 1, :] for i in range(nq)], axis=1))

    out_ref[0] = jnp.concatenate(rows, axis=0)   # single (num_layers, nq*C) store


def petr_decoder_call(tgt, query_pos, memory, pos_embed, params):
    bs, nq, c = tgt.shape
    num_layers = params["w_qkv"].shape[0]

    def batch_spec(arr):                 # tile the leading batch dim only
        n_rest = arr.ndim - 1
        return pl.BlockSpec((1,) + tuple(arr.shape[1:]),
                            lambda b, _n=n_rest: (b,) + (0,) * _n)

    def whole_spec(arr):                 # small weight stacks: pass untiled
        n = arr.ndim
        return pl.BlockSpec(tuple(arr.shape), lambda b, _n=n: (0,) * _n)

    out_flat = pl.pallas_call(
        decoder_stack_kernel,
        out_shape=jax.ShapeDtypeStruct((bs, num_layers, nq * c), jnp.float32),
        grid=(bs,),
        in_specs=[
            batch_spec(tgt), batch_spec(query_pos),
            batch_spec(memory), batch_spec(pos_embed),
            whole_spec(params["w_qkv"]), whole_spec(params["w_o"]),
            whole_spec(params["w_ffn1"]), whole_spec(params["b_ffn1"]),
            whole_spec(params["w_ffn2"]),
            whole_spec(params["b_qkv"]), whole_spec(params["vec"]),
        ],
        out_specs=pl.BlockSpec((1, num_layers, nq * c), lambda b: (b, 0, 0)),
        compiler_params=pltpu.CompilerParams(
            dimension_semantics=("parallel",)),      # batch shards across TCs on v7x
    )(tgt, query_pos, memory, pos_embed,
      params["w_qkv"], params["w_o"], params["w_ffn1"], params["b_ffn1"],
      params["w_ffn2"], params["b_qkv"], params["vec"])

    # (B, L, nq*C) -> (L, B, nq, C)
    return jnp.transpose(out_flat.reshape(bs, num_layers, nq, c), (1, 0, 2, 3))


# ---------------- PETRTemporalTransformer_.forward equivalent ----------------
def petr_transformer_forward(memory, tgt, query_pos, pos_embed, params,
                             attn_masks=None, temp_memory=None, temp_pos=None,
                             mask=None, query_mask=None, reg_branch=None):
    if not isinstance(attn_masks, list):
        attn_masks = [attn_masks, None]
    assert all(m is None for m in attn_masks)
    assert mask is None and query_mask is None
    assert temp_memory is None and temp_pos is None
    if tgt is None:
        tgt = jnp.zeros_like(query_pos)
    out_dec = petr_decoder_call(tgt, query_pos, memory, pos_embed, params)
    return out_dec, memory               # memory round-trips unchanged in PyTorch too


# ---------------- deterministic parameter init (natural layout) ----------------
def init_params(key, num_layers, c, f):
    key, kg, kb = jax.random.split(key, 3)
    post_g = 1.0 + 0.1 * jax.random.normal(kg, (c,), F32)   # shared post-norm
    post_b = 0.1 * jax.random.normal(kb, (c,), F32)
    layers = []
    for _ in range(num_layers):
        key, k1, k2, k3, k4, k5, k6, k7, k8 = jax.random.split(key, 9)
        layers.append(dict(
            attn_w=jax.random.normal(k1, (2, 4, c, c), F32) * (c ** -0.5),  # [self|cross] x [Wq,Wk,Wv,Wo]
            attn_b=0.1 * jax.random.normal(k6, (2, 4, c), F32),
            ln_g=jnp.concatenate(
                [1.0 + 0.1 * jax.random.normal(k4, (3, c), F32), post_g[None]], axis=0),
            ln_b=jnp.concatenate(
                [0.1 * jax.random.normal(k5, (3, c), F32), post_b[None]], axis=0),
            ffn_w1=jax.random.normal(k2, (c, f), F32) * (c ** -0.5),
            ffn_b1=0.1 * jax.random.normal(k7, (f,), F32),
            ffn_w2=jax.random.normal(k3, (f, c), F32) * (f ** -0.5),
            ffn_b2=0.1 * jax.random.normal(k8, (c,), F32),
        ))
    return layers


# -------- pack per-layer params into tile-friendly stacked kernel buffers --------
def pack_params(layers):
    w_qkv, w_o, b_qkv, w1, b1, w2, vec = [], [], [], [], [], [], []
    for lp in layers:
        w_qkv.append(jnp.stack(
            [jnp.concatenate([lp["attn_w"][a, p] for p in range(3)], axis=1)   # (C, 3C)
             for a in range(2)], axis=0))
        w_o.append(jnp.stack([lp["attn_w"][a, 3] for a in range(2)], axis=0))  # (2, C, C)
        b_qkv.append(jnp.stack(
            [jnp.concatenate([lp["attn_b"][a, p] for p in range(3)], axis=0)   # (3C,)
             for a in range(2)], axis=0))
        w1.append(lp["ffn_w1"])
        b1.append(lp["ffn_b1"][None, :])                                       # (1, F)
        w2.append(lp["ffn_w2"])
        vec.append(jnp.stack(
            [lp["attn_b"][0, 3], lp["attn_b"][1, 3],
             lp["ln_g"][0], lp["ln_b"][0], lp["ln_g"][1], lp["ln_b"][1],
             lp["ln_g"][2], lp["ln_b"][2], lp["ln_g"][3], lp["ln_b"][3],
             lp["ffn_b2"]], axis=0))                                            # (11, C)
    return dict(
        w_qkv=jnp.stack(w_qkv).astype(BF16),    # (L, 2, C, 3C)
        w_o=jnp.stack(w_o).astype(BF16),        # (L, 2, C, C)
        b_qkv=jnp.stack(b_qkv).astype(F32),     # (L, 2, 3C)
        w_ffn1=jnp.stack(w1).astype(BF16),      # (L, C, F)
        b_ffn1=jnp.stack(b1).astype(F32),       # (L, 1, F)
        w_ffn2=jnp.stack(w2).astype(BF16),      # (L, F, C)
        vec=jnp.stack(vec).astype(F32),         # (L, 11, C)
    )


# ---------------- pure-JAX reference (same math; exact reciprocal) ----------------
def ref_forward(tgt, query_pos, memory, pos_embed, params):
    num_layers = params["w_qkv"].shape[0]
    exact = lambda t: 1.0 / t
    x = tgt
    inters = []
    for l in range(num_layers):
        def layer_fn(x_b, q_b, m_b, k_b, l=l):
            return _decoder_layer(
                x_b, q_b, m_b, m_b + k_b,
                params["w_qkv"][l], params["b_qkv"][l], params["w_o"][l],
                params["w_ffn1"][l], params["b_ffn1"][l], params["w_ffn2"][l],
                params["vec"][l], exact)
        x, inter = jax.vmap(layer_fn)(x, query_pos, memory, pos_embed)
        inters.append(inter)
    return jnp.stack(inters, axis=0)        # (L, B, nq, C)


if __name__ == "__main__":
    key = jax.random.PRNGKey(0)
    bs, n_mem, nq, c, f, num_layers = 2, 16, 8, 32, 64, 2
    k_mem, k_qpos, k_pos, k_par = jax.random.split(key, 4)

    memory = jax.random.normal(k_mem, (bs, n_mem, c), F32)       # (B, N, C)
    query_pos = jax.random.normal(k_qpos, (bs, nq, c), F32)      # (B, NQ, C)
    pos_embed = jax.random.normal(k_pos, (bs, n_mem, c), F32)    # (B, N, C)
    params = pack_params(init_params(k_par, num_layers, c, f))

    out_dec, mem_out = petr_transformer_forward(
        memory, None, query_pos, pos_embed, params, attn_masks=[None, None])
    out_dec = jax.block_until_ready(out_dec)
    mem_out = jax.block_until_ready(mem_out)

    # correctness check against the pure-JAX reference
    ref_dec = ref_forward(jnp.zeros_like(query_pos), query_pos, memory, pos_embed, params)

    assert out_dec.shape == (num_layers, bs, nq, c), out_dec.shape
    assert mem_out.shape == (bs, n_mem, c)
    max_err = float(jnp.max(jnp.abs(out_dec - ref_dec)))
    assert jnp.allclose(out_dec, ref_dec, atol=2e-2, rtol=2e-2), max_err
    assert jnp.array_equal(mem_out, memory)
    print("KERNEL_OK")
</pallas_src>

<mosaic_0001>
module attributes {stable_mosaic.version = 11 : i64} {
  func.func @decoder_stack_kernel(%arg0: i32, %arg1: memref<1x8x32xf32, #tpu.memory_space<vmem>>, %arg2: memref<1x8x32xf32, #tpu.memory_space<vmem>>, %arg3: memref<1x16x32xf32, #tpu.memory_space<vmem>>, %arg4: memref<1x16x32xf32, #tpu.memory_space<vmem>>, %arg5: memref<2x2x32x96xbf16, #tpu.memory_space<vmem>>, %arg6: memref<2x2x32x32xbf16, #tpu.memory_space<vmem>>, %arg7: memref<2x32x64xbf16, #tpu.memory_space<vmem>>, %arg8: memref<2x1x64xf32, #tpu.memory_space<vmem>>, %arg9: memref<2x64x32xbf16, #tpu.memory_space<vmem>>, %arg10: memref<2x2x96xf32, #tpu.memory_space<vmem>>, %arg11: memref<2x11x32xf32, #tpu.memory_space<vmem>>, %arg12: memref<1x2x256xf32, #tpu.memory_space<vmem>>) attributes {dimension_semantics = [#tpu.dimension_semantics<parallel>], iteration_bounds = array<i64: 2>, scalar_prefetch = 0 : i64, scratch_operands = 0 : i64, tpu.core_type = #tpu.core_type<tc>, window_params = [{transform_indices = @transform_0, window_bounds = array<i64: 1, 8, 32>}, {transform_indices = @transform_1, window_bounds = array<i64: 1, 8, 32>}, {transform_indices = @transform_2, window_bounds = array<i64: 1, 16, 32>}, {transform_indices = @transform_3, window_bounds = array<i64: 1, 16, 32>}, {pipeline_mode = #tpu.pipeline_mode<synchronous>, transform_indices = @transform_4, window_bounds = array<i64: 2, 2, 32, 96>}, {pipeline_mode = #tpu.pipeline_mode<synchronous>, transform_indices = @transform_5, window_bounds = array<i64: 2, 2, 32, 32>}, {pipeline_mode = #tpu.pipeline_mode<synchronous>, transform_indices = @transform_6, window_bounds = array<i64: 2, 32, 64>}, {pipeline_mode = #tpu.pipeline_mode<synchronous>, transform_indices = @transform_7, window_bounds = array<i64: 2, 1, 64>}, {pipeline_mode = #tpu.pipeline_mode<synchronous>, transform_indices = @transform_8, window_bounds = array<i64: 2, 64, 32>}, {pipeline_mode = #tpu.pipeline_mode<synchronous>, transform_indices = @transform_9, window_bounds = array<i64: 2, 2, 96>}, {pipeline_mode = #tpu.pipeline_mode<synchronous>, transform_indices = @transform_10, window_bounds = array<i64: 2, 11, 32>}, {transform_indices = @transform_11, window_bounds = array<i64: 1, 2, 256>}]} {
    %c0 = arith.constant 0 : index
    %c0_0 = arith.constant 0 : index
    %c0_1 = arith.constant 0 : index
    %0 = vector.load %arg1[%c0, %c0_0, %c0_1] : memref<1x8x32xf32, #tpu.memory_space<vmem>>, vector<1x8x32xf32>
    %1 = vector.shape_cast %0 : vector<1x8x32xf32> to vector<8x32xf32>
    %c0_2 = arith.constant 0 : index
    %c0_3 = arith.constant 0 : index
    %c0_4 = arith.constant 0 : index
    %2 = vector.load %arg2[%c0_2, %c0_3, %c0_4] : memref<1x8x32xf32, #tpu.memory_space<vmem>>, vector<1x8x32xf32>
    %3 = vector.shape_cast %2 : vector<1x8x32xf32> to vector<8x32xf32>
    %c0_5 = arith.constant 0 : index
    %c0_6 = arith.constant 0 : index
    %c0_7 = arith.constant 0 : index
    %4 = vector.load %arg3[%c0_5, %c0_6, %c0_7] : memref<1x16x32xf32, #tpu.memory_space<vmem>>, vector<1x16x32xf32>
    %5 = vector.shape_cast %4 : vector<1x16x32xf32> to vector<16x32xf32>
    %c0_8 = arith.constant 0 : index
    %c0_9 = arith.constant 0 : index
    %c0_10 = arith.constant 0 : index
    %6 = vector.load %arg4[%c0_8, %c0_9, %c0_10] : memref<1x16x32xf32, #tpu.memory_space<vmem>>, vector<1x16x32xf32>
    %7 = vector.shape_cast %6 : vector<1x16x32xf32> to vector<16x32xf32>
    %8 = arith.addf %5, %7 : vector<16x32xf32>
    %c0_11 = arith.constant 0 : index
    %c0_12 = arith.constant 0 : index
    %c0_13 = arith.constant 0 : index
    %c0_14 = arith.constant 0 : index
    %9 = vector.load %arg5[%c0_11, %c0_12, %c0_13, %c0_14] : memref<2x2x32x96xbf16, #tpu.memory_space<vmem>>, vector<1x2x32x96xbf16>
    %10 = vector.shape_cast %9 : vector<1x2x32x96xbf16> to vector<2x32x96xbf16>
    %c0_15 = arith.constant 0 : index
    %c0_16 = arith.constant 0 : index
    %c0_17 = arith.constant 0 : index
    %11 = vector.load %arg10[%c0_15, %c0_16, %c0_17] : memref<2x2x96xf32, #tpu.memory_space<vmem>>, vector<1x2x96xf32>
    %12 = vector.shape_cast %11 : vector<1x2x96xf32> to vector<2x96xf32>
    %c0_18 = arith.constant 0 : index
    %c0_19 = arith.constant 0 : index
    %c0_20 = arith.constant 0 : index
    %c0_21 = arith.constant 0 : index
    %13 = vector.load %arg6[%c0_18, %c0_19, %c0_20, %c0_21] : memref<2x2x32x32xbf16, #tpu.memory_space<vmem>>, vector<1x2x32x32xbf16>
    %14 = vector.shape_cast %13 : vector<1x2x32x32xbf16> to vector<2x32x32xbf16>
    %c0_22 = arith.constant 0 : index
    %c0_23 = arith.constant 0 : index
    %c0_24 = arith.constant 0 : index
    %15 = vector.load %arg7[%c0_22, %c0_23, %c0_24] : memref<2x32x64xbf16, #tpu.memory_space<vmem>>, vector<1x32x64xbf16>
    %16 = vector.shape_cast %15 : vector<1x32x64xbf16> to vector<32x64xbf16>
    %c0_25 = arith.constant 0 : index
    %c0_26 = arith.constant 0 : index
    %c0_27 = arith.constant 0 : index
    %17 = vector.load %arg8[%c0_25, %c0_26, %c0_27] : memref<2x1x64xf32, #tpu.memory_space<vmem>>, vector<1x1x64xf32>
    %18 = vector.shape_cast %17 : vector<1x1x64xf32> to vector<1x64xf32>
    %c0_28 = arith.constant 0 : index
    %c0_29 = arith.constant 0 : index
    %c0_30 = arith.constant 0 : index
    %19 = vector.load %arg9[%c0_28, %c0_29, %c0_30] : memref<2x64x32xbf16, #tpu.memory_space<vmem>>, vector<1x64x32xbf16>
    %20 = vector.shape_cast %19 : vector<1x64x32xbf16> to vector<64x32xbf16>
    %c0_31 = arith.constant 0 : index
    %c0_32 = arith.constant 0 : index
    %c0_33 = arith.constant 0 : index
    %21 = vector.load %arg11[%c0_31, %c0_32, %c0_33] : memref<2x11x32xf32, #tpu.memory_space<vmem>>, vector<1x11x32xf32>
    %22 = vector.shape_cast %21 : vector<1x11x32xf32> to vector<11x32xf32>
    %23 = arith.addf %1, %3 : vector<8x32xf32>
    %24 = vector.extract_strided_slice %10 {offsets = [0, 0, 0], sizes = [1, 32, 96], strides = [1, 1, 1]} : vector<2x32x96xbf16> to vector<1x32x96xbf16>
    %25 = vector.shape_cast %24 : vector<1x32x96xbf16> to vector<32x96xbf16>
    %26 = vector.extract_strided_slice %12 {offsets = [0, 0], sizes = [1, 96], strides = [1, 1]} : vector<2x96xf32> to vector<1x96xf32>
    %27 = vector.shape_cast %26 : vector<1x96xf32> to vector<96xf32>
    %28 = vector.extract_strided_slice %14 {offsets = [0, 0, 0], sizes = [1, 32, 32], strides = [1, 1, 1]} : vector<2x32x32xbf16> to vector<1x32x32xbf16>
    %29 = vector.shape_cast %28 : vector<1x32x32xbf16> to vector<32x32xbf16>
    %30 = vector.extract_strided_slice %22 {offsets = [0, 0], sizes = [1, 32], strides = [1, 1]} : vector<11x32xf32> to vector<1x32xf32>
    %31 = vector.shape_cast %30 : vector<1x32xf32> to vector<32xf32>
    %32 = vector.extract_strided_slice %25 {offsets = [0, 0], sizes = [32, 64], strides = [1, 1]} : vector<32x96xbf16> to vector<32x64xbf16>
    %33 = arith.truncf %23 : vector<8x32xf32> to vector<8x32xbf16>
    %cst = arith.constant dense<0.000000e+00> : vector<8x64xf32>
    %34 = tpu.matmul %33, %32, %cst {dimension_numbers = #tpu.dot_dimension_numbers<[1], [0], [0], [1], [0, 0, 1, 1], [], []>} : vector<8x32xbf16>, vector<32x64xbf16>, vector<8x64xf32> -> vector<8x64xf32>
    %35 = vector.extract_strided_slice %27 {offsets = [0], sizes = [64], strides = [1]} : vector<96xf32> to vector<64xf32>
    %36 = vector.shape_cast %35 : vector<64xf32> to vector<1x64xf32>
    %37 = vector.broadcast %36 : vector<1x64xf32> to vector<8x64xf32>
    %38 = arith.addf %34, %37 : vector<8x64xf32>
    %39 = vector.extract_strided_slice %38 {offsets = [0, 0], sizes = [8, 32], strides = [1, 1]} : vector<8x64xf32> to vector<8x32xf32>
    %40 = vector.extract_strided_slice %38 {offsets = [0, 32], sizes = [8, 32], strides = [1, 1]} : vector<8x64xf32> to vector<8x32xf32>
    %41 = vector.extract_strided_slice %25 {offsets = [0, 64], sizes = [32, 32], strides = [1, 1]} : vector<32x96xbf16> to vector<32x32xbf16>
    %42 = arith.truncf %1 : vector<8x32xf32> to vector<8x32xbf16>
    %cst_34 = arith.constant dense<0.000000e+00> : vector<8x32xf32>
    %43 = tpu.matmul %42, %41, %cst_34 {dimension_numbers = #tpu.dot_dimension_numbers<[1], [0], [0], [1], [0, 0, 1, 1], [], []>} : vector<8x32xbf16>, vector<32x32xbf16>, vector<8x32xf32> -> vector<8x32xf32>
    %44 = vector.extract_strided_slice %27 {offsets = [64], sizes = [32], strides = [1]} : vector<96xf32> to vector<32xf32>
    %45 = vector.shape_cast %44 : vector<32xf32> to vector<1x32xf32>
    %46 = vector.broadcast %45 : vector<1x32xf32> to vector<8x32xf32>
    %47 = arith.addf %43, %46 : vector<8x32xf32>
    %48 = vector.extract_strided_slice %39 {offsets = [0, 0], sizes = [8, 8], strides = [1, 1]} : vector<8x32xf32> to vector<8x8xf32>
    %49 = vector.extract_strided_slice %39 {offsets = [0, 8], sizes = [8, 8], strides = [1, 1]} : vector<8x32xf32> to vector<8x8xf32>
    %50 = vector.extract_strided_slice %39 {offsets = [0, 16], sizes = [8, 8], strides = [1, 1]} : vector<8x32xf32> to vector<8x8xf32>
    %51 = vector.extract_strided_slice %39 {offsets = [0, 24], sizes = [8, 8], strides = [1, 1]} : vector<8x32xf32> to vector<8x8xf32>
    %52 = vector.shape_cast %48 : vector<8x8xf32> to vector<1x8x8xf32>
    %53 = vector.shape_cast %49 : vector<8x8xf32> to vector<1x8x8xf32>
    %54 = vector.shape_cast %50 : vector<8x8xf32> to vector<1x8x8xf32>
    %55 = vector.shape_cast %51 : vector<8x8xf32> to vector<1x8x8xf32>
    %56 = tpu.concatenate %52, %53, %54, %55 in 0 : vector<1x8x8xf32>, vector<1x8x8xf32>, vector<1x8x8xf32>, vector<1x8x8xf32> -> vector<4x8x8xf32>
    %57 = vector.extract_strided_slice %40 {offsets = [0, 0], sizes = [8, 8], strides = [1, 1]} : vector<8x32xf32> to vector<8x8xf32>
    %58 = vector.extract_strided_slice %40 {offsets = [0, 8], sizes = [8, 8], strides = [1, 1]} : vector<8x32xf32> to vector<8x8xf32>
    %59 = vector.extract_strided_slice %40 {offsets = [0, 16], sizes = [8, 8], strides = [1, 1]} : vector<8x32xf32> to vector<8x8xf32>
    %60 = vector.extract_strided_slice %40 {offsets = [0, 24], sizes = [8, 8], strides = [1, 1]} : vector<8x32xf32> to vector<8x8xf32>
    %61 = vector.shape_cast %57 : vector<8x8xf32> to vector<1x8x8xf32>
    %62 = vector.shape_cast %58 : vector<8x8xf32> to vector<1x8x8xf32>
    %63 = vector.shape_cast %59 : vector<8x8xf32> to vector<1x8x8xf32>
    %64 = vector.shape_cast %60 : vector<8x8xf32> to vector<1x8x8xf32>
    %65 = tpu.concatenate %61, %62, %63, %64 in 0 : vector<1x8x8xf32>, vector<1x8x8xf32>, vector<1x8x8xf32>, vector<1x8x8xf32> -> vector<4x8x8xf32>
    %66 = vector.extract_strided_slice %47 {offsets = [0, 0], sizes = [8, 8], strides = [1, 1]} : vector<8x32xf32> to vector<8x8xf32>
    %67 = vector.extract_strided_slice %47 {offsets = [0, 8], sizes = [8, 8], strides = [1, 1]} : vector<8x32xf32> to vector<8x8xf32>
    %68 = vector.extract_strided_slice %47 {offsets = [0, 16], sizes = [8, 8], strides = [1, 1]} : vector<8x32xf32> to vector<8x8xf32>
    %69 = vector.extract_strided_slice %47 {offsets = [0, 24], sizes = [8, 8], strides = [1, 1]} : vector<8x32xf32> to vector<8x8xf32>
    %70 = vector.shape_cast %66 : vector<8x8xf32> to vector<1x8x8xf32>
    %71 = vector.shape_cast %67 : vector<8x8xf32> to vector<1x8x8xf32>
    %72 = vector.shape_cast %68 : vector<8x8xf32> to vector<1x8x8xf32>
    %73 = vector.shape_cast %69 : vector<8x8xf32> to vector<1x8x8xf32>
    %74 = tpu.concatenate %70, %71, %72, %73 in 0 : vector<1x8x8xf32>, vector<1x8x8xf32>, vector<1x8x8xf32>, vector<1x8x8xf32> -> vector<4x8x8xf32>
    %75 = arith.truncf %56 : vector<4x8x8xf32> to vector<4x8x8xbf16>
    %76 = arith.truncf %65 : vector<4x8x8xf32> to vector<4x8x8xbf16>
    "tpu.trace_start"() <{level = 10 : i32, message = "hqd,hkd->hqk"}> : () -> ()
    %cst_35 = arith.constant dense<0.000000e+00> : vector<4x8x8xf32>
    %77 = tpu.matmul %75, %76, %cst_35 {dimension_numbers = #tpu.dot_dimension_numbers<[2], [2], [1], [1], [0, 0, 0, 1, 1, 1], [0], [0]>} : vector<4x8x8xbf16>, vector<4x8x8xbf16>, vector<4x8x8xf32> -> vector<4x8x8xf32>
    "tpu.trace_stop"() : () -> ()
    %cst_36 = arith.constant 0.353553385 : f32
    %78 = vector.broadcast %cst_36 : f32 to vector<4x8x8xf32>
    %79 = arith.mulf %77, %78 : vector<4x8x8xf32>
    %cst_37 = arith.constant dense<0xFF800000> : vector<4x8xf32>
    %80 = vector.multi_reduction <maximumf>, %79, %cst_37 [2] : vector<4x8x8xf32> to vector<4x8xf32>
    %81 = vector.shape_cast %80 : vector<4x8xf32> to vector<4x8x1xf32>
    %82 = vector.broadcast %81 : vector<4x8x1xf32> to vector<4x8x8xf32>
    %83 = arith.subf %79, %82 : vector<4x8x8xf32>
    %84 = math.exp %83 : vector<4x8x8xf32>
    %cst_38 = arith.constant dense<0.000000e+00> : vector<4x8xf32>
    %85 = vector.multi_reduction <add>, %84, %cst_38 [2] : vector<4x8x8xf32> to vector<4x8xf32>
    %86 = vector.shape_cast %85 : vector<4x8xf32> to vector<4x8x1xf32>
    %87 = tpu.reciprocal %86 {approx = true} : vector<4x8x1xf32> -> vector<4x8x1xf32>
    %88 = vector.broadcast %87 : vector<4x8x1xf32> to vector<4x8x8xf32>
    %89 = arith.mulf %84, %88 : vector<4x8x8xf32>
    %90 = arith.truncf %89 : vector<4x8x8xf32> to vector<4x8x8xbf16>
    %91 = arith.truncf %74 : vector<4x8x8xf32> to vector<4x8x8xbf16>
    "tpu.trace_start"() <{level = 10 : i32, message = "hqk,hkd->hqd"}> : () -> ()
    %cst_39 = arith.constant dense<0.000000e+00> : vector<4x8x8xf32>
    %92 = tpu.matmul %90, %91, %cst_39 {dimension_numbers = #tpu.dot_dimension_numbers<[2], [1], [1], [2], [0, 0, 0, 1, 1, 2], [0], [0]>} : vector<4x8x8xbf16>, vector<4x8x8xbf16>, vector<4x8x8xf32> -> vector<4x8x8xf32>
    "tpu.trace_stop"() : () -> ()
    %93 = vector.extract_strided_slice %92 {offsets = [0, 0, 0], sizes = [1, 8, 8], strides = [1, 1, 1]} : vector<4x8x8xf32> to vector<1x8x8xf32>
    %94 = vector.shape_cast %93 : vector<1x8x8xf32> to vector<8x8xf32>
    %95 = vector.extract_strided_slice %92 {offsets = [1, 0, 0], sizes = [1, 8, 8], strides = [1, 1, 1]} : vector<4x8x8xf32> to vector<1x8x8xf32>
    %96 = vector.shape_cast %95 : vector<1x8x8xf32> to vector<8x8xf32>
    %97 = vector.extract_strided_slice %92 {offsets = [2, 0, 0], sizes = [1, 8, 8], strides = [1, 1, 1]} : vector<4x8x8xf32> to vector<1x8x8xf32>
    %98 = vector.shape_cast %97 : vector<1x8x8xf32> to vector<8x8xf32>
    %99 = vector.extract_strided_slice %92 {offsets = [3, 0, 0], sizes = [1, 8, 8], strides = [1, 1, 1]} : vector<4x8x8xf32> to vector<1x8x8xf32>
    %100 = vector.shape_cast %99 : vector<1x8x8xf32> to vector<8x8xf32>
    %101 = tpu.concatenate %94, %96, %98, %100 in 1 : vector<8x8xf32>, vector<8x8xf32>, vector<8x8xf32>, vector<8x8xf32> -> vector<8x32xf32>
    %102 = arith.truncf %101 : vector<8x32xf32> to vector<8x32xbf16>
    %cst_40 = arith.constant dense<0.000000e+00> : vector<8x32xf32>
    %103 = tpu.matmul %102, %29, %cst_40 {dimension_numbers = #tpu.dot_dimension_numbers<[1], [0], [0], [1], [0, 0, 1, 1], [], []>} : vector<8x32xbf16>, vector<32x32xbf16>, vector<8x32xf32> -> vector<8x32xf32>
    %104 = vector.shape_cast %31 : vector<32xf32> to vector<1x32xf32>
    %105 = vector.broadcast %104 : vector<1x32xf32> to vector<8x32xf32>
    %106 = arith.addf %103, %105 : vector<8x32xf32>
    %107 = arith.addf %1, %106 : vector<8x32xf32>
    %108 = vector.extract_strided_slice %22 {offsets = [2, 0], sizes = [1, 32], strides = [1, 1]} : vector<11x32xf32> to vector<1x32xf32>
    %109 = vector.shape_cast %108 : vector<1x32xf32> to vector<32xf32>
    %110 = vector.extract_strided_slice %22 {offsets = [3, 0], sizes = [1, 32], strides = [1, 1]} : vector<11x32xf32> to vector<1x32xf32>
    %111 = vector.shape_cast %110 : vector<1x32xf32> to vector<32xf32>
    %cst_41 = arith.constant dense<0.000000e+00> : vector<8xf32>
    %112 = vector.multi_reduction <add>, %107, %cst_41 [1] : vector<8x32xf32> to vector<8xf32>
    %113 = vector.shape_cast %112 : vector<8xf32> to vector<8x1xf32>
    %cst_42 = arith.constant 3.200000e+01 : f32
    %114 = vector.broadcast %cst_42 : f32 to vector<8x1xf32>
    %115 = arith.divf %113, %114 : vector<8x1xf32>
    %116 = vector.broadcast %115 : vector<8x1xf32> to vector<8x32xf32>
    %117 = arith.subf %107, %116 : vector<8x32xf32>
    %118 = arith.mulf %117, %117 : vector<8x32xf32>
    %cst_43 = arith.constant dense<0.000000e+00> : vector<8xf32>
    %119 = vector.multi_reduction <add>, %118, %cst_43 [1] : vector<8x32xf32> to vector<8xf32>
    %120 = vector.shape_cast %119 : vector<8xf32> to vector<8x1xf32>
    %cst_44 = arith.constant 3.200000e+01 : f32
    %121 = vector.broadcast %cst_44 : f32 to vector<8x1xf32>
    %122 = arith.divf %120, %121 : vector<8x1xf32>
    %123 = vector.broadcast %115 : vector<8x1xf32> to vector<8x32xf32>
    %124 = arith.subf %107, %123 : vector<8x32xf32>
    %cst_45 = arith.constant 9.99999974E-6 : f32
    %125 = vector.broadcast %cst_45 : f32 to vector<8x1xf32>
    %126 = arith.addf %122, %125 : vector<8x1xf32>
    %127 = math.rsqrt %126 : vector<8x1xf32>
    %128 = vector.broadcast %127 : vector<8x1xf32> to vector<8x32xf32>
    %129 = arith.mulf %124, %128 : vector<8x32xf32>
    %130 = vector.shape_cast %109 : vector<32xf32> to vector<1x32xf32>
    %131 = vector.broadcast %130 : vector<1x32xf32> to vector<8x32xf32>
    %132 = arith.mulf %129, %131 : vector<8x32xf32>
    %133 = vector.shape_cast %111 : vector<32xf32> to vector<1x32xf32>
    %134 = vector.broadcast %133 : vector<1x32xf32> to vector<8x32xf32>
    %135 = arith.addf %132, %134 : vector<8x32xf32>
    %136 = arith.addf %135, %3 : vector<8x32xf32>
    %137 = vector.extract_strided_slice %10 {offsets = [1, 0, 0], sizes = [1, 32, 96], strides = [1, 1, 1]} : vector<2x32x96xbf16> to vector<1x32x96xbf16>
    %138 = vector.shape_cast %137 : vector<1x32x96xbf16> to vector<32x96xbf16>
    %139 = vector.extract_strided_slice %12 {offsets = [1, 0], sizes = [1, 96], strides = [1, 1]} : vector<2x96xf32> to vector<1x96xf32>
    %140 = vector.shape_cast %139 : vector<1x96xf32> to vector<96xf32>
    %141 = vector.extract_strided_slice %14 {offsets = [1, 0, 0], sizes = [1, 32, 32], strides = [1, 1, 1]} : vector<2x32x32xbf16> to vector<1x32x32xbf16>
    %142 = vector.shape_cast %141 : vector<1x32x32xbf16> to vector<32x32xbf16>
    %143 = vector.extract_strided_slice %22 {offsets = [1, 0], sizes = [1, 32], strides = [1, 1]} : vector<11x32xf32> to vector<1x32xf32>
    %144 = vector.shape_cast %143 : vector<1x32xf32> to vector<32xf32>
    %145 = vector.extract_strided_slice %138 {offsets = [0, 0], sizes = [32, 32], strides = [1, 1]} : vector<32x96xbf16> to vector<32x32xbf16>
    %146 = arith.truncf %136 : vector<8x32xf32> to vector<8x32xbf16>
    %cst_46 = arith.constant dense<0.000000e+00> : vector<8x32xf32>
    %147 = tpu.matmul %146, %145, %cst_46 {dimension_numbers = #tpu.dot_dimension_numbers<[1], [0], [0], [1], [0, 0, 1, 1], [], []>} : vector<8x32xbf16>, vector<32x32xbf16>, vector<8x32xf32> -> vector<8x32xf32>
    %148 = vector.extract_strided_slice %140 {offsets = [0], sizes = [32], strides = [1]} : vector<96xf32> to vector<32xf32>
    %149 = vector.shape_cast %148 : vector<32xf32> to vector<1x32xf32>
    %150 = vector.broadcast %149 : vector<1x32xf32> to vector<8x32xf32>
    %151 = arith.addf %147, %150 : vector<8x32xf32>
    %152 = vector.extract_strided_slice %138 {offsets = [0, 32], sizes = [32, 32], strides = [1, 1]} : vector<32x96xbf16> to vector<32x32xbf16>
    %153 = arith.truncf %8 : vector<16x32xf32> to vector<16x32xbf16>
    %cst_47 = arith.constant dense<0.000000e+00> : vector<16x32xf32>
    %154 = tpu.matmul %153, %152, %cst_47 {dimension_numbers = #tpu.dot_dimension_numbers<[1], [0], [0], [1], [0, 0, 1, 1], [], []>} : vector<16x32xbf16>, vector<32x32xbf16>, vector<16x32xf32> -> vector<16x32xf32>
    %155 = vector.extract_strided_slice %140 {offsets = [32], sizes = [32], strides = [1]} : vector<96xf32> to vector<32xf32>
    %156 = vector.shape_cast %155 : vector<32xf32> to vector<1x32xf32>
    %157 = vector.broadcast %156 : vector<1x32xf32> to vector<16x32xf32>
    %158 = arith.addf %154, %157 : vector<16x32xf32>
    %159 = vector.extract_strided_slice %138 {offsets = [0, 64], sizes = [32, 32], strides = [1, 1]} : vector<32x96xbf16> to vector<32x32xbf16>
    %160 = arith.truncf %5 : vector<16x32xf32> to vector<16x32xbf16>
    %cst_48 = arith.constant dense<0.000000e+00> : vector<16x32xf32>
    %161 = tpu.matmul %160, %159, %cst_48 {dimension_numbers = #tpu.dot_dimension_numbers<[1], [0], [0], [1], [0, 0, 1, 1], [], []>} : vector<16x32xbf16>, vector<32x32xbf16>, vector<16x32xf32> -> vector<16x32xf32>
    %162 = vector.extract_strided_slice %140 {offsets = [64], sizes = [32], strides = [1]} : vector<96xf32> to vector<32xf32>
    %163 = vector.shape_cast %162 : vector<32xf32> to vector<1x32xf32>
    %164 = vector.broadcast %163 : vector<1x32xf32> to vector<16x32xf32>
    %165 = arith.addf %161, %164 : vector<16x32xf32>
    %166 = vector.extract_strided_slice %151 {offsets = [0, 0], sizes = [8, 8], strides = [1, 1]} : vector<8x32xf32> to vector<8x8xf32>
    %167 = vector.extract_strided_slice %151 {offsets = [0, 8], sizes = [8, 8], strides = [1, 1]} : vector<8x32xf32> to vector<8x8xf32>
    %168 = vector.extract_strided_slice %151 {offsets = [0, 16], sizes = [8, 8], strides = [1, 1]} : vector<8x32xf32> to vector<8x8xf32>
    %169 = vector.extract_strided_slice %151 {offsets = [0, 24], sizes = [8, 8], strides = [1, 1]} : vector<8x32xf32> to vector<8x8xf32>
    %170 = vector.shape_cast %166 : vector<8x8xf32> to vector<1x8x8xf32>
    %171 = vector.shape_cast %167 : vector<8x8xf32> to vector<1x8x8xf32>
    %172 = vector.shape_cast %168 : vector<8x8xf32> to vector<1x8x8xf32>
    %173 = vector.shape_cast %169 : vector<8x8xf32> to vector<1x8x8xf32>
    %174 = tpu.concatenate %170, %171, %172, %173 in 0 : vector<1x8x8xf32>, vector<1x8x8xf32>, vector<1x8x8xf32>, vector<1x8x8xf32> -> vector<4x8x8xf32>
    %175 = vector.extract_strided_slice %158 {offsets = [0, 0], sizes = [16, 8], strides = [1, 1]} : vector<16x32xf32> to vector<16x8xf32>
    %176 = vector.extract_strided_slice %158 {offsets = [0, 8], sizes = [16, 8], strides = [1, 1]} : vector<16x32xf32> to vector<16x8xf32>
    %177 = vector.extract_strided_slice %158 {offsets = [0, 16], sizes = [16, 8], strides = [1, 1]} : vector<16x32xf32> to vector<16x8xf32>
    %178 = vector.extract_strided_slice %158 {offsets = [0, 24], sizes = [16, 8], strides = [1, 1]} : vector<16x32xf32> to vector<16x8xf32>
    %179 = vector.shape_cast %175 : vector<16x8xf32> to vector<1x16x8xf32>
    %180 = vector.shape_cast %176 : vector<16x8xf32> to vector<1x16x8xf32>
    %181 = vector.shape_cast %177 : vector<16x8xf32> to vector<1x16x8xf32>
    %182 = vector.shape_cast %178 : vector<16x8xf32> to vector<1x16x8xf32>
    %183 = tpu.concatenate %179, %180, %181, %182 in 0 : vector<1x16x8xf32>, vector<1x16x8xf32>, vector<1x16x8xf32>, vector<1x16x8xf32> -> vector<4x16x8xf32>
    %184 = vector.extract_strided_slice %165 {offsets = [0, 0], sizes = [16, 8], strides = [1, 1]} : vector<16x32xf32> to vector<16x8xf32>
    %185 = vector.extract_strided_slice %165 {offsets = [0, 8], sizes = [16, 8], strides = [1, 1]} : vector<16x32xf32> to vector<16x8xf32>
    %186 = vector.extract_strided_slice %165 {offsets = [0, 16], sizes = [16, 8], strides = [1, 1]} : vector<16x32xf32> to vector<16x8xf32>
    %187 = vector.extract_strided_slice %165 {offsets = [0, 24], sizes = [16, 8], strides = [1, 1]} : vector<16x32xf32> to vector<16x8xf32>
    %188 = vector.shape_cast %184 : vector<16x8xf32> to vector<1x16x8xf32>
    %189 = vector.shape_cast %185 : vector<16x8xf32> to vector<1x16x8xf32>
    %190 = vector.shape_cast %186 : vector<16x8xf32> to vector<1x16x8xf32>
    %191 = vector.shape_cast %187 : vector<16x8xf32> to vector<1x16x8xf32>
    %192 = tpu.concatenate %188, %189, %190, %191 in 0 : vector<1x16x8xf32>, vector<1x16x8xf32>, vector<1x16x8xf32>, vector<1x16x8xf32> -> vector<4x16x8xf32>
    %193 = arith.truncf %174 : vector<4x8x8xf32> to vector<4x8x8xbf16>
    %194 = arith.truncf %183 : vector<4x16x8xf32> to vector<4x16x8xbf16>
    "tpu.trace_start"() <{level = 10 : i32, message = "hqd,hkd->hqk"}> : () -> ()
    %cst_49 = arith.constant dense<0.000000e+00> : vector<4x8x16xf32>
    %195 = tpu.matmul %193, %194, %cst_49 {dimension_numbers = #tpu.dot_dimension_numbers<[2], [2], [1], [1], [0, 0, 0, 1, 1, 1], [0], [0]>} : vector<4x8x8xbf16>, vector<4x16x8xbf16>, vector<4x8x16xf32> -> vector<4x8x16xf32>
    "tpu.trace_stop"() : () -> ()
    %cst_50 = arith.constant 0.353553385 : f32
    %196 = vector.broadcast %cst_50 : f32 to vector<4x8x16xf32>
    %197 = arith.mulf %195, %196 : vector<4x8x16xf32>
    %cst_51 = arith.constant dense<0xFF800000> : vector<4x8xf32>
    %198 = vector.multi_reduction <maximumf>, %197, %cst_51 [2] : vector<4x8x16xf32> to vector<4x8xf32>
    %199 = vector.shape_cast %198 : vector<4x8xf32> to vector<4x8x1xf32>
    %200 = vector.broadcast %199 : vector<4x8x1xf32> to vector<4x8x16xf32>
    %201 = arith.subf %197, %200 : vector<4x8x16xf32>
    %202 = math.exp %201 : vector<4x8x16xf32>
    %cst_52 = arith.constant dense<0.000000e+00> : vector<4x8xf32>
    %203 = vector.multi_reduction <add>, %202, %cst_52 [2] : vector<4x8x16xf32> to vector<4x8xf32>
    %204 = vector.shape_cast %203 : vector<4x8xf32> to vector<4x8x1xf32>
    %205 = tpu.reciprocal %204 {approx = true} : vector<4x8x1xf32> -> vector<4x8x1xf32>
    %206 = vector.broadcast %205 : vector<4x8x1xf32> to vector<4x8x16xf32>
    %207 = arith.mulf %202, %206 : vector<4x8x16xf32>
    %208 = arith.truncf %207 : vector<4x8x16xf32> to vector<4x8x16xbf16>
    %209 = arith.truncf %192 : vector<4x16x8xf32> to vector<4x16x8xbf16>
    "tpu.trace_start"() <{level = 10 : i32, message = "hqk,hkd->hqd"}> : () -> ()
    %cst_53 = arith.constant dense<0.000000e+00> : vector<4x8x8xf32>
    %210 = tpu.matmul %208, %209, %cst_53 {dimension_numbers = #tpu.dot_dimension_numbers<[2], [1], [1], [2], [0, 0, 0, 1, 1, 2], [0], [0]>} : vector<4x8x16xbf16>, vector<4x16x8xbf16>, vector<4x8x8xf32> -> vector<4x8x8xf32>
    "tpu.trace_stop"() : () -> ()
    %211 = vector.extract_strided_slice %210 {offsets = [0, 0, 0], sizes = [1, 8, 8], strides = [1, 1, 1]} : vector<4x8x8xf32> to vector<1x8x8xf32>
    %212 = vector.shape_cast %211 : vector<1x8x8xf32> to vector<8x8xf32>
    %213 = vector.extract_strided_slice %210 {offsets = [1, 0, 0], sizes = [1, 8, 8], strides = [1, 1, 1]} : vector<4x8x8xf32> to vector<1x8x8xf32>
    %214 = vector.shape_cast %213 : vector<1x8x8xf32> to vector<8x8xf32>
    %215 = vector.extract_strided_slice %210 {offsets = [2, 0, 0], sizes = [1, 8, 8], strides = [1, 1, 1]} : vector<4x8x8xf32> to vector<1x8x8xf32>
    %216 = vector.shape_cast %215 : vector<1x8x8xf32> to vector<8x8xf32>
    %217 = vector.extract_strided_slice %210 {offsets = [3, 0, 0], sizes = [1, 8, 8], strides = [1, 1, 1]} : vector<4x8x8xf32> to vector<1x8x8xf32>
    %218 = vector.shape_cast %217 : vector<1x8x8xf32> to vector<8x8xf32>
    %219 = tpu.concatenate %212, %214, %216, %218 in 1 : vector<8x8xf32>, vector<8x8xf32>, vector<8x8xf32>, vector<8x8xf32> -> vector<8x32xf32>
    %220 = arith.truncf %219 : vector<8x32xf32> to vector<8x32xbf16>
    %cst_54 = arith.constant dense<0.000000e+00> : vector<8x32xf32>
    %221 = tpu.matmul %220, %142, %cst_54 {dimension_numbers = #tpu.dot_dimension_numbers<[1], [0], [0], [1], [0, 0, 1, 1], [], []>} : vector<8x32xbf16>, vector<32x32xbf16>, vector<8x32xf32> -> vector<8x32xf32>
    %222 = vector.shape_cast %144 : vector<32xf32> to vector<1x32xf32>
    %223 = vector.broadcast %222 : vector<1x32xf32> to vector<8x32xf32>
    %224 = arith.addf %221, %223 : vector<8x32xf32>
    %225 = arith.addf %135, %224 : vector<8x32xf32>
    %226 = vector.extract_strided_slice %22 {offsets = [4, 0], sizes = [1, 32], strides = [1, 1]} : vector<11x32xf32> to vector<1x32xf32>
    %227 = vector.shape_cast %226 : vector<1x32xf32> to vector<32xf32>
    %228 = vector.extract_strided_slice %22 {offsets = [5, 0], sizes = [1, 32], strides = [1, 1]} : vector<11x32xf32> to vector<1x32xf32>
    %229 = vector.shape_cast %228 : vector<1x32xf32> to vector<32xf32>
    %cst_55 = arith.constant dense<0.000000e+00> : vector<8xf32>
    %230 = vector.multi_reduction <add>, %225, %cst_55 [1] : vector<8x32xf32> to vector<8xf32>
    %231 = vector.shape_cast %230 : vector<8xf32> to vector<8x1xf32>
    %cst_56 = arith.constant 3.200000e+01 : f32
    %232 = vector.broadcast %cst_56 : f32 to vector<8x1xf32>
    %233 = arith.divf %231, %232 : vector<8x1xf32>
    %234 = vector.broadcast %233 : vector<8x1xf32> to vector<8x32xf32>
    %235 = arith.subf %225, %234 : vector<8x32xf32>
    %236 = arith.mulf %235, %235 : vector<8x32xf32>
    %cst_57 = arith.constant dense<0.000000e+00> : vector<8xf32>
    %237 = vector.multi_reduction <add>, %236, %cst_57 [1] : vector<8x32xf32> to vector<8xf32>
    %238 = vector.shape_cast %237 : vector<8xf32> to vector<8x1xf32>
    %cst_58 = arith.constant 3.200000e+01 : f32
    %239 = vector.broadcast %cst_58 : f32 to vector<8x1xf32>
    %240 = arith.divf %238, %239 : vector<8x1xf32>
    %241 = vector.broadcast %233 : vector<8x1xf32> to vector<8x32xf32>
    %242 = arith.subf %225, %241 : vector<8x32xf32>
    %cst_59 = arith.constant 9.99999974E-6 : f32
    %243 = vector.broadcast %cst_59 : f32 to vector<8x1xf32>
    %244 = arith.addf %240, %243 : vector<8x1xf32>
    %245 = math.rsqrt %244 : vector<8x1xf32>
    %246 = vector.broadcast %245 : vector<8x1xf32> to vector<8x32xf32>
    %247 = arith.mulf %242, %246 : vector<8x32xf32>
    %248 = vector.shape_cast %227 : vector<32xf32> to vector<1x32xf32>
    %249 = vector.broadcast %248 : vector<1x32xf32> to vector<8x32xf32>
    %250 = arith.mulf %247, %249 : vector<8x32xf32>
    %251 = vector.shape_cast %229 : vector<32xf32> to vector<1x32xf32>
    %252 = vector.broadcast %251 : vector<1x32xf32> to vector<8x32xf32>
    %253 = arith.addf %250, %252 : vector<8x32xf32>
    %254 = arith.truncf %253 : vector<8x32xf32> to vector<8x32xbf16>
    %cst_60 = arith.constant dense<0.000000e+00> : vector<8x64xf32>
    %255 = tpu.matmul %254, %16, %cst_60 {dimension_numbers = #tpu.dot_dimension_numbers<[1], [0], [0], [1], [0, 0, 1, 1], [], []>} : vector<8x32xbf16>, vector<32x64xbf16>, vector<8x64xf32> -> vector<8x64xf32>
    %256 = vector.broadcast %18 : vector<1x64xf32> to vector<8x64xf32>
    %257 = arith.addf %255, %256 : vector<8x64xf32>
    %cst_61 = arith.constant 0.000000e+00 : f32
    %258 = vector.broadcast %cst_61 : f32 to vector<8x64xf32>
    %259 = arith.maximumf %257, %258 : vector<8x64xf32>
    %260 = arith.truncf %259 : vector<8x64xf32> to vector<8x64xbf16>
    %cst_62 = arith.constant dense<0.000000e+00> : vector<8x32xf32>
    %261 = tpu.matmul %260, %20, %cst_62 {dimension_numbers = #tpu.dot_dimension_numbers<[1], [0], [0], [1], [0, 0, 1, 1], [], []>} : vector<8x64xbf16>, vector<64x32xbf16>, vector<8x32xf32> -> vector<8x32xf32>
    %262 = vector.extract_strided_slice %22 {offsets = [10, 0], sizes = [1, 32], strides = [1, 1]} : vector<11x32xf32> to vector<1x32xf32>
    %263 = vector.shape_cast %262 : vector<1x32xf32> to vector<32xf32>
    %264 = vector.shape_cast %263 : vector<32xf32> to vector<1x32xf32>
    %265 = vector.broadcast %264 : vector<1x32xf32> to vector<8x32xf32>
    %266 = arith.addf %261, %265 : vector<8x32xf32>
    %267 = arith.addf %253, %266 : vector<8x32xf32>
    %268 = vector.extract_strided_slice %22 {offsets = [6, 0], sizes = [1, 32], strides = [1, 1]} : vector<11x32xf32> to vector<1x32xf32>
    %269 = vector.shape_cast %268 : vector<1x32xf32> to vector<32xf32>
    %270 = vector.extract_strided_slice %22 {offsets = [7, 0], sizes = [1, 32], strides = [1, 1]} : vector<11x32xf32> to vector<1x32xf32>
    %271 = vector.shape_cast %270 : vector<1x32xf32> to vector<32xf32>
    %cst_63 = arith.constant dense<0.000000e+00> : vector<8xf32>
    %272 = vector.multi_reduction <add>, %267, %cst_63 [1] : vector<8x32xf32> to vector<8xf32>
    %273 = vector.shape_cast %272 : vector<8xf32> to vector<8x1xf32>
    %cst_64 = arith.constant 3.200000e+01 : f32
    %274 = vector.broadcast %cst_64 : f32 to vector<8x1xf32>
    %275 = arith.divf %273, %274 : vector<8x1xf32>
    %276 = vector.broadcast %275 : vector<8x1xf32> to vector<8x32xf32>
    %277 = arith.subf %267, %276 : vector<8x32xf32>
    %278 = arith.mulf %277, %277 : vector<8x32xf32>
    %cst_65 = arith.constant dense<0.000000e+00> : vector<8xf32>
    %279 = vector.multi_reduction <add>, %278, %cst_65 [1] : vector<8x32xf32> to vector<8xf32>
    %280 = vector.shape_cast %279 : vector<8xf32> to vector<8x1xf32>
    %cst_66 = arith.constant 3.200000e+01 : f32
    %281 = vector.broadcast %cst_66 : f32 to vector<8x1xf32>
    %282 = arith.divf %280, %281 : vector<8x1xf32>
    %283 = vector.broadcast %275 : vector<8x1xf32> to vector<8x32xf32>
    %284 = arith.subf %267, %283 : vector<8x32xf32>
    %cst_67 = arith.constant 9.99999974E-6 : f32
    %285 = vector.broadcast %cst_67 : f32 to vector<8x1xf32>
    %286 = arith.addf %282, %285 : vector<8x1xf32>
    %287 = math.rsqrt %286 : vector<8x1xf32>
    %288 = vector.broadcast %287 : vector<8x1xf32> to vector<8x32xf32>
    %289 = arith.mulf %284, %288 : vector<8x32xf32>
    %290 = vector.shape_cast %269 : vector<32xf32> to vector<1x32xf32>
    %291 = vector.broadcast %290 : vector<1x32xf32> to vector<8x32xf32>
    %292 = arith.mulf %289, %291 : vector<8x32xf32>
    %293 = vector.shape_cast %271 : vector<32xf32> to vector<1x32xf32>
    %294 = vector.broadcast %293 : vector<1x32xf32> to vector<8x32xf32>
    %295 = arith.addf %292, %294 : vector<8x32xf32>
    %296 = vector.extract_strided_slice %22 {offsets = [8, 0], sizes = [1, 32], strides = [1, 1]} : vector<11x32xf32> to vector<1x32xf32>
    %297 = vector.shape_cast %296 : vector<1x32xf32> to vector<32xf32>
    %298 = vector.extract_strided_slice %22 {offsets = [9, 0], sizes = [1, 32], strides = [1, 1]} : vector<11x32xf32> to vector<1x32xf32>
    %299 = vector.shape_cast %298 : vector<1x32xf32> to vector<32xf32>
    %cst_68 = arith.constant dense<0.000000e+00> : vector<8xf32>
    %300 = vector.multi_reduction <add>, %295, %cst_68 [1] : vector<8x32xf32> to vector<8xf32>
    %301 = vector.shape_cast %300 : vector<8xf32> to vector<8x1xf32>
    %cst_69 = arith.constant 3.200000e+01 : f32
    %302 = vector.broadcast %cst_69 : f32 to vector<8x1xf32>
    %303 = arith.divf %301, %302 : vector<8x1xf32>
    %304 = vector.broadcast %303 : vector<8x1xf32> to vector<8x32xf32>
    %305 = arith.subf %295, %304 : vector<8x32xf32>
    %306 = arith.mulf %305, %305 : vector<8x32xf32>
    %cst_70 = arith.constant dense<0.000000e+00> : vector<8xf32>
    %307 = vector.multi_reduction <add>, %306, %cst_70 [1] : vector<8x32xf32> to vector<8xf32>
    %308 = vector.shape_cast %307 : vector<8xf32> to vector<8x1xf32>
    %cst_71 = arith.constant 3.200000e+01 : f32
    %309 = vector.broadcast %cst_71 : f32 to vector<8x1xf32>
    %310 = arith.divf %308, %309 : vector<8x1xf32>
    %311 = vector.broadcast %303 : vector<8x1xf32> to vector<8x32xf32>
    %312 = arith.subf %295, %311 : vector<8x32xf32>
    %cst_72 = arith.constant 9.99999974E-6 : f32
    %313 = vector.broadcast %cst_72 : f32 to vector<8x1xf32>
    %314 = arith.addf %310, %313 : vector<8x1xf32>
    %315 = math.rsqrt %314 : vector<8x1xf32>
    %316 = vector.broadcast %315 : vector<8x1xf32> to vector<8x32xf32>
    %317 = arith.mulf %312, %316 : vector<8x32xf32>
    %318 = vector.shape_cast %297 : vector<32xf32> to vector<1x32xf32>
    %319 = vector.broadcast %318 : vector<1x32xf32> to vector<8x32xf32>
    %320 = arith.mulf %317, %319 : vector<8x32xf32>
    %321 = vector.shape_cast %299 : vector<32xf32> to vector<1x32xf32>
    %322 = vector.broadcast %321 : vector<1x32xf32> to vector<8x32xf32>
    %323 = arith.addf %320, %322 : vector<8x32xf32>
    %324 = vector.extract_strided_slice %323 {offsets = [0, 0], sizes = [1, 32], strides = [1, 1]} : vector<8x32xf32> to vector<1x32xf32>
    %325 = vector.extract_strided_slice %323 {offsets = [1, 0], sizes = [1, 32], strides = [1, 1]} : vector<8x32xf32> to vector<1x32xf32>
    %326 = vector.extract_strided_slice %323 {offsets = [2, 0], sizes = [1, 32], strides = [1, 1]} : vector<8x32xf32> to vector<1x32xf32>
    %327 = vector.extract_strided_slice %323 {offsets = [3, 0], sizes = [1, 32], strides = [1, 1]} : vector<8x32xf32> to vector<1x32xf32>
    %328 = vector.extract_strided_slice %323 {offsets = [4, 0], sizes = [1, 32], strides = [1, 1]} : vector<8x32xf32> to vector<1x32xf32>
    %329 = vector.extract_strided_slice %323 {offsets = [5, 0], sizes = [1, 32], strides = [1, 1]} : vector<8x32xf32> to vector<1x32xf32>
    %330 = vector.extract_strided_slice %323 {offsets = [6, 0], sizes = [1, 32], strides = [1, 1]} : vector<8x32xf32> to vector<1x32xf32>
    %331 = vector.extract_strided_slice %323 {offsets = [7, 0], sizes = [1, 32], strides = [1, 1]} : vector<8x32xf32> to vector<1x32xf32>
    %332 = tpu.concatenate %324, %325, %326, %327, %328, %329, %330, %331 in 1 : vector<1x32xf32>, vector<1x32xf32>, vector<1x32xf32>, vector<1x32xf32>, vector<1x32xf32>, vector<1x32xf32>, vector<1x32xf32>, vector<1x32xf32> -> vector<1x256xf32>
    %c1 = arith.constant 1 : index
    %c0_73 = arith.constant 0 : index
    %c0_74 = arith.constant 0 : index
    %c0_75 = arith.constant 0 : index
    %333 = vector.load %arg5[%c1, %c0_73, %c0_74, %c0_75] : memref<2x2x32x96xbf16, #tpu.memory_space<vmem>>, vector<1x2x32x96xbf16>
    %334 = vector.shape_cast %333 : vector<1x2x32x96xbf16> to vector<2x32x96xbf16>
    %c1_76 = arith.constant 1 : index
    %c0_77 = arith.constant 0 : index
    %c0_78 = arith.constant 0 : index
    %335 = vector.load %arg10[%c1_76, %c0_77, %c0_78] : memref<2x2x96xf32, #tpu.memory_space<vmem>>, vector<1x2x96xf32>
    %336 = vector.shape_cast %335 : vector<1x2x96xf32> to vector<2x96xf32>
    %c1_79 = arith.constant 1 : index
    %c0_80 = arith.constant 0 : index
    %c0_81 = arith.constant 0 : index
    %c0_82 = arith.constant 0 : index
    %337 = vector.load %arg6[%c1_79, %c0_80, %c0_81, %c0_82] : memref<2x2x32x32xbf16, #tpu.memory_space<vmem>>, vector<1x2x32x32xbf16>
    %338 = vector.shape_cast %337 : vector<1x2x32x32xbf16> to vector<2x32x32xbf16>
    %c1_83 = arith.constant 1 : index
    %c0_84 = arith.constant 0 : index
    %c0_85 = arith.constant 0 : index
    %339 = vector.load %arg7[%c1_83, %c0_84, %c0_85] : memref<2x32x64xbf16, #tpu.memory_space<vmem>>, vector<1x32x64xbf16>
    %340 = vector.shape_cast %339 : vector<1x32x64xbf16> to vector<32x64xbf16>
    %c1_86 = arith.constant 1 : index
    %c0_87 = arith.constant 0 : index
    %c0_88 = arith.constant 0 : index
    %341 = vector.load %arg8[%c1_86, %c0_87, %c0_88] : memref<2x1x64xf32, #tpu.memory_space<vmem>>, vector<1x1x64xf32>
    %342 = vector.shape_cast %341 : vector<1x1x64xf32> to vector<1x64xf32>
    %c1_89 = arith.constant 1 : index
    %c0_90 = arith.constant 0 : index
    %c0_91 = arith.constant 0 : index
    %343 = vector.load %arg9[%c1_89, %c0_90, %c0_91] : memref<2x64x32xbf16, #tpu.memory_space<vmem>>, vector<1x64x32xbf16>
    %344 = vector.shape_cast %343 : vector<1x64x32xbf16> to vector<64x32xbf16>
    %c1_92 = arith.constant 1 : index
    %c0_93 = arith.constant 0 : index
    %c0_94 = arith.constant 0 : index
    %345 = vector.load %arg11[%c1_92, %c0_93, %c0_94] : memref<2x11x32xf32, #tpu.memory_space<vmem>>, vector<1x11x32xf32>
    %346 = vector.shape_cast %345 : vector<1x11x32xf32> to vector<11x32xf32>
    %347 = arith.addf %295, %3 : vector<8x32xf32>
    %348 = vector.extract_strided_slice %334 {offsets = [0, 0, 0], sizes = [1, 32, 96], strides = [1, 1, 1]} : vector<2x32x96xbf16> to vector<1x32x96xbf16>
    %349 = vector.shape_cast %348 : vector<1x32x96xbf16> to vector<32x96xbf16>
    %350 = vector.extract_strided_slice %336 {offsets = [0, 0], sizes = [1, 96], strides = [1, 1]} : vector<2x96xf32> to vector<1x96xf32>
    %351 = vector.shape_cast %350 : vector<1x96xf32> to vector<96xf32>
    %352 = vector.extract_strided_slice %338 {offsets = [0, 0, 0], sizes = [1, 32, 32], strides = [1, 1, 1]} : vector<2x32x32xbf16> to vector<1x32x32xbf16>
    %353 = vector.shape_cast %352 : vector<1x32x32xbf16> to vector<32x32xbf16>
    %354 = vector.extract_strided_slice %346 {offsets = [0, 0], sizes = [1, 32], strides = [1, 1]} : vector<11x32xf32> to vector<1x32xf32>
    %355 = vector.shape_cast %354 : vector<1x32xf32> to vector<32xf32>
    %356 = vector.extract_strided_slice %349 {offsets = [0, 0], sizes = [32, 64], strides = [1, 1]} : vector<32x96xbf16> to vector<32x64xbf16>
    %357 = arith.truncf %347 : vector<8x32xf32> to vector<8x32xbf16>
    %cst_95 = arith.constant dense<0.000000e+00> : vector<8x64xf32>
    %358 = tpu.matmul %357, %356, %cst_95 {dimension_numbers = #tpu.dot_dimension_numbers<[1], [0], [0], [1], [0, 0, 1, 1], [], []>} : vector<8x32xbf16>, vector<32x64xbf16>, vector<8x64xf32> -> vector<8x64xf32>
    %359 = vector.extract_strided_slice %351 {offsets = [0], sizes = [64], strides = [1]} : vector<96xf32> to vector<64xf32>
    %360 = vector.shape_cast %359 : vector<64xf32> to vector<1x64xf32>
    %361 = vector.broadcast %360 : vector<1x64xf32> to vector<8x64xf32>
    %362 = arith.addf %358, %361 : vector<8x64xf32>
    %363 = vector.extract_strided_slice %362 {offsets = [0, 0], sizes = [8, 32], strides = [1, 1]} : vector<8x64xf32> to vector<8x32xf32>
    %364 = vector.extract_strided_slice %362 {offsets = [0, 32], sizes = [8, 32], strides = [1, 1]} : vector<8x64xf32> to vector<8x32xf32>
    %365 = vector.extract_strided_slice %349 {offsets = [0, 64], sizes = [32, 32], strides = [1, 1]} : vector<32x96xbf16> to vector<32x32xbf16>
    %366 = arith.truncf %295 : vector<8x32xf32> to vector<8x32xbf16>
    %cst_96 = arith.constant dense<0.000000e+00> : vector<8x32xf32>
    %367 = tpu.matmul %366, %365, %cst_96 {dimension_numbers = #tpu.dot_dimension_numbers<[1], [0], [0], [1], [0, 0, 1, 1], [], []>} : vector<8x32xbf16>, vector<32x32xbf16>, vector<8x32xf32> -> vector<8x32xf32>
    %368 = vector.extract_strided_slice %351 {offsets = [64], sizes = [32], strides = [1]} : vector<96xf32> to vector<32xf32>
    %369 = vector.shape_cast %368 : vector<32xf32> to vector<1x32xf32>
    %370 = vector.broadcast %369 : vector<1x32xf32> to vector<8x32xf32>
    %371 = arith.addf %367, %370 : vector<8x32xf32>
    %372 = vector.extract_strided_slice %363 {offsets = [0, 0], sizes = [8, 8], strides = [1, 1]} : vector<8x32xf32> to vector<8x8xf32>
    %373 = vector.extract_strided_slice %363 {offsets = [0, 8], sizes = [8, 8], strides = [1, 1]} : vector<8x32xf32> to vector<8x8xf32>
    %374 = vector.extract_strided_slice %363 {offsets = [0, 16], sizes = [8, 8], strides = [1, 1]} : vector<8x32xf32> to vector<8x8xf32>
    %375 = vector.extract_strided_slice %363 {offsets = [0, 24], sizes = [8, 8], strides = [1, 1]} : vector<8x32xf32> to vector<8x8xf32>
    %376 = vector.shape_cast %372 : vector<8x8xf32> to vector<1x8x8xf32>
    %377 = vector.shape_cast %373 : vector<8x8xf32> to vector<1x8x8xf32>
    %378 = vector.shape_cast %374 : vector<8x8xf32> to vector<1x8x8xf32>
    %379 = vector.shape_cast %375 : vector<8x8xf32> to vector<1x8x8xf32>
    %380 = tpu.concatenate %376, %377, %378, %379 in 0 : vector<1x8x8xf32>, vector<1x8x8xf32>, vector<1x8x8xf32>, vector<1x8x8xf32> -> vector<4x8x8xf32>
    %381 = vector.extract_strided_slice %364 {offsets = [0, 0], sizes = [8, 8], strides = [1, 1]} : vector<8x32xf32> to vector<8x8xf32>
    %382 = vector.extract_strided_slice %364 {offsets = [0, 8], sizes = [8, 8], strides = [1, 1]} : vector<8x32xf32> to vector<8x8xf32>
    %383 = vector.extract_strided_slice %364 {offsets = [0, 16], sizes = [8, 8], strides = [1, 1]} : vector<8x32xf32> to vector<8x8xf32>
    %384 = vector.extract_strided_slice %364 {offsets = [0, 24], sizes = [8, 8], strides = [1, 1]} : vector<8x32xf32> to vector<8x8xf32>
    %385 = vector.shape_cast %381 : vector<8x8xf32> to vector<1x8x8xf32>
    %386 = vector.shape_cast %382 : vector<8x8xf32> to vector<1x8x8xf32>
    %387 = vector.shape_cast %383 : vector<8x8xf32> to vector<1x8x8xf32>
    %388 = vector.shape_cast %384 : vector<8x8xf32> to vector<1x8x8xf32>
    %389 = tpu.concatenate %385, %386, %387, %388 in 0 : vector<1x8x8xf32>, vector<1x8x8xf32>, vector<1x8x8xf32>, vector<1x8x8xf32> -> vector<4x8x8xf32>
    %390 = vector.extract_strided_slice %371 {offsets = [0, 0], sizes = [8, 8], strides = [1, 1]} : vector<8x32xf32> to vector<8x8xf32>
    %391 = vector.extract_strided_slice %371 {offsets = [0, 8], sizes = [8, 8], strides = [1, 1]} : vector<8x32xf32> to vector<8x8xf32>
    %392 = vector.extract_strided_slice %371 {offsets = [0, 16], sizes = [8, 8], strides = [1, 1]} : vector<8x32xf32> to vector<8x8xf32>
    %393 = vector.extract_strided_slice %371 {offsets = [0, 24], sizes = [8, 8], strides = [1, 1]} : vector<8x32xf32> to vector<8x8xf32>
    %394 = vector.shape_cast %390 : vector<8x8xf32> to vector<1x8x8xf32>
    %395 = vector.shape_cast %391 : vector<8x8xf32> to vector<1x8x8xf32>
    %396 = vector.shape_cast %392 : vector<8x8xf32> to vector<1x8x8xf32>
    %397 = vector.shape_cast %393 : vector<8x8xf32> to vector<1x8x8xf32>
    %398 = tpu.concatenate %394, %395, %396, %397 in 0 : vector<1x8x8xf32>, vector<1x8x8xf32>, vector<1x8x8xf32>, vector<1x8x8xf32> -> vector<4x8x8xf32>
    %399 = arith.truncf %380 : vector<4x8x8xf32> to vector<4x8x8xbf16>
    %400 = arith.truncf %389 : vector<4x8x8xf32> to vector<4x8x8xbf16>
    "tpu.trace_start"() <{level = 10 : i32, message = "hqd,hkd->hqk"}> : () -> ()
    %cst_97 = arith.constant dense<0.000000e+00> : vector<4x8x8xf32>
    %401 = tpu.matmul %399, %400, %cst_97 {dimension_numbers = #tpu.dot_dimension_numbers<[2], [2], [1], [1], [0, 0, 0, 1, 1, 1], [0], [0]>} : vector<4x8x8xbf16>, vector<4x8x8xbf16>, vector<4x8x8xf32> -> vector<4x8x8xf32>
    "tpu.trace_stop"() : () -> ()
    %cst_98 = arith.constant 0.353553385 : f32
    %402 = vector.broadcast %cst_98 : f32 to vector<4x8x8xf32>
    %403 = arith.mulf %401, %402 : vector<4x8x8xf32>
    %cst_99 = arith.constant dense<0xFF800000> : vector<4x8xf32>
    %404 = vector.multi_reduction <maximumf>, %403, %cst_99 [2] : vector<4x8x8xf32> to vector<4x8xf32>
    %405 = vector.shape_cast %404 : vector<4x8xf32> to vector<4x8x1xf32>
    %406 = vector.broadcast %405 : vector<4x8x1xf32> to vector<4x8x8xf32>
    %407 = arith.subf %403, %406 : vector<4x8x8xf32>
    %408 = math.exp %407 : vector<4x8x8xf32>
    %cst_100 = arith.constant dense<0.000000e+00> : vector<4x8xf32>
    %409 = vector.multi_reduction <add>, %408, %cst_100 [2] : vector<4x8x8xf32> to vector<4x8xf32>
    %410 = vector.shape_cast %409 : vector<4x8xf32> to vector<4x8x1xf32>
    %411 = tpu.reciprocal %410 {approx = true} : vector<4x8x1xf32> -> vector<4x8x1xf32>
    %412 = vector.broadcast %411 : vector<4x8x1xf32> to vector<4x8x8xf32>
    %413 = arith.mulf %408, %412 : vector<4x8x8xf32>
    %414 = arith.truncf %413 : vector<4x8x8xf32> to vector<4x8x8xbf16>
    %415 = arith.truncf %398 : vector<4x8x8xf32> to vector<4x8x8xbf16>
    "tpu.trace_start"() <{level = 10 : i32, message = "hqk,hkd->hqd"}> : () -> ()
    %cst_101 = arith.constant dense<0.000000e+00> : vector<4x8x8xf32>
    %416 = tpu.matmul %414, %415, %cst_101 {dimension_numbers = #tpu.dot_dimension_numbers<[2], [1], [1], [2], [0, 0, 0, 1, 1, 2], [0], [0]>} : vector<4x8x8xbf16>, vector<4x8x8xbf16>, vector<4x8x8xf32> -> vector<4x8x8xf32>
    "tpu.trace_stop"() : () -> ()
    %417 = vector.extract_strided_slice %416 {offsets = [0, 0, 0], sizes = [1, 8, 8], strides = [1, 1, 1]} : vector<4x8x8xf32> to vector<1x8x8xf32>
    %418 = vector.shape_cast %417 : vector<1x8x8xf32> to vector<8x8xf32>
    %419 = vector.extract_strided_slice %416 {offsets = [1, 0, 0], sizes = [1, 8, 8], strides = [1, 1, 1]} : vector<4x8x8xf32> to vector<1x8x8xf32>
    %420 = vector.shape_cast %419 : vector<1x8x8xf32> to vector<8x8xf32>
    %421 = vector.extract_strided_slice %416 {offsets = [2, 0, 0], sizes = [1, 8, 8], strides = [1, 1, 1]} : vector<4x8x8xf32> to vector<1x8x8xf32>
    %422 = vector.shape_cast %421 : vector<1x8x8xf32> to vector<8x8xf32>
    %423 = vector.extract_strided_slice %416 {offsets = [3, 0, 0], sizes = [1, 8, 8], strides = [1, 1, 1]} : vector<4x8x8xf32> to vector<1x8x8xf32>
    %424 = vector.shape_cast %423 : vector<1x8x8xf32> to vector<8x8xf32>
    %425 = tpu.concatenate %418, %420, %422, %424 in 1 : vector<8x8xf32>, vector<8x8xf32>, vector<8x8xf32>, vector<8x8xf32> -> vector<8x32xf32>
    %426 = arith.truncf %425 : vector<8x32xf32> to vector<8x32xbf16>
    %cst_102 = arith.constant dense<0.000000e+00> : vector<8x32xf32>
    %427 = tpu.matmul %426, %353, %cst_102 {dimension_numbers = #tpu.dot_dimension_numbers<[1], [0], [0], [1], [0, 0, 1, 1], [], []>} : vector<8x32xbf16>, vector<32x32xbf16>, vector<8x32xf32> -> vector<8x32xf32>
    %428 = vector.shape_cast %355 : vector<32xf32> to vector<1x32xf32>
    %429 = vector.broadcast %428 : vector<1x32xf32> to vector<8x32xf32>
    %430 = arith.addf %427, %429 : vector<8x32xf32>
    %431 = arith.addf %295, %430 : vector<8x32xf32>
    %432 = vector.extract_strided_slice %346 {offsets = [2, 0], sizes = [1, 32], strides = [1, 1]} : vector<11x32xf32> to vector<1x32xf32>
    %433 = vector.shape_cast %432 : vector<1x32xf32> to vector<32xf32>
    %434 = vector.extract_strided_slice %346 {offsets = [3, 0], sizes = [1, 32], strides = [1, 1]} : vector<11x32xf32> to vector<1x32xf32>
    %435 = vector.shape_cast %434 : vector<1x32xf32> to vector<32xf32>
    %cst_103 = arith.constant dense<0.000000e+00> : vector<8xf32>
    %436 = vector.multi_reduction <add>, %431, %cst_103 [1] : vector<8x32xf32> to vector<8xf32>
    %437 = vector.shape_cast %436 : vector<8xf32> to vector<8x1xf32>
    %cst_104 = arith.constant 3.200000e+01 : f32
    %438 = vector.broadcast %cst_104 : f32 to vector<8x1xf32>
    %439 = arith.divf %437, %438 : vector<8x1xf32>
    %440 = vector.broadcast %439 : vector<8x1xf32> to vector<8x32xf32>
    %441 = arith.subf %431, %440 : vector<8x32xf32>
    %442 = arith.mulf %441, %441 : vector<8x32xf32>
    %cst_105 = arith.constant dense<0.000000e+00> : vector<8xf32>
    %443 = vector.multi_reduction <add>, %442, %cst_105 [1] : vector<8x32xf32> to vector<8xf32>
    %444 = vector.shape_cast %443 : vector<8xf32> to vector<8x1xf32>
    %cst_106 = arith.constant 3.200000e+01 : f32
    %445 = vector.broadcast %cst_106 : f32 to vector<8x1xf32>
    %446 = arith.divf %444, %445 : vector<8x1xf32>
    %447 = vector.broadcast %439 : vector<8x1xf32> to vector<8x32xf32>
    %448 = arith.subf %431, %447 : vector<8x32xf32>
    %cst_107 = arith.constant 9.99999974E-6 : f32
    %449 = vector.broadcast %cst_107 : f32 to vector<8x1xf32>
    %450 = arith.addf %446, %449 : vector<8x1xf32>
    %451 = math.rsqrt %450 : vector<8x1xf32>
    %452 = vector.broadcast %451 : vector<8x1xf32> to vector<8x32xf32>
    %453 = arith.mulf %448, %452 : vector<8x32xf32>
    %454 = vector.shape_cast %433 : vector<32xf32> to vector<1x32xf32>
    %455 = vector.broadcast %454 : vector<1x32xf32> to vector<8x32xf32>
    %456 = arith.mulf %453, %455 : vector<8x32xf32>
    %457 = vector.shape_cast %435 : vector<32xf32> to vector<1x32xf32>
    %458 = vector.broadcast %457 : vector<1x32xf32> to vector<8x32xf32>
    %459 = arith.addf %456, %458 : vector<8x32xf32>
    %460 = arith.addf %459, %3 : vector<8x32xf32>
    %461 = vector.extract_strided_slice %334 {offsets = [1, 0, 0], sizes = [1, 32, 96], strides = [1, 1, 1]} : vector<2x32x96xbf16> to vector<1x32x96xbf16>
    %462 = vector.shape_cast %461 : vector<1x32x96xbf16> to vector<32x96xbf16>
    %463 = vector.extract_strided_slice %336 {offsets = [1, 0], sizes = [1, 96], strides = [1, 1]} : vector<2x96xf32> to vector<1x96xf32>
    %464 = vector.shape_cast %463 : vector<1x96xf32> to vector<96xf32>
    %465 = vector.extract_strided_slice %338 {offsets = [1, 0, 0], sizes = [1, 32, 32], strides = [1, 1, 1]} : vector<2x32x32xbf16> to vector<1x32x32xbf16>
    %466 = vector.shape_cast %465 : vector<1x32x32xbf16> to vector<32x32xbf16>
    %467 = vector.extract_strided_slice %346 {offsets = [1, 0], sizes = [1, 32], strides = [1, 1]} : vector<11x32xf32> to vector<1x32xf32>
    %468 = vector.shape_cast %467 : vector<1x32xf32> to vector<32xf32>
    %469 = vector.extract_strided_slice %462 {offsets = [0, 0], sizes = [32, 32], strides = [1, 1]} : vector<32x96xbf16> to vector<32x32xbf16>
    %470 = arith.truncf %460 : vector<8x32xf32> to vector<8x32xbf16>
    %cst_108 = arith.constant dense<0.000000e+00> : vector<8x32xf32>
    %471 = tpu.matmul %470, %469, %cst_108 {dimension_numbers = #tpu.dot_dimension_numbers<[1], [0], [0], [1], [0, 0, 1, 1], [], []>} : vector<8x32xbf16>, vector<32x32xbf16>, vector<8x32xf32> -> vector<8x32xf32>
    %472 = vector.extract_strided_slice %464 {offsets = [0], sizes = [32], strides = [1]} : vector<96xf32> to vector<32xf32>
    %473 = vector.shape_cast %472 : vector<32xf32> to vector<1x32xf32>
    %474 = vector.broadcast %473 : vector<1x32xf32> to vector<8x32xf32>
    %475 = arith.addf %471, %474 : vector<8x32xf32>
    %476 = vector.extract_strided_slice %462 {offsets = [0, 32], sizes = [32, 32], strides = [1, 1]} : vector<32x96xbf16> to vector<32x32xbf16>
    %477 = arith.truncf %8 : vector<16x32xf32> to vector<16x32xbf16>
    %cst_109 = arith.constant dense<0.000000e+00> : vector<16x32xf32>
    %478 = tpu.matmul %477, %476, %cst_109 {dimension_numbers = #tpu.dot_dimension_numbers<[1], [0], [0], [1], [0, 0, 1, 1], [], []>} : vector<16x32xbf16>, vector<32x32xbf16>, vector<16x32xf32> -> vector<16x32xf32>
    %479 = vector.extract_strided_slice %464 {offsets = [32], sizes = [32], strides = [1]} : vector<96xf32> to vector<32xf32>
    %480 = vector.shape_cast %479 : vector<32xf32> to vector<1x32xf32>
    %481 = vector.broadcast %480 : vector<1x32xf32> to vector<16x32xf32>
    %482 = arith.addf %478, %481 : vector<16x32xf32>
    %483 = vector.extract_strided_slice %462 {offsets = [0, 64], sizes = [32, 32], strides = [1, 1]} : vector<32x96xbf16> to vector<32x32xbf16>
    %484 = arith.truncf %5 : vector<16x32xf32> to vector<16x32xbf16>
    %cst_110 = arith.constant dense<0.000000e+00> : vector<16x32xf32>
    %485 = tpu.matmul %484, %483, %cst_110 {dimension_numbers = #tpu.dot_dimension_numbers<[1], [0], [0], [1], [0, 0, 1, 1], [], []>} : vector<16x32xbf16>, vector<32x32xbf16>, vector<16x32xf32> -> vector<16x32xf32>
    %486 = vector.extract_strided_slice %464 {offsets = [64], sizes = [32], strides = [1]} : vector<96xf32> to vector<32xf32>
    %487 = vector.shape_cast %486 : vector<32xf32> to vector<1x32xf32>
    %488 = vector.broadcast %487 : vector<1x32xf32> to vector<16x32xf32>
    %489 = arith.addf %485, %488 : vector<16x32xf32>
    %490 = vector.extract_strided_slice %475 {offsets = [0, 0], sizes = [8, 8], strides = [1, 1]} : vector<8x32xf32> to vector<8x8xf32>
    %491 = vector.extract_strided_slice %475 {offsets = [0, 8], sizes = [8, 8], strides = [1, 1]} : vector<8x32xf32> to vector<8x8xf32>
    %492 = vector.extract_strided_slice %475 {offsets = [0, 16], sizes = [8, 8], strides = [1, 1]} : vector<8x32xf32> to vector<8x8xf32>
    %493 = vector.extract_strided_slice %475 {offsets = [0, 24], sizes = [8, 8], strides = [1, 1]} : vector<8x32xf32> to vector<8x8xf32>
    %494 = vector.shape_cast %490 : vector<8x8xf32> to vector<1x8x8xf32>
    %495 = vector.shape_cast %491 : vector<8x8xf32> to vector<1x8x8xf32>
    %496 = vector.shape_cast %492 : vector<8x8xf32> to vector<1x8x8xf32>
    %497 = vector.shape_cast %493 : vector<8x8xf32> to vector<1x8x8xf32>
    %498 = tpu.concatenate %494, %495, %496, %497 in 0 : vector<1x8x8xf32>, vector<1x8x8xf32>, vector<1x8x8xf32>, vector<1x8x8xf32> -> vector<4x8x8xf32>
    %499 = vector.extract_strided_slice %482 {offsets = [0, 0], sizes = [16, 8], strides = [1, 1]} : vector<16x32xf32> to vector<16x8xf32>
    %500 = vector.extract_strided_slice %482 {offsets = [0, 8], sizes = [16, 8], strides = [1, 1]} : vector<16x32xf32> to vector<16x8xf32>
    %501 = vector.extract_strided_slice %482 {offsets = [0, 16], sizes = [16, 8], strides = [1, 1]} : vector<16x32xf32> to vector<16x8xf32>
    %502 = vector.extract_strided_slice %482 {offsets = [0, 24], sizes = [16, 8], strides = [1, 1]} : vector<16x32xf32> to vector<16x8xf32>
    %503 = vector.shape_cast %499 : vector<16x8xf32> to vector<1x16x8xf32>
    %504 = vector.shape_cast %500 : vector<16x8xf32> to vector<1x16x8xf32>
    %505 = vector.shape_cast %501 : vector<16x8xf32> to vector<1x16x8xf32>
    %506 = vector.shape_cast %502 : vector<16x8xf32> to vector<1x16x8xf32>
    %507 = tpu.concatenate %503, %504, %505, %506 in 0 : vector<1x16x8xf32>, vector<1x16x8xf32>, vector<1x16x8xf32>, vector<1x16x8xf32> -> vector<4x16x8xf32>
    %508 = vector.extract_strided_slice %489 {offsets = [0, 0], sizes = [16, 8], strides = [1, 1]} : vector<16x32xf32> to vector<16x8xf32>
    %509 = vector.extract_strided_slice %489 {offsets = [0, 8], sizes = [16, 8], strides = [1, 1]} : vector<16x32xf32> to vector<16x8xf32>
    %510 = vector.extract_strided_slice %489 {offsets = [0, 16], sizes = [16, 8], strides = [1, 1]} : vector<16x32xf32> to vector<16x8xf32>
    %511 = vector.extract_strided_slice %489 {offsets = [0, 24], sizes = [16, 8], strides = [1, 1]} : vector<16x32xf32> to vector<16x8xf32>
    %512 = vector.shape_cast %508 : vector<16x8xf32> to vector<1x16x8xf32>
    %513 = vector.shape_cast %509 : vector<16x8xf32> to vector<1x16x8xf32>
    %514 = vector.shape_cast %510 : vector<16x8xf32> to vector<1x16x8xf32>
    %515 = vector.shape_cast %511 : vector<16x8xf32> to vector<1x16x8xf32>
    %516 = tpu.concatenate %512, %513, %514, %515 in 0 : vector<1x16x8xf32>, vector<1x16x8xf32>, vector<1x16x8xf32>, vector<1x16x8xf32> -> vector<4x16x8xf32>
    %517 = arith.truncf %498 : vector<4x8x8xf32> to vector<4x8x8xbf16>
    %518 = arith.truncf %507 : vector<4x16x8xf32> to vector<4x16x8xbf16>
    "tpu.trace_start"() <{level = 10 : i32, message = "hqd,hkd->hqk"}> : () -> ()
    %cst_111 = arith.constant dense<0.000000e+00> : vector<4x8x16xf32>
    %519 = tpu.matmul %517, %518, %cst_111 {dimension_numbers = #tpu.dot_dimension_numbers<[2], [2], [1], [1], [0, 0, 0, 1, 1, 1], [0], [0]>} : vector<4x8x8xbf16>, vector<4x16x8xbf16>, vector<4x8x16xf32> -> vector<4x8x16xf32>
    "tpu.trace_stop"() : () -> ()
    %cst_112 = arith.constant 0.353553385 : f32
    %520 = vector.broadcast %cst_112 : f32 to vector<4x8x16xf32>
    %521 = arith.mulf %519, %520 : vector<4x8x16xf32>
    %cst_113 = arith.constant dense<0xFF800000> : vector<4x8xf32>
    %522 = vector.multi_reduction <maximumf>, %521, %cst_113 [2] : vector<4x8x16xf32> to vector<4x8xf32>
    %523 = vector.shape_cast %522 : vector<4x8xf32> to vector<4x8x1xf32>
    %524 = vector.broadcast %523 : vector<4x8x1xf32> to vector<4x8x16xf32>
    %525 = arith.subf %521, %524 : vector<4x8x16xf32>
    %526 = math.exp %525 : vector<4x8x16xf32>
    %cst_114 = arith.constant dense<0.000000e+00> : vector<4x8xf32>
    %527 = vector.multi_reduction <add>, %526, %cst_114 [2] : vector<4x8x16xf32> to vector<4x8xf32>
    %528 = vector.shape_cast %527 : vector<4x8xf32> to vector<4x8x1xf32>
    %529 = tpu.reciprocal %528 {approx = true} : vector<4x8x1xf32> -> vector<4x8x1xf32>
    %530 = vector.broadcast %529 : vector<4x8x1xf32> to vector<4x8x16xf32>
    %531 = arith.mulf %526, %530 : vector<4x8x16xf32>
    %532 = arith.truncf %531 : vector<4x8x16xf32> to vector<4x8x16xbf16>
    %533 = arith.truncf %516 : vector<4x16x8xf32> to vector<4x16x8xbf16>
    "tpu.trace_start"() <{level = 10 : i32, message = "hqk,hkd->hqd"}> : () -> ()
    %cst_115 = arith.constant dense<0.000000e+00> : vector<4x8x8xf32>
    %534 = tpu.matmul %532, %533, %cst_115 {dimension_numbers = #tpu.dot_dimension_numbers<[2], [1], [1], [2], [0, 0, 0, 1, 1, 2], [0], [0]>} : vector<4x8x16xbf16>, vector<4x16x8xbf16>, vector<4x8x8xf32> -> vector<4x8x8xf32>
    "tpu.trace_stop"() : () -> ()
    %535 = vector.extract_strided_slice %534 {offsets = [0, 0, 0], sizes = [1, 8, 8], strides = [1, 1, 1]} : vector<4x8x8xf32> to vector<1x8x8xf32>
    %536 = vector.shape_cast %535 : vector<1x8x8xf32> to vector<8x8xf32>
    %537 = vector.extract_strided_slice %534 {offsets = [1, 0, 0], sizes = [1, 8, 8], strides = [1, 1, 1]} : vector<4x8x8xf32> to vector<1x8x8xf32>
    %538 = vector.shape_cast %537 : vector<1x8x8xf32> to vector<8x8xf32>
    %539 = vector.extract_strided_slice %534 {offsets = [2, 0, 0], sizes = [1, 8, 8], strides = [1, 1, 1]} : vector<4x8x8xf32> to vector<1x8x8xf32>
    %540 = vector.shape_cast %539 : vector<1x8x8xf32> to vector<8x8xf32>
    %541 = vector.extract_strided_slice %534 {offsets = [3, 0, 0], sizes = [1, 8, 8], strides = [1, 1, 1]} : vector<4x8x8xf32> to vector<1x8x8xf32>
    %542 = vector.shape_cast %541 : vector<1x8x8xf32> to vector<8x8xf32>
    %543 = tpu.concatenate %536, %538, %540, %542 in 1 : vector<8x8xf32>, vector<8x8xf32>, vector<8x8xf32>, vector<8x8xf32> -> vector<8x32xf32>
    %544 = arith.truncf %543 : vector<8x32xf32> to vector<8x32xbf16>
    %cst_116 = arith.constant dense<0.000000e+00> : vector<8x32xf32>
    %545 = tpu.matmul %544, %466, %cst_116 {dimension_numbers = #tpu.dot_dimension_numbers<[1], [0], [0], [1], [0, 0, 1, 1], [], []>} : vector<8x32xbf16>, vector<32x32xbf16>, vector<8x32xf32> -> vector<8x32xf32>
    %546 = vector.shape_cast %468 : vector<32xf32> to vector<1x32xf32>
    %547 = vector.broadcast %546 : vector<1x32xf32> to vector<8x32xf32>
    %548 = arith.addf %545, %547 : vector<8x32xf32>
    %549 = arith.addf %459, %548 : vector<8x32xf32>
    %550 = vector.extract_strided_slice %346 {offsets = [4, 0], sizes = [1, 32], strides = [1, 1]} : vector<11x32xf32> to vector<1x32xf32>
    %551 = vector.shape_cast %550 : vector<1x32xf32> to vector<32xf32>
    %552 = vector.extract_strided_slice %346 {offsets = [5, 0], sizes = [1, 32], strides = [1, 1]} : vector<11x32xf32> to vector<1x32xf32>
    %553 = vector.shape_cast %552 : vector<1x32xf32> to vector<32xf32>
    %cst_117 = arith.constant dense<0.000000e+00> : vector<8xf32>
    %554 = vector.multi_reduction <add>, %549, %cst_117 [1] : vector<8x32xf32> to vector<8xf32>
    %555 = vector.shape_cast %554 : vector<8xf32> to vector<8x1xf32>
    %cst_118 = arith.constant 3.200000e+01 : f32
    %556 = vector.broadcast %cst_118 : f32 to vector<8x1xf32>
    %557 = arith.divf %555, %556 : vector<8x1xf32>
    %558 = vector.broadcast %557 : vector<8x1xf32> to vector<8x32xf32>
    %559 = arith.subf %549, %558 : vector<8x32xf32>
    %560 = arith.mulf %559, %559 : vector<8x32xf32>
    %cst_119 = arith.constant dense<0.000000e+00> : vector<8xf32>
    %561 = vector.multi_reduction <add>, %560, %cst_119 [1] : vector<8x32xf32> to vector<8xf32>
    %562 = vector.shape_cast %561 : vector<8xf32> to vector<8x1xf32>
    %cst_120 = arith.constant 3.200000e+01 : f32
    %563 = vector.broadcast %cst_120 : f32 to vector<8x1xf32>
    %564 = arith.divf %562, %563 : vector<8x1xf32>
    %565 = vector.broadcast %557 : vector<8x1xf32> to vector<8x32xf32>
    %566 = arith.subf %549, %565 : vector<8x32xf32>
    %cst_121 = arith.constant 9.99999974E-6 : f32
    %567 = vector.broadcast %cst_121 : f32 to vector<8x1xf32>
    %568 = arith.addf %564, %567 : vector<8x1xf32>
    %569 = math.rsqrt %568 : vector<8x1xf32>
    %570 = vector.broadcast %569 : vector<8x1xf32> to vector<8x32xf32>
    %571 = arith.mulf %566, %570 : vector<8x32xf32>
    %572 = vector.shape_cast %551 : vector<32xf32> to vector<1x32xf32>
    %573 = vector.broadcast %572 : vector<1x32xf32> to vector<8x32xf32>
    %574 = arith.mulf %571, %573 : vector<8x32xf32>
    %575 = vector.shape_cast %553 : vector<32xf32> to vector<1x32xf32>
    %576 = vector.broadcast %575 : vector<1x32xf32> to vector<8x32xf32>
    %577 = arith.addf %574, %576 : vector<8x32xf32>
    %578 = arith.truncf %577 : vector<8x32xf32> to vector<8x32xbf16>
    %cst_122 = arith.constant dense<0.000000e+00> : vector<8x64xf32>
    %579 = tpu.matmul %578, %340, %cst_122 {dimension_numbers = #tpu.dot_dimension_numbers<[1], [0], [0], [1], [0, 0, 1, 1], [], []>} : vector<8x32xbf16>, vector<32x64xbf16>, vector<8x64xf32> -> vector<8x64xf32>
    %580 = vector.broadcast %342 : vector<1x64xf32> to vector<8x64xf32>
    %581 = arith.addf %579, %580 : vector<8x64xf32>
    %cst_123 = arith.constant 0.000000e+00 : f32
    %582 = vector.broadcast %cst_123 : f32 to vector<8x64xf32>
    %583 = arith.maximumf %581, %582 : vector<8x64xf32>
    %584 = arith.truncf %583 : vector<8x64xf32> to vector<8x64xbf16>
    %cst_124 = arith.constant dense<0.000000e+00> : vector<8x32xf32>
    %585 = tpu.matmul %584, %344, %cst_124 {dimension_numbers = #tpu.dot_dimension_numbers<[1], [0], [0], [1], [0, 0, 1, 1], [], []>} : vector<8x64xbf16>, vector<64x32xbf16>, vector<8x32xf32> -> vector<8x32xf32>
    %586 = vector.extract_strided_slice %346 {offsets = [10, 0], sizes = [1, 32], strides = [1, 1]} : vector<11x32xf32> to vector<1x32xf32>
    %587 = vector.shape_cast %586 : vector<1x32xf32> to vector<32xf32>
    %588 = vector.shape_cast %587 : vector<32xf32> to vector<1x32xf32>
    %589 = vector.broadcast %588 : vector<1x32xf32> to vector<8x32xf32>
    %590 = arith.addf %585, %589 : vector<8x32xf32>
    %591 = arith.addf %577, %590 : vector<8x32xf32>
    %592 = vector.extract_strided_slice %346 {offsets = [6, 0], sizes = [1, 32], strides = [1, 1]} : vector<11x32xf32> to vector<1x32xf32>
    %593 = vector.shape_cast %592 : vector<1x32xf32> to vector<32xf32>
    %594 = vector.extract_strided_slice %346 {offsets = [7, 0], sizes = [1, 32], strides = [1, 1]} : vector<11x32xf32> to vector<1x32xf32>
    %595 = vector.shape_cast %594 : vector<1x32xf32> to vector<32xf32>
    %cst_125 = arith.constant dense<0.000000e+00> : vector<8xf32>
    %596 = vector.multi_reduction <add>, %591, %cst_125 [1] : vector<8x32xf32> to vector<8xf32>
    %597 = vector.shape_cast %596 : vector<8xf32> to vector<8x1xf32>
    %cst_126 = arith.constant 3.200000e+01 : f32
    %598 = vector.broadcast %cst_126 : f32 to vector<8x1xf32>
    %599 = arith.divf %597, %598 : vector<8x1xf32>
    %600 = vector.broadcast %599 : vector<8x1xf32> to vector<8x32xf32>
    %601 = arith.subf %591, %600 : vector<8x32xf32>
    %602 = arith.mulf %601, %601 : vector<8x32xf32>
    %cst_127 = arith.constant dense<0.000000e+00> : vector<8xf32>
    %603 = vector.multi_reduction <add>, %602, %cst_127 [1] : vector<8x32xf32> to vector<8xf32>
    %604 = vector.shape_cast %603 : vector<8xf32> to vector<8x1xf32>
    %cst_128 = arith.constant 3.200000e+01 : f32
    %605 = vector.broadcast %cst_128 : f32 to vector<8x1xf32>
    %606 = arith.divf %604, %605 : vector<8x1xf32>
    %607 = vector.broadcast %599 : vector<8x1xf32> to vector<8x32xf32>
    %608 = arith.subf %591, %607 : vector<8x32xf32>
    %cst_129 = arith.constant 9.99999974E-6 : f32
    %609 = vector.broadcast %cst_129 : f32 to vector<8x1xf32>
    %610 = arith.addf %606, %609 : vector<8x1xf32>
    %611 = math.rsqrt %610 : vector<8x1xf32>
    %612 = vector.broadcast %611 : vector<8x1xf32> to vector<8x32xf32>
    %613 = arith.mulf %608, %612 : vector<8x32xf32>
    %614 = vector.shape_cast %593 : vector<32xf32> to vector<1x32xf32>
    %615 = vector.broadcast %614 : vector<1x32xf32> to vector<8x32xf32>
    %616 = arith.mulf %613, %615 : vector<8x32xf32>
    %617 = vector.shape_cast %595 : vector<32xf32> to vector<1x32xf32>
    %618 = vector.broadcast %617 : vector<1x32xf32> to vector<8x32xf32>
    %619 = arith.addf %616, %618 : vector<8x32xf32>
    %620 = vector.extract_strided_slice %346 {offsets = [8, 0], sizes = [1, 32], strides = [1, 1]} : vector<11x32xf32> to vector<1x32xf32>
    %621 = vector.shape_cast %620 : vector<1x32xf32> to vector<32xf32>
    %622 = vector.extract_strided_slice %346 {offsets = [9, 0], sizes = [1, 32], strides = [1, 1]} : vector<11x32xf32> to vector<1x32xf32>
    %623 = vector.shape_cast %622 : vector<1x32xf32> to vector<32xf32>
    %cst_130 = arith.constant dense<0.000000e+00> : vector<8xf32>
    %624 = vector.multi_reduction <add>, %619, %cst_130 [1] : vector<8x32xf32> to vector<8xf32>
    %625 = vector.shape_cast %624 : vector<8xf32> to vector<8x1xf32>
    %cst_131 = arith.constant 3.200000e+01 : f32
    %626 = vector.broadcast %cst_131 : f32 to vector<8x1xf32>
    %627 = arith.divf %625, %626 : vector<8x1xf32>
    %628 = vector.broadcast %627 : vector<8x1xf32> to vector<8x32xf32>
    %629 = arith.subf %619, %628 : vector<8x32xf32>
    %630 = arith.mulf %629, %629 : vector<8x32xf32>
    %cst_132 = arith.constant dense<0.000000e+00> : vector<8xf32>
    %631 = vector.multi_reduction <add>, %630, %cst_132 [1] : vector<8x32xf32> to vector<8xf32>
    %632 = vector.shape_cast %631 : vector<8xf32> to vector<8x1xf32>
    %cst_133 = arith.constant 3.200000e+01 : f32
    %633 = vector.broadcast %cst_133 : f32 to vector<8x1xf32>
    %634 = arith.divf %632, %633 : vector<8x1xf32>
    %635 = vector.broadcast %627 : vector<8x1xf32> to vector<8x32xf32>
    %636 = arith.subf %619, %635 : vector<8x32xf32>
    %cst_134 = arith.constant 9.99999974E-6 : f32
    %637 = vector.broadcast %cst_134 : f32 to vector<8x1xf32>
    %638 = arith.addf %634, %637 : vector<8x1xf32>
    %639 = math.rsqrt %638 : vector<8x1xf32>
    %640 = vector.broadcast %639 : vector<8x1xf32> to vector<8x32xf32>
    %641 = arith.mulf %636, %640 : vector<8x32xf32>
    %642 = vector.shape_cast %621 : vector<32xf32> to vector<1x32xf32>
    %643 = vector.broadcast %642 : vector<1x32xf32> to vector<8x32xf32>
    %644 = arith.mulf %641, %643 : vector<8x32xf32>
    %645 = vector.shape_cast %623 : vector<32xf32> to vector<1x32xf32>
    %646 = vector.broadcast %645 : vector<1x32xf32> to vector<8x32xf32>
    %647 = arith.addf %644, %646 : vector<8x32xf32>
    %648 = vector.extract_strided_slice %647 {offsets = [0, 0], sizes = [1, 32], strides = [1, 1]} : vector<8x32xf32> to vector<1x32xf32>
    %649 = vector.extract_strided_slice %647 {offsets = [1, 0], sizes = [1, 32], strides = [1, 1]} : vector<8x32xf32> to vector<1x32xf32>
    %650 = vector.extract_strided_slice %647 {offsets = [2, 0], sizes = [1, 32], strides = [1, 1]} : vector<8x32xf32> to vector<1x32xf32>
    %651 = vector.extract_strided_slice %647 {offsets = [3, 0], sizes = [1, 32], strides = [1, 1]} : vector<8x32xf32> to vector<1x32xf32>
    %652 = vector.extract_strided_slice %647 {offsets = [4, 0], sizes = [1, 32], strides = [1, 1]} : vector<8x32xf32> to vector<1x32xf32>
    %653 = vector.extract_strided_slice %647 {offsets = [5, 0], sizes = [1, 32], strides = [1, 1]} : vector<8x32xf32> to vector<1x32xf32>
    %654 = vector.extract_strided_slice %647 {offsets = [6, 0], sizes = [1, 32], strides = [1, 1]} : vector<8x32xf32> to vector<1x32xf32>
    %655 = vector.extract_strided_slice %647 {offsets = [7, 0], sizes = [1, 32], strides = [1, 1]} : vector<8x32xf32> to vector<1x32xf32>
    %656 = tpu.concatenate %648, %649, %650, %651, %652, %653, %654, %655 in 1 : vector<1x32xf32>, vector<1x32xf32>, vector<1x32xf32>, vector<1x32xf32>, vector<1x32xf32>, vector<1x32xf32>, vector<1x32xf32>, vector<1x32xf32> -> vector<1x256xf32>
    %657 = tpu.concatenate %332, %656 in 0 : vector<1x256xf32>, vector<1x256xf32> -> vector<2x256xf32>
    %c0_135 = arith.constant 0 : index
    %c0_136 = arith.constant 0 : index
    %c0_137 = arith.constant 0 : index
    %658 = vector.load %arg12[%c0_135, %c0_136, %c0_137] : memref<1x2x256xf32, #tpu.memory_space<vmem>>, vector<1x2x256xf32>
    %659 = vector.shape_cast %658 : vector<1x2x256xf32> to vector<2x256xf32>
    %660 = vector.shape_cast %657 : vector<2x256xf32> to vector<1x2x256xf32>
    tpu.vector_store %arg12[%c0_135, %c0_136, %c0_137], %660 {strides = array<i32>} : memref<1x2x256xf32, #tpu.memory_space<vmem>>, vector<1x2x256xf32>,
    return
  }
  func.func @transform_0(%arg0: i32) -> (i32, i32, i32) {
    %c0_i32 = arith.constant 0 : i32
    %c0_i32_0 = arith.constant 0 : i32
    %c0_i32_1 = arith.constant 0 : i32
    return %arg0, %c0_i32, %c0_i32_0 : i32, i32, i32
  }
  func.func @transform_1(%arg0: i32) -> (i32, i32, i32) {
    %c0_i32 = arith.constant 0 : i32
    %c0_i32_0 = arith.constant 0 : i32
    %c0_i32_1 = arith.constant 0 : i32
    return %arg0, %c0_i32, %c0_i32_0 : i32, i32, i32
  }
  func.func @transform_2(%arg0: i32) -> (i32, i32, i32) {
    %c0_i32 = arith.constant 0 : i32
    %c0_i32_0 = arith.constant 0 : i32
    %c0_i32_1 = arith.constant 0 : i32
    return %arg0, %c0_i32, %c0_i32_0 : i32, i32, i32
  }
  func.func @transform_3(%arg0: i32) -> (i32, i32, i32) {
    %c0_i32 = arith.constant 0 : i32
    %c0_i32_0 = arith.constant 0 : i32
    %c0_i32_1 = arith.constant 0 : i32
    return %arg0, %c0_i32, %c0_i32_0 : i32, i32, i32
  }
  func.func @transform_4(%arg0: i32) -> (i32, i32, i32, i32) {
    %c0_i32 = arith.constant 0 : i32
    %c0_i32_0 = arith.constant 0 : i32
    %c0_i32_1 = arith.constant 0 : i32
    %c0_i32_2 = arith.constant 0 : i32
    %c0_i32_3 = arith.constant 0 : i32
    return %c0_i32, %c0_i32_0, %c0_i32_1, %c0_i32_2 : i32, i32, i32, i32
  }
  func.func @transform_5(%arg0: i32) -> (i32, i32, i32, i32) {
    %c0_i32 = arith.constant 0 : i32
    %c0_i32_0 = arith.constant 0 : i32
    %c0_i32_1 = arith.constant 0 : i32
    %c0_i32_2 = arith.constant 0 : i32
    %c0_i32_3 = arith.constant 0 : i32
    return %c0_i32, %c0_i32_0, %c0_i32_1, %c0_i32_2 : i32, i32, i32, i32
  }
  func.func @transform_6(%arg0: i32) -> (i32, i32, i32) {
    %c0_i32 = arith.constant 0 : i32
    %c0_i32_0 = arith.constant 0 : i32
    %c0_i32_1 = arith.constant 0 : i32
    %c0_i32_2 = arith.constant 0 : i32
    return %c0_i32, %c0_i32_0, %c0_i32_1 : i32, i32, i32
  }
  func.func @transform_7(%arg0: i32) -> (i32, i32, i32) {
    %c0_i32 = arith.constant 0 : i32
    %c0_i32_0 = arith.constant 0 : i32
    %c0_i32_1 = arith.constant 0 : i32
    %c0_i32_2 = arith.constant 0 : i32
    return %c0_i32, %c0_i32_0, %c0_i32_1 : i32, i32, i32
  }
  func.func @transform_8(%arg0: i32) -> (i32, i32, i32) {
    %c0_i32 = arith.constant 0 : i32
    %c0_i32_0 = arith.constant 0 : i32
    %c0_i32_1 = arith.constant 0 : i32
    %c0_i32_2 = arith.constant 0 : i32
    return %c0_i32, %c0_i32_0, %c0_i32_1 : i32, i32, i32
  }
  func.func @transform_9(%arg0: i32) -> (i32, i32, i32) {
    %c0_i32 = arith.constant 0 : i32
    %c0_i32_0 = arith.constant 0 : i32
    %c0_i32_1 = arith.constant 0 : i32
    %c0_i32_2 = arith.constant 0 : i32
    return %c0_i32, %c0_i32_0, %c0_i32_1 : i32, i32, i32
  }
  func.func @transform_10(%arg0: i32) -> (i32, i32, i32) {
    %c0_i32 = arith.constant 0 : i32
    %c0_i32_0 = arith.constant 0 : i32
    %c0_i32_1 = arith.constant 0 : i32
    %c0_i32_2 = arith.constant 0 : i32
    return %c0_i32, %c0_i32_0, %c0_i32_1 : i32, i32, i32
  }
  func.func @transform_11(%arg0: i32) -> (i32, i32, i32) {
    %c0_i32 = arith.constant 0 : i32
    %c0_i32_0 = arith.constant 0 : i32
    %c0_i32_1 = arith.constant 0 : i32
    return %arg0, %c0_i32, %c0_i32_0 : i32, i32, i32
  }
}

</mosaic_0001>

<llo_original>
// kernel: tpu_custom_call.1
$region0: #{tpu_custom_call.1}
  #allocation0 [shape = 'u32[]', space=smem, size = 0x4, offset = 0x4, fixed_abs, tag = 'smem constant byte address 0x4 - core index']
  #allocation1 [shape = 'u32[144,128]{1,0:T(1,128)}', space=vmem, size = 0x12000, scoped, tag = 'internal scratch']
  %s0 = inlined_call_operand.hbm [shape: f32[2,8,32], index: 0, kind: input, shape index: {}]
  %s1 = inlined_call_operand.hbm [shape: f32[2,8,32], index: 1, kind: input, shape index: {}]
  %s2 = inlined_call_operand.hbm [shape: f32[2,16,32], index: 2, kind: input, shape index: {}]
  %s3 = inlined_call_operand.hbm [shape: f32[2,16,32], index: 3, kind: input, shape index: {}]
  %s4 = inlined_call_operand.vmem [shape: bf16[2,2,32,96], index: 4, kind: input, shape index: {}]
  %s5 = inlined_call_operand.vmem [shape: bf16[2,2,32,32], index: 5, kind: input, shape index: {}]
  %s6 = inlined_call_operand.hbm [shape: bf16[2,32,64], index: 6, kind: input, shape index: {}]
  %s7 = inlined_call_operand.hbm [shape: f32[2,1,64], index: 7, kind: input, shape index: {}]
  %s8 = inlined_call_operand.vmem [shape: bf16[2,64,32], index: 8, kind: input, shape index: {}]
  %s9 = inlined_call_operand.vmem [shape: f32[2,2,96], index: 9, kind: input, shape index: {}]
  %s10 = inlined_call_operand.vmem [shape: f32[2,11,32], index: 10, kind: input, shape index: {}]
  %s11 = inlined_call_operand.hbm [shape: f32[2,2,256], index: 11, kind: output, shape index: {}]
  %s12 = sld [smem:[#allocation0]]
  $region101: #{tpu_custom_call.1} parent=0
    _
  %s14 = ssub.s32 1, %s12
  %s15 = scalar_select 0, %s14, %s12
  $region1: #{tpu_custom_call.1} parent=0
    #allocation2 [shape = 'u8[8192]{0}', space=vmem, size = 0x2000, scoped, tag = 'input window, operand 0']
    #allocation3 [shape = 's32[2]{0}', space=sflag, size = 0x8, scoped, tag = 'scoped memory for tpu_custom_call.1']
    #allocation4 [shape = 's32[2]{0}', space=sflag, size = 0x8, scoped, tag = 'scoped memory for tpu_custom_call.1']
    #allocation5 [shape = 'u8[8192]{0}', space=vmem, size = 0x2000, scoped, tag = 'input window, operand 1']
    #allocation6 [shape = 's32[2]{0}', space=sflag, size = 0x8, scoped, tag = 'scoped memory for tpu_custom_call.1']
    #allocation7 [shape = 'u8[16384]{0}', space=vmem, size = 0x4000, scoped, tag = 'input window, operand 2']
    #allocation8 [shape = 'u8[16384]{0}', space=vmem, size = 0x4000, scoped, tag = 'input window, operand 3']
    #allocation9 [shape = 's32[2]{0}', space=sflag, size = 0x8, scoped, tag = 'scoped memory for tpu_custom_call.1']
    #allocation10 [shape = 'u8[16384]{0}', space=vmem, size = 0x4000, scoped, tag = 'input window, operand 6, single buffered']
    #allocation11 [shape = 'u8[1024]{0}', space=vmem, size = 0x400, scoped, tag = 'input window, operand 7, single buffered']
    #allocation12 [shape = 's32[1]{0}', space=sflag, size = 0x4, scoped, tag = 'scoped memory for tpu_custom_call.1']
    #allocation13 [shape = 'u8[4096]{0}', space=vmem, size = 0x1000, scoped, tag = 'output window, operand 0']
    %16 = vsyncpa [#allocation3], 0
    %s17 = scalar_lea.sflag [#allocation3], 1
    %18 = vsyncpa %s17, 0
    %19 = vsyncpa [#allocation6], 0
    %s20 = scalar_lea.sflag [#allocation6], 1
    %21 = vsyncpa %s20, 0
    %22 = vsyncpa [#allocation9], 0
    %s23 = scalar_lea.sflag [#allocation9], 1
    %24 = vsyncpa %s23, 0
    %25 = vsyncpa [#allocation12], 0
    %26 = vsyncpa [#allocation4], 0
    %s27 = scalar_lea.sflag [#allocation4], 1
    %28 = vsyncpa %s27, 0
    loop: start=0, step=1, limit=4
    $region2: #{tpu_custom_call.1} parent=1 // loop_pre_header
      _
    $region3: #{tpu_custom_call.1} parent=1 // loop_header
      %s30 = sphi 0, %s34
      %p31 = scmp.ge.s32.totalorder %s30, 4
      %s40 = sphi 0, %s42
      %s43 = sphi 0, %s40
      %s44 = sphi 0, %s43
      %s60 = sphi 0, %s44
      %s66 = sphi 0, %s68
      %s69 = sphi 0, %s66
      %s70 = sphi 0, %s69
      %s86 = sphi 0, %s70
      %s92 = sphi 0, %s94
      %s95 = sphi 0, %s92
      %s96 = sphi 0, %s95
      %s112 = sphi 0, %s96
      %s118 = sphi 0, %s120
      %s121 = sphi 0, %s118
      %s122 = sphi 0, %s121
      %s138 = sphi 0, %s122
      %s142 = sphi 0, %s142
      %s144 = sphi 0, %s142
      %s145 = sphi 0, %s144
      %s159 = sphi 0, %s145
      %s163 = sphi 0, %s163
      %s165 = sphi 0, %s163
      %s166 = sphi 0, %s165
      %s180 = sphi 0, %s166
      %s184 = sphi 0, %s184
      %s186 = sphi 0, %s184
      %s187 = sphi 0, %s186
      %s201 = sphi 0, %s187
      %s205 = sphi 0, %s205
      %s207 = sphi 0, %s205
      %s208 = sphi 0, %s207
      %s222 = sphi 0, %s208
      %s226 = sphi 0, %s226
      %s228 = sphi 0, %s226
      %s229 = sphi 0, %s228
      %s243 = sphi 0, %s229
      %s247 = sphi 0, %s247
      %s249 = sphi 0, %s247
      %s250 = sphi 0, %s249
      %s264 = sphi 0, %s250
      %s268 = sphi 0, %s268
      %s270 = sphi 0, %s268
      %s271 = sphi 0, %s270
      %s285 = sphi 0, %s271
      %s291 = sphi 0, %s293
      %s294 = sphi 0, %s291
      %s295 = sphi 0, %s294
      %s311 = sphi 0, %s295
    $region4: #{tpu_custom_call.1} parent=1 // loop_header_branch
      %33 = sbr.rel (%p31) target = $region8
    $region5: #{tpu_custom_call.1} parent=1 // loop_body
      %s35 = ssub.s32 %s30, 1
      %s36 = ssub.s32 %s30, 2
      %s37 = sadd.s32 %s30, 1
      %s38 = ssub.s32 %s30, %s37
      %p39 = scmp.eq.s32.totalorder %s38, 0
      %s41 = sadd.s32 %s40, 1
      %s42 = scalar_select %p39, %s40, %s41
      %p45 = pneg %p39
      %p46 = scmp.eq.s32.totalorder %s30, 1
      %p47 = por %p45, %p46
      %p48 = scmp.ne.s32.totalorder %s40, %s43
      %p49 = scmp.eq.s32.totalorder %s30, 0
      %p50 = por %p48, %p49
      %p51 = scmp.ne.s32.totalorder %s40, %s43
      %p52 = scmp.eq.s32.totalorder %s35, 1
      %p53 = por %p51, %p52
      %p54 = scmp.ne.s32.totalorder %s43, %s44
      %p55 = scmp.eq.s32.totalorder %s35, 0
      %p56 = por %p54, %p55
      %p57 = scmp.ne.s32.totalorder %s43, %s44
      %p58 = scmp.eq.s32.totalorder %s36, 1
      %p59 = por %p57, %p58
      %p61 = scmp.ne.s32.totalorder %s44, %s60
      %p62 = scmp.eq.s32.totalorder %s36, 0
      %p63 = por %p61, %p62
      %s64 = ssub.s32 %s30, %s37
      %p65 = scmp.eq.s32.totalorder %s64, 0
      %s67 = sadd.s32 %s66, 1
      %s68 = scalar_select %p65, %s66, %s67
      %p71 = pneg %p65
      %p72 = scmp.eq.s32.totalorder %s30, 1
      %p73 = por %p71, %p72
      %p74 = scmp.ne.s32.totalorder %s66, %s69
      %p75 = scmp.eq.s32.totalorder %s30, 0
      %p76 = por %p74, %p75
      %p77 = scmp.ne.s32.totalorder %s66, %s69
      %p78 = scmp.eq.s32.totalorder %s35, 1
      %p79 = por %p77, %p78
      %p80 = scmp.ne.s32.totalorder %s69, %s70
      %p81 = scmp.eq.s32.totalorder %s35, 0
      %p82 = por %p80, %p81
      %p83 = scmp.ne.s32.totalorder %s69, %s70
      %p84 = scmp.eq.s32.totalorder %s36, 1
      %p85 = por %p83, %p84
      %p87 = scmp.ne.s32.totalorder %s70, %s86
      %p88 = scmp.eq.s32.totalorder %s36, 0
      %p89 = por %p87, %p88
      %s90 = ssub.s32 %s30, %s37
      %p91 = scmp.eq.s32.totalorder %s90, 0
      %s93 = sadd.s32 %s92, 1
      %s94 = scalar_select %p91, %s92, %s93
      %p97 = pneg %p91
      %p98 = scmp.eq.s32.totalorder %s30, 1
      %p99 = por %p97, %p98
      %p100 = scmp.ne.s32.totalorder %s92, %s95
      %p101 = scmp.eq.s32.totalorder %s30, 0
      %p102 = por %p100, %p101
      %p103 = scmp.ne.s32.totalorder %s92, %s95
      %p104 = scmp.eq.s32.totalorder %s35, 1
      %p105 = por %p103, %p104
      %p106 = scmp.ne.s32.totalorder %s95, %s96
      %p107 = scmp.eq.s32.totalorder %s35, 0
      %p108 = por %p106, %p107
      %p109 = scmp.ne.s32.totalorder %s95, %s96
      %p110 = scmp.eq.s32.totalorder %s36, 1
      %p111 = por %p109, %p110
      %p113 = scmp.ne.s32.totalorder %s96, %s112
      %p114 = scmp.eq.s32.totalorder %s36, 0
      %p115 = por %p113, %p114
      %s116 = ssub.s32 %s30, %s37
      %p117 = scmp.eq.s32.totalorder %s116, 0
      %s119 = sadd.s32 %s118, 1
      %s120 = scalar_select %p117, %s118, %s119
      %p123 = pneg %p117
      %p124 = scmp.eq.s32.totalorder %s30, 1
      %p125 = por %p123, %p124
      %p126 = scmp.ne.s32.totalorder %s118, %s121
      %p127 = scmp.eq.s32.totalorder %s30, 0
      %p128 = por %p126, %p127
      %p129 = scmp.ne.s32.totalorder %s118, %s121
      %p130 = scmp.eq.s32.totalorder %s35, 1
      %p131 = por %p129, %p130
      %p132 = scmp.ne.s32.totalorder %s121, %s122
      %p133 = scmp.eq.s32.totalorder %s35, 0
      %p134 = por %p132, %p133
      %p135 = scmp.ne.s32.totalorder %s121, %s122
      %p136 = scmp.eq.s32.totalorder %s36, 1
      %p137 = por %p135, %p136
      %p139 = scmp.ne.s32.totalorder %s122, %s138
      %p140 = scmp.eq.s32.totalorder %s36, 0
      %p141 = por %p139, %p140
      %s143 = sadd.s32 %s142, 1
      %p146 = scmp.eq.s32.totalorder %s30, 1
      %p147 = scmp.ne.s32.totalorder %s142, %s144
      %p148 = scmp.eq.s32.totalorder %s30, 0
      %p149 = por %p147, %p148
      %p150 = scmp.ne.s32.totalorder %s142, %s144
      %p151 = scmp.eq.s32.totalorder %s35, 1
      %p152 = por %p150, %p151
      %p153 = scmp.ne.s32.totalorder %s144, %s145
      %p154 = scmp.eq.s32.totalorder %s35, 0
      %p155 = por %p153, %p154
      %p156 = scmp.ne.s32.totalorder %s144, %s145
      %p157 = scmp.eq.s32.totalorder %s36, 1
      %p158 = por %p156, %p157
      %p160 = scmp.ne.s32.totalorder %s145, %s159
      %p161 = scmp.eq.s32.totalorder %s36, 0
      %p162 = por %p160, %p161
      %s164 = sadd.s32 %s163, 1
      %p167 = scmp.eq.s32.totalorder %s30, 1
      %p168 = scmp.ne.s32.totalorder %s163, %s165
      %p169 = scmp.eq.s32.totalorder %s30, 0
      %p170 = por %p168, %p169
      %p171 = scmp.ne.s32.totalorder %s163, %s165
      %p172 = scmp.eq.s32.totalorder %s35, 1
      %p173 = por %p171, %p172
      %p174 = scmp.ne.s32.totalorder %s165, %s166
      %p175 = scmp.eq.s32.totalorder %s35, 0
      %p176 = por %p174, %p175
      %p177 = scmp.ne.s32.totalorder %s165, %s166
      %p178 = scmp.eq.s32.totalorder %s36, 1
      %p179 = por %p177, %p178
      %p181 = scmp.ne.s32.totalorder %s166, %s180
      %p182 = scmp.eq.s32.totalorder %s36, 0
      %p183 = por %p181, %p182
      %s185 = sadd.s32 %s184, 1
      %p188 = scmp.eq.s32.totalorder %s30, 1
      %p189 = scmp.ne.s32.totalorder %s184, %s186
      %p190 = scmp.eq.s32.totalorder %s30, 0
      %p191 = por %p189, %p190
      %p192 = scmp.ne.s32.totalorder %s184, %s186
      %p193 = scmp.eq.s32.totalorder %s35, 1
      %p194 = por %p192, %p193
      %p195 = scmp.ne.s32.totalorder %s186, %s187
      %p196 = scmp.eq.s32.totalorder %s35, 0
      %p197 = por %p195, %p196
      %p198 = scmp.ne.s32.totalorder %s186, %s187
      %p199 = scmp.eq.s32.totalorder %s36, 1
      %p200 = por %p198, %p199
      %p202 = scmp.ne.s32.totalorder %s187, %s201
      %p203 = scmp.eq.s32.totalorder %s36, 0
      %p204 = por %p202, %p203
      %s206 = sadd.s32 %s205, 1
      %p209 = scmp.eq.s32.totalorder %s30, 1
      %p210 = scmp.ne.s32.totalorder %s205, %s207
      %p211 = scmp.eq.s32.totalorder %s30, 0
      %p212 = por %p210, %p211
      %p213 = scmp.ne.s32.totalorder %s205, %s207
      %p214 = scmp.eq.s32.totalorder %s35, 1
      %p215 = por %p213, %p214
      %p216 = scmp.ne.s32.totalorder %s207, %s208
      %p217 = scmp.eq.s32.totalorder %s35, 0
      %p218 = por %p216, %p217
      %p219 = scmp.ne.s32.totalorder %s207, %s208
      %p220 = scmp.eq.s32.totalorder %s36, 1
      %p221 = por %p219, %p220
      %p223 = scmp.ne.s32.totalorder %s208, %s222
      %p224 = scmp.eq.s32.totalorder %s36, 0
      %p225 = por %p223, %p224
      %s227 = sadd.s32 %s226, 1
      %p230 = scmp.eq.s32.totalorder %s30, 1
      %p231 = scmp.ne.s32.totalorder %s226, %s228
      %p232 = scmp.eq.s32.totalorder %s30, 0
      %p233 = por %p231, %p232
      %p234 = scmp.ne.s32.totalorder %s226, %s228
      %p235 = scmp.eq.s32.totalorder %s35, 1
      %p236 = por %p234, %p235
      %p237 = scmp.ne.s32.totalorder %s228, %s229
      %p238 = scmp.eq.s32.totalorder %s35, 0
      %p239 = por %p237, %p238
      %p240 = scmp.ne.s32.totalorder %s228, %s229
      %p241 = scmp.eq.s32.totalorder %s36, 1
      %p242 = por %p240, %p241
      %p244 = scmp.ne.s32.totalorder %s229, %s243
      %p245 = scmp.eq.s32.totalorder %s36, 0
      %p246 = por %p244, %p245
      %s248 = sadd.s32 %s247, 1
      %p251 = scmp.eq.s32.totalorder %s30, 1
      %p252 = scmp.ne.s32.totalorder %s247, %s249
      %p253 = scmp.eq.s32.totalorder %s30, 0
      %p254 = por %p252, %p253
      %p255 = scmp.ne.s32.totalorder %s247, %s249
      %p256 = scmp.eq.s32.totalorder %s35, 1
      %p257 = por %p255, %p256
      %p258 = scmp.ne.s32.totalorder %s249, %s250
      %p259 = scmp.eq.s32.totalorder %s35, 0
      %p260 = por %p258, %p259
      %p261 = scmp.ne.s32.totalorder %s249, %s250
      %p262 = scmp.eq.s32.totalorder %s36, 1
      %p263 = por %p261, %p262
      %p265 = scmp.ne.s32.totalorder %s250, %s264
      %p266 = scmp.eq.s32.totalorder %s36, 0
      %p267 = por %p265, %p266
      %s269 = sadd.s32 %s268, 1
      %p272 = scmp.eq.s32.totalorder %s30, 1
      %p273 = scmp.ne.s32.totalorder %s268, %s270
      %p274 = scmp.eq.s32.totalorder %s30, 0
      %p275 = por %p273, %p274
      %p276 = scmp.ne.s32.totalorder %s268, %s270
      %p277 = scmp.eq.s32.totalorder %s35, 1
      %p278 = por %p276, %p277
      %p279 = scmp.ne.s32.totalorder %s270, %s271
      %p280 = scmp.eq.s32.totalorder %s35, 0
      %p281 = por %p279, %p280
      %p282 = scmp.ne.s32.totalorder %s270, %s271
      %p283 = scmp.eq.s32.totalorder %s36, 1
      %p284 = por %p282, %p283
      %p286 = scmp.ne.s32.totalorder %s271, %s285
      %p287 = scmp.eq.s32.totalorder %s36, 0
      %p288 = por %p286, %p287
      %s289 = ssub.s32 %s30, %s37
      %p290 = scmp.eq.s32.totalorder %s289, 0
      %s292 = sadd.s32 %s291, 1
      %s293 = scalar_select %p290, %s291, %s292
      %p296 = pneg %p290
      %p297 = scmp.eq.s32.totalorder %s30, 1
      %p298 = por %p296, %p297
      %p299 = scmp.ne.s32.totalorder %s291, %s294
      %p300 = scmp.eq.s32.totalorder %s30, 0
      %p301 = por %p299, %p300
      %p302 = scmp.ne.s32.totalorder %s291, %s294
      %p303 = scmp.eq.s32.totalorder %s35, 1
      %p304 = por %p302, %p303
      %p305 = scmp.ne.s32.totalorder %s294, %s295
      %p306 = scmp.eq.s32.totalorder %s35, 0
      %p307 = por %p305, %p306
      %p308 = scmp.ne.s32.totalorder %s294, %s295
      %p309 = scmp.eq.s32.totalorder %s36, 1
      %p310 = por %p308, %p309
      %p312 = scmp.ne.s32.totalorder %s295, %s311
      %p313 = scmp.eq.s32.totalorder %s36, 0
      %p314 = por %p312, %p313
      %p315 = scmp.le.s32.totalorder 1, %s30
      %p316 = scmp.lt.s32.totalorder %s30, 3
      %p317 = pnand %p315, %p316
      %p318 = pneg %p317
      // Predicated region
      $region9: #{tpu_custom_call.1} parent=5 // pred_check
        _
      $region10: #{tpu_custom_call.1} parent=5 // pred_check_branch
        %320 = sbr.rel (%p317) target = $region12
      $region11: #{tpu_custom_call.1} parent=5 // pred_region
        %s321 = ssub.s32 %s30, 1
        // Predicated region
        $region13: #{tpu_custom_call.1} parent=11 // pred_check
          %p322 = pneg %p155
        $region14: #{tpu_custom_call.1} parent=11 // pred_check_branch
          %324 = sbr.rel (%p322) target = $region16
        $region15: #{tpu_custom_call.1} parent=11 // pred_region
          _
        $region16: #{tpu_custom_call.1} parent=11 // pred_fallthru
          _
        // Predicated region
        $region17: #{tpu_custom_call.1} parent=11 // pred_check
          %p325 = pneg %p176
        $region18: #{tpu_custom_call.1} parent=11 // pred_check_branch
          %327 = sbr.rel (%p325) target = $region20
        $region19: #{tpu_custom_call.1} parent=11 // pred_region
          _
        $region20: #{tpu_custom_call.1} parent=11 // pred_fallthru
          _
        // Predicated region
        $region21: #{tpu_custom_call.1} parent=11 // pred_check
          %p328 = pneg %p197
        $region22: #{tpu_custom_call.1} parent=11 // pred_check_branch
          %330 = sbr.rel (%p328) target = $region24
        $region23: #{tpu_custom_call.1} parent=11 // pred_region
          %s332 = ssub.s32 512, 512
          %333 = vsyncadd [#allocation9], %s332
          %s334 = sshll.u32 [#allocation10], 4
          %s335 = int_to_ptr.vmem [resolvable:$true] %s334
          %340 = dma.hbm_to_vmem [thread:$0]  %s6, 512, %s335, [#allocation9], 64, 64, 4
        $region24: #{tpu_custom_call.1} parent=11 // pred_fallthru
          _
        // Predicated region
        $region25: #{tpu_custom_call.1} parent=11 // pred_check
          %p341 = pneg %p218
        $region26: #{tpu_custom_call.1} parent=11 // pred_check_branch
          %343 = sbr.rel (%p341) target = $region28
        $region27: #{tpu_custom_call.1} parent=11 // pred_region
          %s345 = ssub.s32 32, 32
          %346 = vsyncadd [#allocation12], %s345
          %s347 = sshll.u32 [#allocation11], 4
          %s348 = int_to_ptr.vmem [resolvable:$true] %s347
          %353 = dma.hbm_to_vmem [thread:$0]  %s7, 32, %s348, [#allocation12], 16, 16, 1
        $region28: #{tpu_custom_call.1} parent=11 // pred_fallthru
          _
        // Predicated region
        $region29: #{tpu_custom_call.1} parent=11 // pred_check
          %p354 = pneg %p239
        $region30: #{tpu_custom_call.1} parent=11 // pred_check_branch
          %356 = sbr.rel (%p354) target = $region32
        $region31: #{tpu_custom_call.1} parent=11 // pred_region
          _
        $region32: #{tpu_custom_call.1} parent=11 // pred_fallthru
          _
        // Predicated region
        $region33: #{tpu_custom_call.1} parent=11 // pred_check
          %p357 = pneg %p260
        $region34: #{tpu_custom_call.1} parent=11 // pred_check_branch
          %359 = sbr.rel (%p357) target = $region36
        $region35: #{tpu_custom_call.1} parent=11 // pred_region
          _
        $region36: #{tpu_custom_call.1} parent=11 // pred_fallthru
          _
        // Predicated region
        $region37: #{tpu_custom_call.1} parent=11 // pred_check
          %p360 = pneg %p281
        $region38: #{tpu_custom_call.1} parent=11 // pred_check_branch
          %362 = sbr.rel (%p360) target = $region40
        $region39: #{tpu_custom_call.1} parent=11 // pred_region
          _
        $region40: #{tpu_custom_call.1} parent=11 // pred_fallthru
          _
      $region12: #{tpu_custom_call.1} parent=5 // pred_fallthru
        _
      %p363 = scmp.lt.s32.totalorder %s30, 2
      // Predicated region
      $region41: #{tpu_custom_call.1} parent=5 // pred_check
        %p364 = pneg %p363
      $region42: #{tpu_custom_call.1} parent=5 // pred_check_branch
        %366 = sbr.rel (%p364) target = $region44
      $region43: #{tpu_custom_call.1} parent=5 // pred_region
        // Predicated region
        $region45: #{tpu_custom_call.1} parent=43 // pred_check
          %p367 = pneg %p50
        $region46: #{tpu_custom_call.1} parent=43 // pred_check_branch
          %369 = sbr.rel (%p367) target = $region48
        $region47: #{tpu_custom_call.1} parent=43 // pred_region
          %s370 = sand.u32 %s40, 1
          %s371 = scalar_lea.sflag [#allocation3], %s370
          %s372 = sand.u32 %s40, 1
          %s373 = smul.addr %s372, 8
          %s374 = scalar_lea.vmem [#allocation2], %s373
          %s376 = ssub.s32 128, 128
          %377 = vsyncadd %s371, %s376
          %s378 = smul.addr %s30, 128
          %s379 = scalar_lea.hbm %s0, %s378
          %s381 = sshll.u32 %s374, 4
          %s382 = int_to_ptr.vmem [resolvable:$true] %s381
          %384 = dma.hbm_to_vmem [thread:$0]  %s379, 128, %s382, %s371
        $region48: #{tpu_custom_call.1} parent=43 // pred_fallthru
          _
        // Predicated region
        $region49: #{tpu_custom_call.1} parent=43 // pred_check
          %p385 = pneg %p76
        $region50: #{tpu_custom_call.1} parent=43 // pred_check_branch
          %387 = sbr.rel (%p385) target = $region52
        $region51: #{tpu_custom_call.1} parent=43 // pred_region
          %s388 = sand.u32 %s30, 1
          %s389 = scalar_lea.sflag [#allocation6], %s388
          %s390 = sand.u32 %s66, 1
          %s391 = smul.addr %s390, 8
          %s392 = scalar_lea.vmem [#allocation5], %s391
          %s394 = ssub.s32 128, 128
          %395 = vsyncadd %s389, %s394
          %s396 = smul.addr %s30, 128
          %s397 = scalar_lea.hbm %s1, %s396
          %s399 = sshll.u32 %s392, 4
          %s400 = int_to_ptr.vmem [resolvable:$true] %s399
          %402 = dma.hbm_to_vmem [thread:$0]  %s397, 128, %s400, %s389
        $region52: #{tpu_custom_call.1} parent=43 // pred_fallthru
          _
        // Predicated region
        $region53: #{tpu_custom_call.1} parent=43 // pred_check
          %p403 = pneg %p102
        $region54: #{tpu_custom_call.1} parent=43 // pred_check_branch
          %405 = sbr.rel (%p403) target = $region56
        $region55: #{tpu_custom_call.1} parent=43 // pred_region
          %s406 = sand.u32 %s30, 1
          %s407 = scalar_lea.sflag [#allocation6], %s406
          %s408 = sand.u32 %s92, 1
          %s409 = smul.addr %s408, 16
          %s410 = scalar_lea.vmem [#allocation7], %s409
          %s412 = ssub.s32 256, 256
          %413 = vsyncadd %s407, %s412
          %s414 = smul.addr %s30, 2
          %s415 = smul.addr %s414, 128
          %s416 = scalar_lea.hbm %s2, %s415
          %s417 = sshll.u32 %s410, 4
          %s418 = int_to_ptr.vmem [resolvable:$true] %s417
          %423 = dma.hbm_to_vmem [thread:$0]  %s416, 256, %s418, %s407, 128, 128, 8
        $region56: #{tpu_custom_call.1} parent=43 // pred_fallthru
          _
        // Predicated region
        $region57: #{tpu_custom_call.1} parent=43 // pred_check
          %p424 = pneg %p128
        $region58: #{tpu_custom_call.1} parent=43 // pred_check_branch
          %426 = sbr.rel (%p424) target = $region60
        $region59: #{tpu_custom_call.1} parent=43 // pred_region
          %s427 = sand.u32 %s30, 1
          %s428 = scalar_lea.sflag [#allocation9], %s427
          %s429 = sand.u32 %s118, 1
          %s430 = smul.addr %s429, 16
          %s431 = scalar_lea.vmem [#allocation8], %s430
          %s433 = ssub.s32 256, 256
          %434 = vsyncadd %s428, %s433
          %s435 = smul.addr %s30, 2
          %s436 = smul.addr %s435, 128
          %s437 = scalar_lea.hbm %s3, %s436
          %s438 = sshll.u32 %s431, 4
          %s439 = int_to_ptr.vmem [resolvable:$true] %s438
          %444 = dma.hbm_to_vmem [thread:$0]  %s437, 256, %s439, %s428, 128, 128, 8
        $region60: #{tpu_custom_call.1} parent=43 // pred_fallthru
          _
      $region44: #{tpu_custom_call.1} parent=5 // pred_fallthru
        _
      %p445 = scmp.le.s32.totalorder 1, %s30
      %p446 = scmp.lt.s32.totalorder %s30, 3
      %p447 = pnand %p445, %p446
      %p448 = pneg %p447
      // Predicated region
      $region61: #{tpu_custom_call.1} parent=5 // pred_check
        _
      $region62: #{tpu_custom_call.1} parent=5 // pred_check_branch
        %450 = sbr.rel (%p447) target = $region64
      $region63: #{tpu_custom_call.1} parent=5 // pred_region
        %s451 = ssub.s32 %s30, 1
        %s452 = sand.u32 %s43, 1
        %s453 = scalar_lea.sflag [#allocation3], %s452
        %s454 = sand.u32 %s43, 1
        %s455 = smul.addr %s454, 8
        %s456 = scalar_lea.vmem [#allocation2], %s455
        // Predicated region
        $region65: #{tpu_custom_call.1} parent=63 // pred_check
          %p457 = pneg %p56
        $region66: #{tpu_custom_call.1} parent=63 // pred_check_branch
          %459 = sbr.rel (%p457) target = $region68
        $region67: #{tpu_custom_call.1} parent=63 // pred_region
          %460 = dma.done %s453, 128
        $region68: #{tpu_custom_call.1} parent=63 // pred_fallthru
          _
        %s461 = sand.u32 %s35, 1
        %s462 = scalar_lea.sflag [#allocation6], %s461
        %s463 = sand.u32 %s69, 1
        %s464 = smul.addr %s463, 8
        %s465 = scalar_lea.vmem [#allocation5], %s464
        // Predicated region
        $region69: #{tpu_custom_call.1} parent=63 // pred_check
          %p466 = pneg %p82
        $region70: #{tpu_custom_call.1} parent=63 // pred_check_branch
          %468 = sbr.rel (%p466) target = $region72
        $region71: #{tpu_custom_call.1} parent=63 // pred_region
          %469 = dma.done %s462, 128
        $region72: #{tpu_custom_call.1} parent=63 // pred_fallthru
          _
        %s470 = sand.u32 %s35, 1
        %s471 = scalar_lea.sflag [#allocation6], %s470
        %s472 = sand.u32 %s95, 1
        %s473 = smul.addr %s472, 16
        %s474 = scalar_lea.vmem [#allocation7], %s473
        // Predicated region
        $region73: #{tpu_custom_call.1} parent=63 // pred_check
          %p475 = pneg %p108
        $region74: #{tpu_custom_call.1} parent=63 // pred_check_branch
          %477 = sbr.rel (%p475) target = $region76
        $region75: #{tpu_custom_call.1} parent=63 // pred_region
          %478 = dma.done %s471, 256
        $region76: #{tpu_custom_call.1} parent=63 // pred_fallthru
          _
        %s479 = sand.u32 %s35, 1
        %s480 = scalar_lea.sflag [#allocation9], %s479
        %s481 = sand.u32 %s121, 1
        %s482 = smul.addr %s481, 16
        %s483 = scalar_lea.vmem [#allocation8], %s482
        // Predicated region
        $region77: #{tpu_custom_call.1} parent=63 // pred_check
          %p484 = pneg %p134
        $region78: #{tpu_custom_call.1} parent=63 // pred_check_branch
          %486 = sbr.rel (%p484) target = $region80
        $region79: #{tpu_custom_call.1} parent=63 // pred_region
          %487 = dma.done %s480, 256
        $region80: #{tpu_custom_call.1} parent=63 // pred_fallthru
          _
        // Predicated region
        $region81: #{tpu_custom_call.1} parent=63 // pred_check
          %p488 = pneg %p197
        $region82: #{tpu_custom_call.1} parent=63 // pred_check_branch
          %490 = sbr.rel (%p488) target = $region84
        $region83: #{tpu_custom_call.1} parent=63 // pred_region
          %491 = dma.done [#allocation9], 512
        $region84: #{tpu_custom_call.1} parent=63 // pred_fallthru
          _
        // Predicated region
        $region85: #{tpu_custom_call.1} parent=63 // pred_check
          %p492 = pneg %p218
        $region86: #{tpu_custom_call.1} parent=63 // pred_check_branch
          %494 = sbr.rel (%p492) target = $region88
        $region87: #{tpu_custom_call.1} parent=63 // pred_region
          %495 = dma.done [#allocation12], 32
        $region88: #{tpu_custom_call.1} parent=63 // pred_fallthru
          _
        %s496 = sand.u32 %s43, 1
        %s497 = scalar_lea.sflag [#allocation3], %s496
        %s498 = sand.u32 %s43, 1
        %s499 = smul.addr %s498, 8
        %s500 = scalar_lea.vmem [#allocation2], %s499
        %p501 = pneg %p56
        %p502 = pneg %p53
        %s503 = sand.u32 %s35, 1
        %s504 = scalar_lea.sflag [#allocation6], %s503
        %s505 = sand.u32 %s69, 1
        %s506 = smul.addr %s505, 8
        %s507 = scalar_lea.vmem [#allocation5], %s506
        %p508 = pneg %p82
        %p509 = pneg %p79
        %s510 = sand.u32 %s35, 1
        %s511 = scalar_lea.sflag [#allocation6], %s510
        %s512 = sand.u32 %s95, 1
        %s513 = smul.addr %s512, 16
        %s514 = scalar_lea.vmem [#allocation7], %s513
        %p515 = pneg %p108
        %p516 = pneg %p105
        %s517 = sand.u32 %s35, 1
        %s518 = scalar_lea.sflag [#allocation9], %s517
        %s519 = sand.u32 %s121, 1
        %s520 = smul.addr %s519, 16
        %s521 = scalar_lea.vmem [#allocation8], %s520
        %p522 = pneg %p134
        %p523 = pneg %p131
        %p524 = pneg %p155
        %p525 = pneg %p152
        %p526 = pneg %p176
        %p527 = pneg %p173
        %p528 = pneg %p197
        %p529 = pneg %p194
        %p530 = pneg %p218
        %p531 = pneg %p215
        %p532 = pneg %p239
        %p533 = pneg %p236
        %p534 = pneg %p260
        %p535 = pneg %p257
        %p536 = pneg %p281
        %p537 = pneg %p278
        %p538 = pneg %p307
        %p539 = pneg %p304
        %s540 = sand.u32 %s294, 1
        %s541 = scalar_lea.sflag [#allocation4], %s540
        %s542 = sand.u32 %s294, 1
        %s543 = smul.addr %s542, 4
        %s544 = scalar_lea.vmem [#allocation13], %s543
        %v546 = vld [vmem:[%s456] sm:$0xff]
        %v547 = vld [vmem:[%s465] sm:$0xff]
        %v548 = vld [vmem:[%s474] sm:$0xff]
        %v549 = vld [vmem:[%s474 + $0x8] sm:$0xff]
        %v550 = vld [vmem:[%s483] sm:$0xff]
        %v551 = vld [vmem:[%s483 + $0x8] sm:$0xff]
        %v552 = vadd.f32 %v548, %v550
        %v553 = vadd.f32 %v549, %v551
        %v554 = vld [vmem:[%s4] sm:$0xf]
        %v555 = vld [vmem:[%s4 + $0x4] sm:$0xf]
        %v556 = vld [vmem:[%s4 + $0x8] sm:$0xf]
        %v557 = vld [vmem:[%s4 + $0xc] sm:$0xf]
        %v558 = vld [vmem:[%s4 + $0x10] sm:$0xf]
        %v559 = vld [vmem:[%s4 + $0x14] sm:$0xf]
        %v560 = vld [vmem:[%s4 + $0x18] sm:$0xf]
        %v561 = vld [vmem:[%s4 + $0x1c] sm:$0xf]
        %v562 = vld [vmem:[%s9] sm:$0x3]
        %v563 = vld [vmem:[%s5] sm:$0xf]
        %v564 = vld [vmem:[%s5 + $0x4] sm:$0xf]
        %v565 = vld [vmem:[%s5 + $0x8] sm:$0xf]
        %v566 = vld [vmem:[%s5 + $0xc] sm:$0xf]
        %v567 = vld [vmem:[%s5 + $0x10] sm:$0xf]
        %v568 = vld [vmem:[%s5 + $0x14] sm:$0xf]
        %v569 = vld [vmem:[%s5 + $0x18] sm:$0xf]
        %v570 = vld [vmem:[%s5 + $0x1c] sm:$0xf]
        %v571 = vld [vmem:[#allocation10] sm:$0xf]
        %v572 = vld [vmem:[#allocation10 + $0x4] sm:$0xf]
        %v573 = vld [vmem:[#allocation10 + $0x8] sm:$0xf]
        %v574 = vld [vmem:[#allocation10 + $0xc] sm:$0xf]
        %v575 = vld [vmem:[#allocation11] sm:$0x1]
        %v576 = vld [vmem:[%s8] sm:$0xf]
        %v577 = vld [vmem:[%s8 + $0x4] sm:$0xf]
        %v578 = vld [vmem:[%s8 + $0x8] sm:$0xf]
        %v579 = vld [vmem:[%s8 + $0xc] sm:$0xf]
        %v580 = vld [vmem:[%s8 + $0x10] sm:$0xf]
        %v581 = vld [vmem:[%s8 + $0x14] sm:$0xf]
        %v582 = vld [vmem:[%s8 + $0x18] sm:$0xf]
        %v583 = vld [vmem:[%s8 + $0x1c] sm:$0xf]
        %v584 = vld [vmem:[%s10] sm:$0xff]
        %v585 = vld [vmem:[%s10 + $0x8] sm:$0x7]
        %v586 = vadd.f32 %v546, %v547
        %v587 = vpack.c.bf16 %v586, %v586
        %v588 = vlaneseq
        %v589 = vshrl.u32 %v588, 7
        %v590 = vsub.s32 0, %v589
        %v591 = vrot.slane %v562, %v590
        %v596 = vunpack.c.l.b16 %v554
        %v597 = vunpack.c.l.b16 %v555
        %v598 = vunpack.c.l.b16 %v556
        %v599 = vunpack.c.l.b16 %v557
        %v600 = vpack.c.b16 %v597, %v596
        %v601 = vpack.c.b16 %v599, %v598
        %vm604 = vcmask 261120
        %v606 = vsel %vm604, %v587, 0
        %608 = vmatprep.subr.bf16.mxu0 0
        %609 = vmatpush1.bf16.msra.mxu0 0
        %610 = vmatprep.subr.bf16.mxu0 0
        %611 = vmatpush1.bf16.msra.mxu0 0
        %612 = vmatprep.subr.bf16.mxu0 0
        %613 = vmatpush1.bf16.msra.mxu0 0
        %614 = vmatprep.subr.bf16.mxu0 0
        %615 = vmatpush1.bf16.msra.mxu0 0
        %616 = vmatprep.subr.bf16.mxu0 0
        %617 = vmatpush1.bf16.msra.mxu0 0
        %618 = vmatprep.subr.bf16.mxu0 0
        %619 = vmatpush1.bf16.msra.mxu0 0
        %620 = vmatprep.subr.bf16.mxu0 0
        %621 = vmatpush1.bf16.msra.mxu0 %v601
        %622 = vmatprep.subr.bf16.mxu0 0
        %623 = vmatpush1.bf16.msra.mxu0 %v600
        %624 = vmatprep.subr.bf16.mxu0 0
        %625 = vmatpush2.bf16.msra.mxu0 0
        %626 = vmatprep.subr.bf16.mxu0 0
        %627 = vmatpush2.bf16.msra.mxu0 0
        %628 = vmatprep.subr.bf16.mxu0 0
        %629 = vmatpush2.bf16.msra.mxu0 0
        %630 = vmatprep.subr.bf16.mxu0 0
        %631 = vmatpush2.bf16.msra.mxu0 0
        %632 = vmatprep.subr.bf16.mxu0 0
        %633 = vmatpush2.bf16.msra.mxu0 0
        %634 = vmatprep.subr.bf16.mxu0 0
        %635 = vmatpush2.bf16.msra.mxu0 0
        %636 = vmatprep.subr.bf16.mxu0 0
        %637 = vmatpush2.bf16.msra.mxu0 0
        %638 = vmatprep.subr.bf16.mxu0 0
        %639 = vmatpush2.bf16.msra.mxu0 0
        %640 = vmatprep.mubr.bf16.mxu0 0
        %641 = vmatmul.mubr.bf16.gmra.mxu0 %v606
        %v642 = vpop.f32.mrf.mxu0
        %v643 = vadd.f32 %v591, %v642
        %v644 = vpop.f32.mrf.mxu0
        %v645 = vpop.f32.mrf.mxu0
        %v646 = vpop.f32.mrf.mxu0
        %647 = vdwg.mxu0
        %v648 = vpack.c.bf16 %v546, %v546
        %649 = vrot.lane.b32.xlu0 %v600, 64
        %v650 = vpop.permute.xlu0 %649
        %651 = vrot.lane.b32.xlu0 %v601, 64
        %v652 = vpop.permute.xlu0 %651
        %656 = vrot.lane.b32.xlu0 %v591, 64
        %v657 = vpop.permute.xlu0 %656
        %v660 = vsel %vm604, %v648, 0
        %662 = vmatprep.subr.bf16.mxu0 0
        %663 = vmatpush1.bf16.msra.mxu0 0
        %664 = vmatprep.subr.bf16.mxu0 0
        %665 = vmatpush1.bf16.msra.mxu0 0
        %666 = vmatprep.subr.bf16.mxu0 0
        %667 = vmatpush1.bf16.msra.mxu0 0
        %668 = vmatprep.subr.bf16.mxu0 0
        %669 = vmatpush1.bf16.msra.mxu0 0
        %670 = vmatprep.subr.bf16.mxu0 0
        %671 = vmatpush1.bf16.msra.mxu0 0
        %672 = vmatprep.subr.bf16.mxu0 0
        %673 = vmatpush1.bf16.msra.mxu0 0
        %674 = vmatprep.subr.bf16.mxu0 0
        %675 = vmatpush1.bf16.msra.mxu0 %v652
        %676 = vmatprep.subr.bf16.mxu0 0
        %677 = vmatpush1.bf16.msra.mxu0 %v650
        %678 = vmatprep.subr.bf16.mxu0 0
        %679 = vmatpush2.bf16.msra.mxu0 0
        %680 = vmatprep.subr.bf16.mxu0 0
        %681 = vmatpush2.bf16.msra.mxu0 0
        %682 = vmatprep.subr.bf16.mxu0 0
        %683 = vmatpush2.bf16.msra.mxu0 0
        %684 = vmatprep.subr.bf16.mxu0 0
        %685 = vmatpush2.bf16.msra.mxu0 0
        %686 = vmatprep.subr.bf16.mxu0 0
        %687 = vmatpush2.bf16.msra.mxu0 0
        %688 = vmatprep.subr.bf16.mxu0 0
        %689 = vmatpush2.bf16.msra.mxu0 0
        %690 = vmatprep.subr.bf16.mxu0 0
        %691 = vmatpush2.bf16.msra.mxu0 0
        %692 = vmatprep.subr.bf16.mxu0 0
        %693 = vmatpush2.bf16.msra.mxu0 0
        %694 = vmatprep.mubr.bf16.mxu0 0
        %695 = vmatmul.mubr.bf16.gmra.mxu0 %v660
        %v696 = vpop.f32.mrf.mxu0
        %v697 = vadd.f32 %v657, %v696
        %v698 = vpop.f32.mrf.mxu0
        %v699 = vpop.f32.mrf.mxu0
        %v700 = vpop.f32.mrf.mxu0
        %701 = vdwg.mxu0
        %703 = vrot.lane.b32.xlu0 %v643, 120
        %v704 = vpop.permute.xlu0 %703
        %706 = vrot.lane.b32.xlu0 %v643, 112
        %v707 = vpop.permute.xlu0 %706
        %709 = vrot.lane.b32.xlu0 %v643, 104
        %v710 = vpop.permute.xlu0 %709
        %713 = vrot.lane.b32.xlu0 %v697, 120
        %v714 = vpop.permute.xlu0 %713
        %716 = vrot.lane.b32.xlu0 %v697, 112
        %v717 = vpop.permute.xlu0 %716
        %719 = vrot.lane.b32.xlu0 %v697, 104
        %v720 = vpop.permute.xlu0 %719
        %v722 = vpack.c.bf16 %v643, %v643
        %v723 = vpack.c.bf16 %v704, %v704
        %v724 = vpack.c.bf16 %v707, %v707
        %v725 = vpack.c.bf16 %v710, %v710
        %727 = vrot.lane.b32.xlu0 %v722, 96
        %v728 = vpop.permute.xlu0 %727
        %vm729 = vcmask 64512
        %v731 = vsel %vm729, %v722, 0
        %v734 = vsel %vm729, %v728, 0
        %736 = vmatprep.subr.bf16.mxu0 0
        %737 = vmatpush1.bf16.xpose.msra.mxu0 0
        %738 = vmatprep.subr.bf16.mxu0 0
        %739 = vmatpush1.bf16.xpose.msra.mxu0 0
        %740 = vmatprep.subr.bf16.mxu0 0
        %741 = vmatpush1.bf16.xpose.msra.mxu0 0
        %742 = vmatprep.subr.bf16.mxu0 0
        %743 = vmatpush1.bf16.xpose.msra.mxu0 0
        %744 = vmatprep.subr.bf16.mxu0 0
        %745 = vmatpush1.bf16.xpose.msra.mxu0 0
        %746 = vmatprep.subr.bf16.mxu0 0
        %747 = vmatpush1.bf16.xpose.msra.mxu0 0
        %748 = vmatprep.subr.bf16.mxu0 0
        %749 = vmatpush1.bf16.xpose.msra.mxu0 0
        %750 = vmatprep.subr.bf16.mxu0 0
        %751 = vmatpush1.bf16.xpose.msra.mxu0 %v734
        %752 = vmatprep.subr.bf16.mxu0 0
        %753 = vmatpush2.bf16.xpose.msra.mxu0 0
        %754 = vmatprep.subr.bf16.mxu0 0
        %755 = vmatpush2.bf16.xpose.msra.mxu0 0
        %756 = vmatprep.subr.bf16.mxu0 0
        %757 = vmatpush2.bf16.xpose.msra.mxu0 0
        %758 = vmatprep.subr.bf16.mxu0 0
        %759 = vmatpush2.bf16.xpose.msra.mxu0 0
        %760 = vmatprep.subr.bf16.mxu0 0
        %761 = vmatpush2.bf16.xpose.msra.mxu0 0
        %762 = vmatprep.subr.bf16.mxu0 0
        %763 = vmatpush2.bf16.xpose.msra.mxu0 0
        %764 = vmatprep.subr.bf16.mxu0 0
        %765 = vmatpush2.bf16.xpose.msra.mxu0 0
        %766 = vmatprep.subr.bf16.mxu0 0
        %767 = vmatpush2.bf16.xpose.msra.mxu0 0
        %768 = vmatprep.mubr.bf16.mxu0 0
        %769 = vmatmul.mubr.bf16.gmra.mxu0 %v731
        %v770 = vpop.f32.mrf.mxu0
        %v771 = vadd.f32 0.0, %v770
        %v772 = vpop.f32.mrf.mxu0
        %v773 = vpop.f32.mrf.mxu0
        %v774 = vpop.f32.mrf.mxu0
        %775 = vdwg.mxu0
        %777 = vrot.lane.b32.xlu0 %v723, 96
        %v778 = vpop.permute.xlu0 %777
        %v780 = vsel %vm729, %v723, 0
        %v783 = vsel %vm729, %v778, 0
        %785 = vmatprep.subr.bf16.mxu0 0
        %786 = vmatpush1.bf16.xpose.msra.mxu0 0
        %787 = vmatprep.subr.bf16.mxu0 0
        %788 = vmatpush1.bf16.xpose.msra.mxu0 0
        %789 = vmatprep.subr.bf16.mxu0 0
        %790 = vmatpush1.bf16.xpose.msra.mxu0 0
        %791 = vmatprep.subr.bf16.mxu0 0
        %792 = vmatpush1.bf16.xpose.msra.mxu0 0
        %793 = vmatprep.subr.bf16.mxu0 0
        %794 = vmatpush1.bf16.xpose.msra.mxu0 0
        %795 = vmatprep.subr.bf16.mxu0 0
        %796 = vmatpush1.bf16.xpose.msra.mxu0 0
        %797 = vmatprep.subr.bf16.mxu0 0
        %798 = vmatpush1.bf16.xpose.msra.mxu0 0
        %799 = vmatprep.subr.bf16.mxu0 0
        %800 = vmatpush1.bf16.xpose.msra.mxu0 %v783
        %801 = vmatprep.subr.bf16.mxu0 0
        %802 = vmatpush2.bf16.xpose.msra.mxu0 0
        %803 = vmatprep.subr.bf16.mxu0 0
        %804 = vmatpush2.bf16.xpose.msra.mxu0 0
        %805 = vmatprep.subr.bf16.mxu0 0
        %806 = vmatpush2.bf16.xpose.msra.mxu0 0
        %807 = vmatprep.subr.bf16.mxu0 0
        %808 = vmatpush2.bf16.xpose.msra.mxu0 0
        %809 = vmatprep.subr.bf16.mxu0 0
        %810 = vmatpush2.bf16.xpose.msra.mxu0 0
        %811 = vmatprep.subr.bf16.mxu0 0
        %812 = vmatpush2.bf16.xpose.msra.mxu0 0
        %813 = vmatprep.subr.bf16.mxu0 0
        %814 = vmatpush2.bf16.xpose.msra.mxu0 0
        %815 = vmatprep.subr.bf16.mxu0 0
        %816 = vmatpush2.bf16.xpose.msra.mxu0 0
        %817 = vmatprep.mubr.bf16.mxu0 0
        %818 = vmatmul.mubr.bf16.gmra.mxu0 %v780
        %v819 = vpop.f32.mrf.mxu0
        %v820 = vadd.f32 0.0, %v819
        %v821 = vpop.f32.mrf.mxu0
        %v822 = vpop.f32.mrf.mxu0
        %v823 = vpop.f32.mrf.mxu0
        %824 = vdwg.mxu0
        %826 = vrot.lane.b32.xlu0 %v724, 96
        %v827 = vpop.permute.xlu0 %826
        %v829 = vsel %vm729, %v724, 0
        %v832 = vsel %vm729, %v827, 0
        %834 = vmatprep.subr.bf16.mxu0 0
        %835 = vmatpush1.bf16.xpose.msra.mxu0 0
        %836 = vmatprep.subr.bf16.mxu0 0
        %837 = vmatpush1.bf16.xpose.msra.mxu0 0
        %838 = vmatprep.subr.bf16.mxu0 0
        %839 = vmatpush1.bf16.xpose.msra.mxu0 0
        %840 = vmatprep.subr.bf16.mxu0 0
        %841 = vmatpush1.bf16.xpose.msra.mxu0 0
        %842 = vmatprep.subr.bf16.mxu0 0
        %843 = vmatpush1.bf16.xpose.msra.mxu0 0
        %844 = vmatprep.subr.bf16.mxu0 0
        %845 = vmatpush1.bf16.xpose.msra.mxu0 0
        %846 = vmatprep.subr.bf16.mxu0 0
        %847 = vmatpush1.bf16.xpose.msra.mxu0 0
        %848 = vmatprep.subr.bf16.mxu0 0
        %849 = vmatpush1.bf16.xpose.msra.mxu0 %v832
        %850 = vmatprep.subr.bf16.mxu0 0
        %851 = vmatpush2.bf16.xpose.msra.mxu0 0
        %852 = vmatprep.subr.bf16.mxu0 0
        %853 = vmatpush2.bf16.xpose.msra.mxu0 0
        %854 = vmatprep.subr.bf16.mxu0 0
        %855 = vmatpush2.bf16.xpose.msra.mxu0 0
        %856 = vmatprep.subr.bf16.mxu0 0
        %857 = vmatpush2.bf16.xpose.msra.mxu0 0
        %858 = vmatprep.subr.bf16.mxu0 0
        %859 = vmatpush2.bf16.xpose.msra.mxu0 0
        %860 = vmatprep.subr.bf16.mxu0 0
        %861 = vmatpush2.bf16.xpose.msra.mxu0 0
        %862 = vmatprep.subr.bf16.mxu0 0
        %863 = vmatpush2.bf16.xpose.msra.mxu0 0
        %864 = vmatprep.subr.bf16.mxu0 0
        %865 = vmatpush2.bf16.xpose.msra.mxu0 0
        %866 = vmatprep.mubr.bf16.mxu0 0
        %867 = vmatmul.mubr.bf16.gmra.mxu0 %v829
        %v868 = vpop.f32.mrf.mxu0
        %v869 = vadd.f32 0.0, %v868
        %v870 = vpop.f32.mrf.mxu0
        %v871 = vpop.f32.mrf.mxu0
        %v872 = vpop.f32.mrf.mxu0
        %873 = vdwg.mxu0
        %875 = vrot.lane.b32.xlu0 %v725, 96
        %v876 = vpop.permute.xlu0 %875
        %v878 = vsel %vm729, %v725, 0
        %v881 = vsel %vm729, %v876, 0
        %883 = vmatprep.subr.bf16.mxu0 0
        %884 = vmatpush1.bf16.xpose.msra.mxu0 0
        %885 = vmatprep.subr.bf16.mxu0 0
        %886 = vmatpush1.bf16.xpose.msra.mxu0 0
        %887 = vmatprep.subr.bf16.mxu0 0
        %888 = vmatpush1.bf16.xpose.msra.mxu0 0
        %889 = vmatprep.subr.bf16.mxu0 0
        %890 = vmatpush1.bf16.xpose.msra.mxu0 0
        %891 = vmatprep.subr.bf16.mxu0 0
        %892 = vmatpush1.bf16.xpose.msra.mxu0 0
        %893 = vmatprep.subr.bf16.mxu0 0
        %894 = vmatpush1.bf16.xpose.msra.mxu0 0
        %895 = vmatprep.subr.bf16.mxu0 0
        %896 = vmatpush1.bf16.xpose.msra.mxu0 0
        %897 = vmatprep.subr.bf16.mxu0 0
        %898 = vmatpush1.bf16.xpose.msra.mxu0 %v881
        %899 = vmatprep.subr.bf16.mxu0 0
        %900 = vmatpush2.bf16.xpose.msra.mxu0 0
        %901 = vmatprep.subr.bf16.mxu0 0
        %902 = vmatpush2.bf16.xpose.msra.mxu0 0
        %903 = vmatprep.subr.bf16.mxu0 0
        %904 = vmatpush2.bf16.xpose.msra.mxu0 0
        %905 = vmatprep.subr.bf16.mxu0 0
        %906 = vmatpush2.bf16.xpose.msra.mxu0 0
        %907 = vmatprep.subr.bf16.mxu0 0
        %908 = vmatpush2.bf16.xpose.msra.mxu0 0
        %909 = vmatprep.subr.bf16.mxu0 0
        %910 = vmatpush2.bf16.xpose.msra.mxu0 0
        %911 = vmatprep.subr.bf16.mxu0 0
        %912 = vmatpush2.bf16.xpose.msra.mxu0 0
        %913 = vmatprep.subr.bf16.mxu0 0
        %914 = vmatpush2.bf16.xpose.msra.mxu0 0
        %915 = vmatprep.mubr.bf16.mxu0 0
        %916 = vmatmul.mubr.bf16.gmra.mxu0 %v878
        %v917 = vpop.f32.mrf.mxu0
        %v918 = vadd.f32 0.0, %v917
        %v919 = vpop.f32.mrf.mxu0
        %v920 = vpop.f32.mrf.mxu0
        %v921 = vpop.f32.mrf.mxu0
        %922 = vdwg.mxu0
        %v923 = vmul.f32 %v771, 0.35355338
        %v924 = vmul.f32 %v820, 0.35355338
        %v925 = vmul.f32 %v869, 0.35355338
        %v926 = vmul.f32 %v918, 0.35355338
        %v927 = vsel %vm729, %v923, -inf
        %928 = vmax.xlane.f32.xlu0 %v927
        %v929 = vpop.xlane.xlu0 %928
        %v930 = vsel %vm729, %v924, -inf
        %931 = vmax.xlane.f32.xlu0 %v930
        %v932 = vpop.xlane.xlu0 %931
        %v933 = vsel %vm729, %v925, -inf
        %934 = vmax.xlane.f32.xlu0 %v933
        %v935 = vpop.xlane.xlu0 %934
        %v936 = vsel %vm729, %v926, -inf
        %937 = vmax.xlane.f32.xlu0 %v936
        %v938 = vpop.xlane.xlu0 %937
        %v939 = vsub.f32 %v923, %v929
        %v940 = vsub.f32 %v924, %v932
        %v941 = vsub.f32 %v925, %v935
        %v942 = vsub.f32 %v926, %v938
        %v943 = vmul.f32 %v939, 1.442695
        %v944 = vpow.pop %v943
        %v945 = vmul.f32 %v940, 1.442695
        %v946 = vpow.pop %v945
        %v947 = vmul.f32 %v941, 1.442695
        %v948 = vpow.pop %v947
        %v949 = vmul.f32 %v942, 1.442695
        %v950 = vpow.pop %v949
        %v951 = vsel %vm729, %v944, 0.0
        %952 = vadd.xlane.f32.xlu0 %v951
        %v953 = vpop.xlane.xlu0 %952
        %v954 = vsel %vm729, %v946, 0.0
        %955 = vadd.xlane.f32.xlu0 %v954
        %v956 = vpop.xlane.xlu0 %955
        %v957 = vsel %vm729, %v948, 0.0
        %958 = vadd.xlane.f32.xlu0 %v957
        %v959 = vpop.xlane.xlu0 %958
        %v960 = vsel %vm729, %v950, 0.0
        %961 = vadd.xlane.f32.xlu0 %v960
        %v962 = vpop.xlane.xlu0 %961
        %v963 = vrcp.pop %v953
        %v964 = vrcp.pop %v956
        %v965 = vrcp.pop %v959
        %v966 = vrcp.pop %v962
        %v967 = vmul.f32 %v944, %v963
        %v968 = vmul.f32 %v946, %v964
        %v969 = vmul.f32 %v948, %v965
        %v970 = vmul.f32 %v950, %v966
        %v971 = vpack.c.bf16 %v967, %v967
        %v972 = vpack.c.bf16 %v968, %v968
        %v973 = vpack.c.bf16 %v969, %v969
        %v974 = vpack.c.bf16 %v970, %v970
        %v975 = vpack.c.bf16 %v697, %v697
        %v976 = vpack.c.bf16 %v714, %v714
        %v977 = vpack.c.bf16 %v717, %v717
        %v978 = vpack.c.bf16 %v720, %v720
        %v980 = vsel %vm729, %v971, 0
        %vm982 = vcmask 1043456
        %v984 = vsel %vm982, %v975, 0
        %986 = vmatprep.subr.bf16.mxu0 0
        %987 = vmatpush1.bf16.msra.mxu0 0
        %988 = vmatprep.subr.bf16.mxu0 0
        %989 = vmatpush1.bf16.msra.mxu0 0
        %990 = vmatprep.subr.bf16.mxu0 0
        %991 = vmatpush1.bf16.msra.mxu0 0
        %992 = vmatprep.subr.bf16.mxu0 0
        %993 = vmatpush1.bf16.msra.mxu0 0
        %994 = vmatprep.subr.bf16.mxu0 0
        %995 = vmatpush1.bf16.msra.mxu0 0
        %996 = vmatprep.subr.bf16.mxu0 0
        %997 = vmatpush1.bf16.msra.mxu0 0
        %998 = vmatprep.subr.bf16.mxu0 0
        %999 = vmatpush1.bf16.msra.mxu0 0
        %1000 = vmatprep.subr.bf16.mxu0 0
        %1001 = vmatpush1.bf16.msra.mxu0 %v984
        %1002 = vmatprep.subr.bf16.mxu0 0
        %1003 = vmatpush2.bf16.msra.mxu0 0
        %1004 = vmatprep.subr.bf16.mxu0 0
        %1005 = vmatpush2.bf16.msra.mxu0 0
        %1006 = vmatprep.subr.bf16.mxu0 0
        %1007 = vmatpush2.bf16.msra.mxu0 0
        %1008 = vmatprep.subr.bf16.mxu0 0
        %1009 = vmatpush2.bf16.msra.mxu0 0
        %1010 = vmatprep.subr.bf16.mxu0 0
        %1011 = vmatpush2.bf16.msra.mxu0 0
        %1012 = vmatprep.subr.bf16.mxu0 0
        %1013 = vmatpush2.bf16.msra.mxu0 0
        %1014 = vmatprep.subr.bf16.mxu0 0
        %1015 = vmatpush2.bf16.msra.mxu0 0
        %1016 = vmatprep.subr.bf16.mxu0 0
        %1017 = vmatpush2.bf16.msra.mxu0 0
        %1018 = vmatprep.mubr.bf16.mxu0 0
        %1019 = vmatmul.mubr.bf16.gmra.mxu0 %v980
        %v1020 = vpop.f32.mrf.mxu0
        %v1021 = vadd.f32 0.0, %v1020
        %v1022 = vpop.f32.mrf.mxu0
        %v1023 = vpop.f32.mrf.mxu0
        %v1024 = vpop.f32.mrf.mxu0
        %1025 = vdwg.mxu0
        %v1027 = vsel %vm729, %v972, 0
        %v1030 = vsel %vm982, %v976, 0
        %1032 = vmatprep.subr.bf16.mxu0 0
        %1033 = vmatpush1.bf16.msra.mxu0 0
        %1034 = vmatprep.subr.bf16.mxu0 0
        %1035 = vmatpush1.bf16.msra.mxu0 0
        %1036 = vmatprep.subr.bf16.mxu0 0
        %1037 = vmatpush1.bf16.msra.mxu0 0
        %1038 = vmatprep.subr.bf16.mxu0 0
        %1039 = vmatpush1.bf16.msra.mxu0 0
        %1040 = vmatprep.subr.bf16.mxu0 0
        %1041 = vmatpush1.bf16.msra.mxu0 0
        %1042 = vmatprep.subr.bf16.mxu0 0
        %1043 = vmatpush1.bf16.msra.mxu0 0
        %1044 = vmatprep.subr.bf16.mxu0 0
        %1045 = vmatpush1.bf16.msra.mxu0 0
        %1046 = vmatprep.subr.bf16.mxu0 0
        %1047 = vmatpush1.bf16.msra.mxu0 %v1030
        %1048 = vmatprep.subr.bf16.mxu0 0
        %1049 = vmatpush2.bf16.msra.mxu0 0
        %1050 = vmatprep.subr.bf16.mxu0 0
        %1051 = vmatpush2.bf16.msra.mxu0 0
        %1052 = vmatprep.subr.bf16.mxu0 0
        %1053 = vmatpush2.bf16.msra.mxu0 0
        %1054 = vmatprep.subr.bf16.mxu0 0
        %1055 = vmatpush2.bf16.msra.mxu0 0
        %1056 = vmatprep.subr.bf16.mxu0 0
        %1057 = vmatpush2.bf16.msra.mxu0 0
        %1058 = vmatprep.subr.bf16.mxu0 0
        %1059 = vmatpush2.bf16.msra.mxu0 0
        %1060 = vmatprep.subr.bf16.mxu0 0
        %1061 = vmatpush2.bf16.msra.mxu0 0
        %1062 = vmatprep.subr.bf16.mxu0 0
        %1063 = vmatpush2.bf16.msra.mxu0 0
        %1064 = vmatprep.mubr.bf16.mxu0 0
        %1065 = vmatmul.mubr.bf16.gmra.mxu0 %v1027
        %v1066 = vpop.f32.mrf.mxu0
        %v1067 = vadd.f32 0.0, %v1066
        %v1068 = vpop.f32.mrf.mxu0
        %v1069 = vpop.f32.mrf.mxu0
        %v1070 = vpop.f32.mrf.mxu0
        %1071 = vdwg.mxu0
        %v1073 = vsel %vm729, %v973, 0
        %v1076 = vsel %vm982, %v977, 0
        %1078 = vmatprep.subr.bf16.mxu0 0
        %1079 = vmatpush1.bf16.msra.mxu0 0
        %1080 = vmatprep.subr.bf16.mxu0 0
        %1081 = vmatpush1.bf16.msra.mxu0 0
        %1082 = vmatprep.subr.bf16.mxu0 0
        %1083 = vmatpush1.bf16.msra.mxu0 0
        %1084 = vmatprep.subr.bf16.mxu0 0
        %1085 = vmatpush1.bf16.msra.mxu0 0
        %1086 = vmatprep.subr.bf16.mxu0 0
        %1087 = vmatpush1.bf16.msra.mxu0 0
        %1088 = vmatprep.subr.bf16.mxu0 0
        %1089 = vmatpush1.bf16.msra.mxu0 0
        %1090 = vmatprep.subr.bf16.mxu0 0
        %1091 = vmatpush1.bf16.msra.mxu0 0
        %1092 = vmatprep.subr.bf16.mxu0 0
        %1093 = vmatpush1.bf16.msra.mxu0 %v1076
        %1094 = vmatprep.subr.bf16.mxu0 0
        %1095 = vmatpush2.bf16.msra.mxu0 0
        %1096 = vmatprep.subr.bf16.mxu0 0
        %1097 = vmatpush2.bf16.msra.mxu0 0
        %1098 = vmatprep.subr.bf16.mxu0 0
        %1099 = vmatpush2.bf16.msra.mxu0 0
        %1100 = vmatprep.subr.bf16.mxu0 0
        %1101 = vmatpush2.bf16.msra.mxu0 0
        %1102 = vmatprep.subr.bf16.mxu0 0
        %1103 = vmatpush2.bf16.msra.mxu0 0
        %1104 = vmatprep.subr.bf16.mxu0 0
        %1105 = vmatpush2.bf16.msra.mxu0 0
        %1106 = vmatprep.subr.bf16.mxu0 0
        %1107 = vmatpush2.bf16.msra.mxu0 0
        %1108 = vmatprep.subr.bf16.mxu0 0
        %1109 = vmatpush2.bf16.msra.mxu0 0
        %1110 = vmatprep.mubr.bf16.mxu0 0
        %1111 = vmatmul.mubr.bf16.gmra.mxu0 %v1073
        %v1112 = vpop.f32.mrf.mxu0
        %v1113 = vadd.f32 0.0, %v1112
        %v1114 = vpop.f32.mrf.mxu0
        %v1115 = vpop.f32.mrf.mxu0
        %v1116 = vpop.f32.mrf.mxu0
        %1117 = vdwg.mxu0
        %v1119 = vsel %vm729, %v974, 0
        %v1122 = vsel %vm982, %v978, 0
        %1124 = vmatprep.subr.bf16.mxu0 0
        %1125 = vmatpush1.bf16.msra.mxu0 0
        %1126 = vmatprep.subr.bf16.mxu0 0
        %1127 = vmatpush1.bf16.msra.mxu0 0
        %1128 = vmatprep.subr.bf16.mxu0 0
        %1129 = vmatpush1.bf16.msra.mxu0 0
        %1130 = vmatprep.subr.bf16.mxu0 0
        %1131 = vmatpush1.bf16.msra.mxu0 0
        %1132 = vmatprep.subr.bf16.mxu0 0
        %1133 = vmatpush1.bf16.msra.mxu0 0
        %1134 = vmatprep.subr.bf16.mxu0 0
        %1135 = vmatpush1.bf16.msra.mxu0 0
        %1136 = vmatprep.subr.bf16.mxu0 0
        %1137 = vmatpush1.bf16.msra.mxu0 0
        %1138 = vmatprep.subr.bf16.mxu0 0
        %1139 = vmatpush1.bf16.msra.mxu0 %v1122
        %1140 = vmatprep.subr.bf16.mxu0 0
        %1141 = vmatpush2.bf16.msra.mxu0 0
        %1142 = vmatprep.subr.bf16.mxu0 0
        %1143 = vmatpush2.bf16.msra.mxu0 0
        %1144 = vmatprep.subr.bf16.mxu0 0
        %1145 = vmatpush2.bf16.msra.mxu0 0
        %1146 = vmatprep.subr.bf16.mxu0 0
        %1147 = vmatpush2.bf16.msra.mxu0 0
        %1148 = vmatprep.subr.bf16.mxu0 0
        %1149 = vmatpush2.bf16.msra.mxu0 0
        %1150 = vmatprep.subr.bf16.mxu0 0
        %1151 = vmatpush2.bf16.msra.mxu0 0
        %1152 = vmatprep.subr.bf16.mxu0 0
        %1153 = vmatpush2.bf16.msra.mxu0 0
        %1154 = vmatprep.subr.bf16.mxu0 0
        %1155 = vmatpush2.bf16.msra.mxu0 0
        %1156 = vmatprep.mubr.bf16.mxu0 0
        %1157 = vmatmul.mubr.bf16.gmra.mxu0 %v1119
        %v1158 = vpop.f32.mrf.mxu0
        %v1159 = vadd.f32 0.0, %v1158
        %v1160 = vpop.f32.mrf.mxu0
        %v1161 = vpop.f32.mrf.mxu0
        %v1162 = vpop.f32.mrf.mxu0
        %1163 = vdwg.mxu0
        %1165 = vrot.lane.b32.xlu0 %v1067, 8
        %v1166 = vpop.permute.xlu0 %1165
        %1169 = vrot.lane.b32.xlu0 %v1113, 16
        %v1170 = vpop.permute.xlu0 %1169
        %1173 = vrot.lane.b32.xlu0 %v1159, 24
        %v1174 = vpop.permute.xlu0 %1173
        %v1176 = vsel %vm729, %v1021, %v1166
        %vm1177 = vcmask 130048
        %v1178 = vsel %vm1177, %v1176, %v1170
        %vm1179 = vcmask 195584
        %v1180 = vsel %vm1179, %v1178, %v1174
        %v1181 = vpack.c.bf16 %v1180, %v1180
        %v1182 = vlaneseq
        %v1183 = vshrl.u32 %v1182, 7
        %v1184 = vsub.s32 0, %v1183
        %v1185 = vrot.slane %v584, %v1184
        %v1190 = vunpack.c.l.b16 %v563
        %v1191 = vunpack.c.l.b16 %v564
        %v1192 = vunpack.c.l.b16 %v565
        %v1193 = vunpack.c.l.b16 %v566
        %v1194 = vpack.c.b16 %v1191, %v1190
        %v1195 = vpack.c.b16 %v1193, %v1192
        %v1199 = vsel %vm604, %v1181, 0
        %1201 = vmatprep.subr.bf16.mxu0 0
        %1202 = vmatpush1.bf16.msra.mxu0 0
        %1203 = vmatprep.subr.bf16.mxu0 0
        %1204 = vmatpush1.bf16.msra.mxu0 0
        %1205 = vmatprep.subr.bf16.mxu0 0
        %1206 = vmatpush1.bf16.msra.mxu0 0
        %1207 = vmatprep.subr.bf16.mxu0 0
        %1208 = vmatpush1.bf16.msra.mxu0 0
        %1209 = vmatprep.subr.bf16.mxu0 0
        %1210 = vmatpush1.bf16.msra.mxu0 0
        %1211 = vmatprep.subr.bf16.mxu0 0
        %1212 = vmatpush1.bf16.msra.mxu0 0
        %1213 = vmatprep.subr.bf16.mxu0 0
        %1214 = vmatpush1.bf16.msra.mxu0 %v1195
        %1215 = vmatprep.subr.bf16.mxu0 0
        %1216 = vmatpush1.bf16.msra.mxu0 %v1194
        %1217 = vmatprep.subr.bf16.mxu0 0
        %1218 = vmatpush2.bf16.msra.mxu0 0
        %1219 = vmatprep.subr.bf16.mxu0 0
        %1220 = vmatpush2.bf16.msra.mxu0 0
        %1221 = vmatprep.subr.bf16.mxu0 0
        %1222 = vmatpush2.bf16.msra.mxu0 0
        %1223 = vmatprep.subr.bf16.mxu0 0
        %1224 = vmatpush2.bf16.msra.mxu0 0
        %1225 = vmatprep.subr.bf16.mxu0 0
        %1226 = vmatpush2.bf16.msra.mxu0 0
        %1227 = vmatprep.subr.bf16.mxu0 0
        %1228 = vmatpush2.bf16.msra.mxu0 0
        %1229 = vmatprep.subr.bf16.mxu0 0
        %1230 = vmatpush2.bf16.msra.mxu0 0
        %1231 = vmatprep.subr.bf16.mxu0 0
        %1232 = vmatpush2.bf16.msra.mxu0 0
        %1233 = vmatprep.mubr.bf16.mxu0 0
        %1234 = vmatmul.mubr.bf16.gmra.mxu0 %v1199
        %v1235 = vpop.f32.mrf.mxu0
        %v1236 = vadd.f32 %v1185, %v1235
        %v1237 = vpop.f32.mrf.mxu0
        %v1238 = vpop.f32.mrf.mxu0
        %v1239 = vpop.f32.mrf.mxu0
        %1240 = vdwg.mxu0
        %v1241 = vadd.f32 %v546, %v1236
        %v1242 = vsel %vm604, %v1241, 0.0
        %1243 = vadd.xlane.f32.xlu0 %v1242
        %v1244 = vpop.xlane.xlu0 %1243
        %v1245 = vrcp.pop 32.0
        %v1246 = vmul.f32 %v1244, %v1245
        %v1247 = vsub.f32 %v1241, %v1246
        %v1248 = vmul.f32 %v1247, %v1247
        %v1249 = vsel %vm604, %v1248, 0.0
        %1250 = vadd.xlane.f32.xlu0 %v1249
        %v1251 = vpop.xlane.xlu0 %1250
        %v1252 = vmul.f32 %v1251, %v1245
        %v1253 = vadd.f32 %v1252, 1e-05
        %v1254 = vrsqrt.pop %v1253
        %v1255 = vmul.f32 %v1247, %v1254
        %v1256 = vlaneseq
        %v1257 = vshrl.u32 %v1256, 7
        %v1258 = vsub.s32 2, %v1257
        %v1259 = vrot.slane %v584, %v1258
        %v1260 = vmul.f32 %v1255, %v1259
        %v1261 = vlaneseq
        %v1262 = vshrl.u32 %v1261, 7
        %v1263 = vsub.s32 3, %v1262
        %v1264 = vrot.slane %v584, %v1263
        %v1265 = vadd.f32 %v1260, %v1264
        %v1266 = vadd.f32 %v1265, %v547
        %v1267 = vpack.c.bf16 %v1266, %v1266
        %v1268 = vlaneseq
        %v1269 = vshrl.u32 %v1268, 7
        %v1270 = vsub.s32 1, %v1269
        %v1271 = vrot.slane %v562, %v1270
        %v1276 = vunpack.c.l.b16 %v558
        %v1277 = vunpack.c.l.b16 %v559
        %v1278 = vunpack.c.l.b16 %v560
        %v1279 = vunpack.c.l.b16 %v561
        %v1280 = vpack.c.b16 %v1277, %v1276
        %v1281 = vpack.c.b16 %v1279, %v1278
        %v1285 = vsel %vm604, %v1267, 0
        %1287 = vmatprep.subr.bf16.mxu0 0
        %1288 = vmatpush1.bf16.msra.mxu0 0
        %1289 = vmatprep.subr.bf16.mxu0 0
        %1290 = vmatpush1.bf16.msra.mxu0 0
        %1291 = vmatprep.subr.bf16.mxu0 0
        %1292 = vmatpush1.bf16.msra.mxu0 0
        %1293 = vmatprep.subr.bf16.mxu0 0
        %1294 = vmatpush1.bf16.msra.mxu0 0
        %1295 = vmatprep.subr.bf16.mxu0 0
        %1296 = vmatpush1.bf16.msra.mxu0 0
        %1297 = vmatprep.subr.bf16.mxu0 0
        %1298 = vmatpush1.bf16.msra.mxu0 0
        %1299 = vmatprep.subr.bf16.mxu0 0
        %1300 = vmatpush1.bf16.msra.mxu0 %v1281
        %1301 = vmatprep.subr.bf16.mxu0 0
        %1302 = vmatpush1.bf16.msra.mxu0 %v1280
        %1303 = vmatprep.subr.bf16.mxu0 0
        %1304 = vmatpush2.bf16.msra.mxu0 0
        %1305 = vmatprep.subr.bf16.mxu0 0
        %1306 = vmatpush2.bf16.msra.mxu0 0
        %1307 = vmatprep.subr.bf16.mxu0 0
        %1308 = vmatpush2.bf16.msra.mxu0 0
        %1309 = vmatprep.subr.bf16.mxu0 0
        %1310 = vmatpush2.bf16.msra.mxu0 0
        %1311 = vmatprep.subr.bf16.mxu0 0
        %1312 = vmatpush2.bf16.msra.mxu0 0
        %1313 = vmatprep.subr.bf16.mxu0 0
        %1314 = vmatpush2.bf16.msra.mxu0 0
        %1315 = vmatprep.subr.bf16.mxu0 0
        %1316 = vmatpush2.bf16.msra.mxu0 0
        %1317 = vmatprep.subr.bf16.mxu0 0
        %1318 = vmatpush2.bf16.msra.mxu0 0
        %1319 = vmatprep.mubr.bf16.mxu0 0
        %1320 = vmatmul.mubr.bf16.gmra.mxu0 %v1285
        %v1321 = vpop.f32.mrf.mxu0
        %v1322 = vadd.f32 %v1271, %v1321
        %v1323 = vpop.f32.mrf.mxu0
        %v1324 = vpop.f32.mrf.mxu0
        %v1325 = vpop.f32.mrf.mxu0
        %1326 = vdwg.mxu0
        %v1327 = vpack.c.bf16 %v553, %v552
        %1328 = vrot.lane.b32.xlu0 %v1280, 96
        %v1329 = vpop.permute.xlu0 %1328
        %1330 = vrot.lane.b32.xlu0 %v1281, 96
        %v1331 = vpop.permute.xlu0 %1330
        %1335 = vrot.lane.b32.xlu0 %v1271, 96
        %v1336 = vpop.permute.xlu0 %1335
        %v1339 = vsel %vm604, %v1327, 0
        %1341 = vmatprep.subr.bf16.mxu0 0
        %1342 = vmatpush1.bf16.msra.mxu0 0
        %1343 = vmatprep.subr.bf16.mxu0 0
        %1344 = vmatpush1.bf16.msra.mxu0 0
        %1345 = vmatprep.subr.bf16.mxu0 0
        %1346 = vmatpush1.bf16.msra.mxu0 0
        %1347 = vmatprep.subr.bf16.mxu0 0
        %1348 = vmatpush1.bf16.msra.mxu0 0
        %1349 = vmatprep.subr.bf16.mxu0 0
        %1350 = vmatpush1.bf16.msra.mxu0 0
        %1351 = vmatprep.subr.bf16.mxu0 0
        %1352 = vmatpush1.bf16.msra.mxu0 0
        %1353 = vmatprep.subr.bf16.mxu0 0
        %1354 = vmatpush1.bf16.msra.mxu0 %v1331
        %1355 = vmatprep.subr.bf16.mxu0 0
        %1356 = vmatpush1.bf16.msra.mxu0 %v1329
        %1357 = vmatprep.subr.bf16.mxu0 0
        %1358 = vmatpush2.bf16.msra.mxu0 0
        %1359 = vmatprep.subr.bf16.mxu0 0
        %1360 = vmatpush2.bf16.msra.mxu0 0
        %1361 = vmatprep.subr.bf16.mxu0 0
        %1362 = vmatpush2.bf16.msra.mxu0 0
        %1363 = vmatprep.subr.bf16.mxu0 0
        %1364 = vmatpush2.bf16.msra.mxu0 0
        %1365 = vmatprep.subr.bf16.mxu0 0
        %1366 = vmatpush2.bf16.msra.mxu0 0
        %1367 = vmatprep.subr.bf16.mxu0 0
        %1368 = vmatpush2.bf16.msra.mxu0 0
        %1369 = vmatprep.subr.bf16.mxu0 0
        %1370 = vmatpush2.bf16.msra.mxu0 0
        %1371 = vmatprep.subr.bf16.mxu0 0
        %1372 = vmatpush2.bf16.msra.mxu0 0
        %1373 = vmatprep.mubr.bf16.mxu0 0
        %1374 = vmatmul.mubr.bf16.gmra.mxu0 %v1339
        %v1375 = vpop.f32.mrf.mxu0
        %v1376 = vadd.f32 %v1336, %v1375
        %v1377 = vpop.f32.mrf.mxu0
        %v1378 = vpop.f32.mrf.mxu0
        %v1379 = vadd.f32 %v1336, %v1378
        %v1380 = vpop.f32.mrf.mxu0
        %1381 = vdwg.mxu0
        %v1382 = vpack.c.bf16 %v549, %v548
        %1383 = vrot.lane.b32.xlu0 %v1280, 64
        %v1384 = vpop.permute.xlu0 %1383
        %1385 = vrot.lane.b32.xlu0 %v1281, 64
        %v1386 = vpop.permute.xlu0 %1385
        %1389 = vrot.lane.b32.xlu0 %v1271, 64
        %v1390 = vpop.permute.xlu0 %1389
        %v1393 = vsel %vm604, %v1382, 0
        %1395 = vmatprep.subr.bf16.mxu0 0
        %1396 = vmatpush1.bf16.msra.mxu0 0
        %1397 = vmatprep.subr.bf16.mxu0 0
        %1398 = vmatpush1.bf16.msra.mxu0 0
        %1399 = vmatprep.subr.bf16.mxu0 0
        %1400 = vmatpush1.bf16.msra.mxu0 0
        %1401 = vmatprep.subr.bf16.mxu0 0
        %1402 = vmatpush1.bf16.msra.mxu0 0
        %1403 = vmatprep.subr.bf16.mxu0 0
        %1404 = vmatpush1.bf16.msra.mxu0 0
        %1405 = vmatprep.subr.bf16.mxu0 0
        %1406 = vmatpush1.bf16.msra.mxu0 0
        %1407 = vmatprep.subr.bf16.mxu0 0
        %1408 = vmatpush1.bf16.msra.mxu0 %v1386
        %1409 = vmatprep.subr.bf16.mxu0 0
        %1410 = vmatpush1.bf16.msra.mxu0 %v1384
        %1411 = vmatprep.subr.bf16.mxu0 0
        %1412 = vmatpush2.bf16.msra.mxu0 0
        %1413 = vmatprep.subr.bf16.mxu0 0
        %1414 = vmatpush2.bf16.msra.mxu0 0
        %1415 = vmatprep.subr.bf16.mxu0 0
        %1416 = vmatpush2.bf16.msra.mxu0 0
        %1417 = vmatprep.subr.bf16.mxu0 0
        %1418 = vmatpush2.bf16.msra.mxu0 0
        %1419 = vmatprep.subr.bf16.mxu0 0
        %1420 = vmatpush2.bf16.msra.mxu0 0
        %1421 = vmatprep.subr.bf16.mxu0 0
        %1422 = vmatpush2.bf16.msra.mxu0 0
        %1423 = vmatprep.subr.bf16.mxu0 0
        %1424 = vmatpush2.bf16.msra.mxu0 0
        %1425 = vmatprep.subr.bf16.mxu0 0
        %1426 = vmatpush2.bf16.msra.mxu0 0
        %1427 = vmatprep.mubr.bf16.mxu0 0
        %1428 = vmatmul.mubr.bf16.gmra.mxu0 %v1393
        %v1429 = vpop.f32.mrf.mxu0
        %v1430 = vadd.f32 %v1390, %v1429
        %v1431 = vpop.f32.mrf.mxu0
        %v1432 = vpop.f32.mrf.mxu0
        %v1433 = vadd.f32 %v1390, %v1432
        %v1434 = vpop.f32.mrf.mxu0
        %1435 = vdwg.mxu0
        %1437 = vrot.lane.b32.xlu0 %v1322, 120
        %v1438 = vpop.permute.xlu0 %1437
        %1440 = vrot.lane.b32.xlu0 %v1322, 112
        %v1441 = vpop.permute.xlu0 %1440
        %1443 = vrot.lane.b32.xlu0 %v1322, 104
        %v1444 = vpop.permute.xlu0 %1443
        %1448 = vrot.lane.b32.xlu0 %v1376, 120
        %v1449 = vpop.permute.xlu0 %1448
        %1450 = vrot.lane.b32.xlu0 %v1379, 120
        %v1451 = vpop.permute.xlu0 %1450
        %1454 = vrot.lane.b32.xlu0 %v1376, 112
        %v1455 = vpop.permute.xlu0 %1454
        %1456 = vrot.lane.b32.xlu0 %v1379, 112
        %v1457 = vpop.permute.xlu0 %1456
        %1460 = vrot.lane.b32.xlu0 %v1376, 104
        %v1461 = vpop.permute.xlu0 %1460
        %1462 = vrot.lane.b32.xlu0 %v1379, 104
        %v1463 = vpop.permute.xlu0 %1462
        %1468 = vrot.lane.b32.xlu0 %v1430, 120
        %v1469 = vpop.permute.xlu0 %1468
        %1470 = vrot.lane.b32.xlu0 %v1433, 120
        %v1471 = vpop.permute.xlu0 %1470
        %1474 = vrot.lane.b32.xlu0 %v1430, 112
        %v1475 = vpop.permute.xlu0 %1474
        %1476 = vrot.lane.b32.xlu0 %v1433, 112
        %v1477 = vpop.permute.xlu0 %1476
        %1480 = vrot.lane.b32.xlu0 %v1430, 104
        %v1481 = vpop.permute.xlu0 %1480
        %1482 = vrot.lane.b32.xlu0 %v1433, 104
        %v1483 = vpop.permute.xlu0 %1482
        %v1486 = vpack.c.bf16 %v1322, %v1322
        %v1487 = vpack.c.bf16 %v1438, %v1438
        %v1488 = vpack.c.bf16 %v1441, %v1441
        %v1489 = vpack.c.bf16 %v1444, %v1444
        %v1490 = vpack.c.bf16 %v1379, %v1376
        %v1491 = vpack.c.bf16 %v1451, %v1449
        %v1492 = vpack.c.bf16 %v1457, %v1455
        %v1493 = vpack.c.bf16 %v1463, %v1461
        %v1495 = vsel %vm729, %v1486, 0
        %v1498 = vsel %vm729, %v1490, 0
        %1500 = vmatprep.subr.bf16.mxu0 0
        %1501 = vmatpush1.bf16.xpose.msra.mxu0 0
        %1502 = vmatprep.subr.bf16.mxu0 0
        %1503 = vmatpush1.bf16.xpose.msra.mxu0 0
        %1504 = vmatprep.subr.bf16.mxu0 0
        %1505 = vmatpush1.bf16.xpose.msra.mxu0 0
        %1506 = vmatprep.subr.bf16.mxu0 0
        %1507 = vmatpush1.bf16.xpose.msra.mxu0 0
        %1508 = vmatprep.subr.bf16.mxu0 0
        %1509 = vmatpush1.bf16.xpose.msra.mxu0 0
        %1510 = vmatprep.subr.bf16.mxu0 0
        %1511 = vmatpush1.bf16.xpose.msra.mxu0 0
        %1512 = vmatprep.subr.bf16.mxu0 0
        %1513 = vmatpush1.bf16.xpose.msra.mxu0 0
        %1514 = vmatprep.subr.bf16.mxu0 0
        %1515 = vmatpush1.bf16.xpose.msra.mxu0 %v1498
        %1516 = vmatprep.subr.bf16.mxu0 0
        %1517 = vmatpush2.bf16.xpose.msra.mxu0 0
        %1518 = vmatprep.subr.bf16.mxu0 0
        %1519 = vmatpush2.bf16.xpose.msra.mxu0 0
        %1520 = vmatprep.subr.bf16.mxu0 0
        %1521 = vmatpush2.bf16.xpose.msra.mxu0 0
        %1522 = vmatprep.subr.bf16.mxu0 0
        %1523 = vmatpush2.bf16.xpose.msra.mxu0 0
        %1524 = vmatprep.subr.bf16.mxu0 0
        %1525 = vmatpush2.bf16.xpose.msra.mxu0 0
        %1526 = vmatprep.subr.bf16.mxu0 0
        %1527 = vmatpush2.bf16.xpose.msra.mxu0 0
        %1528 = vmatprep.subr.bf16.mxu0 0
        %1529 = vmatpush2.bf16.xpose.msra.mxu0 0
        %1530 = vmatprep.subr.bf16.mxu0 0
        %1531 = vmatpush2.bf16.xpose.msra.mxu0 0
        %1532 = vmatprep.mubr.bf16.mxu0 0
        %1533 = vmatmul.mubr.bf16.gmra.mxu0 %v1495
        %v1534 = vpop.f32.mrf.mxu0
        %v1535 = vadd.f32 0.0, %v1534
        %v1536 = vpop.f32.mrf.mxu0
        %v1537 = vpop.f32.mrf.mxu0
        %v1538 = vpop.f32.mrf.mxu0
        %1539 = vdwg.mxu0
        %v1541 = vsel %vm729, %v1487, 0
        %v1544 = vsel %vm729, %v1491, 0
        %1546 = vmatprep.subr.bf16.mxu0 0
        %1547 = vmatpush1.bf16.xpose.msra.mxu0 0
        %1548 = vmatprep.subr.bf16.mxu0 0
        %1549 = vmatpush1.bf16.xpose.msra.mxu0 0
        %1550 = vmatprep.subr.bf16.mxu0 0
        %1551 = vmatpush1.bf16.xpose.msra.mxu0 0
        %1552 = vmatprep.subr.bf16.mxu0 0
        %1553 = vmatpush1.bf16.xpose.msra.mxu0 0
        %1554 = vmatprep.subr.bf16.mxu0 0
        %1555 = vmatpush1.bf16.xpose.msra.mxu0 0
        %1556 = vmatprep.subr.bf16.mxu0 0
        %1557 = vmatpush1.bf16.xpose.msra.mxu0 0
        %1558 = vmatprep.subr.bf16.mxu0 0
        %1559 = vmatpush1.bf16.xpose.msra.mxu0 0
        %1560 = vmatprep.subr.bf16.mxu0 0
        %1561 = vmatpush1.bf16.xpose.msra.mxu0 %v1544
        %1562 = vmatprep.subr.bf16.mxu0 0
        %1563 = vmatpush2.bf16.xpose.msra.mxu0 0
        %1564 = vmatprep.subr.bf16.mxu0 0
        %1565 = vmatpush2.bf16.xpose.msra.mxu0 0
        %1566 = vmatprep.subr.bf16.mxu0 0
        %1567 = vmatpush2.bf16.xpose.msra.mxu0 0
        %1568 = vmatprep.subr.bf16.mxu0 0
        %1569 = vmatpush2.bf16.xpose.msra.mxu0 0
        %1570 = vmatprep.subr.bf16.mxu0 0
        %1571 = vmatpush2.bf16.xpose.msra.mxu0 0
        %1572 = vmatprep.subr.bf16.mxu0 0
        %1573 = vmatpush2.bf16.xpose.msra.mxu0 0
        %1574 = vmatprep.subr.bf16.mxu0 0
        %1575 = vmatpush2.bf16.xpose.msra.mxu0 0
        %1576 = vmatprep.subr.bf16.mxu0 0
        %1577 = vmatpush2.bf16.xpose.msra.mxu0 0
        %1578 = vmatprep.mubr.bf16.mxu0 0
        %1579 = vmatmul.mubr.bf16.gmra.mxu0 %v1541
        %v1580 = vpop.f32.mrf.mxu0
        %v1581 = vadd.f32 0.0, %v1580
        %v1582 = vpop.f32.mrf.mxu0
        %v1583 = vpop.f32.mrf.mxu0
        %v1584 = vpop.f32.mrf.mxu0
        %1585 = vdwg.mxu0
        %v1587 = vsel %vm729, %v1488, 0
        %v1590 = vsel %vm729, %v1492, 0
        %1592 = vmatprep.subr.bf16.mxu0 0
        %1593 = vmatpush1.bf16.xpose.msra.mxu0 0
        %1594 = vmatprep.subr.bf16.mxu0 0
        %1595 = vmatpush1.bf16.xpose.msra.mxu0 0
        %1596 = vmatprep.subr.bf16.mxu0 0
        %1597 = vmatpush1.bf16.xpose.msra.mxu0 0
        %1598 = vmatprep.subr.bf16.mxu0 0
        %1599 = vmatpush1.bf16.xpose.msra.mxu0 0
        %1600 = vmatprep.subr.bf16.mxu0 0
        %1601 = vmatpush1.bf16.xpose.msra.mxu0 0
        %1602 = vmatprep.subr.bf16.mxu0 0
        %1603 = vmatpush1.bf16.xpose.msra.mxu0 0
        %1604 = vmatprep.subr.bf16.mxu0 0
        %1605 = vmatpush1.bf16.xpose.msra.mxu0 0
        %1606 = vmatprep.subr.bf16.mxu0 0
        %1607 = vmatpush1.bf16.xpose.msra.mxu0 %v1590
        %1608 = vmatprep.subr.bf16.mxu0 0
        %1609 = vmatpush2.bf16.xpose.msra.mxu0 0
        %1610 = vmatprep.subr.bf16.mxu0 0
        %1611 = vmatpush2.bf16.xpose.msra.mxu0 0
        %1612 = vmatprep.subr.bf16.mxu0 0
        %1613 = vmatpush2.bf16.xpose.msra.mxu0 0
        %1614 = vmatprep.subr.bf16.mxu0 0
        %1615 = vmatpush2.bf16.xpose.msra.mxu0 0
        %1616 = vmatprep.subr.bf16.mxu0 0
        %1617 = vmatpush2.bf16.xpose.msra.mxu0 0
        %1618 = vmatprep.subr.bf16.mxu0 0
        %1619 = vmatpush2.bf16.xpose.msra.mxu0 0
        %1620 = vmatprep.subr.bf16.mxu0 0
        %1621 = vmatpush2.bf16.xpose.msra.mxu0 0
        %1622 = vmatprep.subr.bf16.mxu0 0
        %1623 = vmatpush2.bf16.xpose.msra.mxu0 0
        %1624 = vmatprep.mubr.bf16.mxu0 0
        %1625 = vmatmul.mubr.bf16.gmra.mxu0 %v1587
        %v1626 = vpop.f32.mrf.mxu0
        %v1627 = vadd.f32 0.0, %v1626
        %v1628 = vpop.f32.mrf.mxu0
        %v1629 = vpop.f32.mrf.mxu0
        %v1630 = vpop.f32.mrf.mxu0
        %1631 = vdwg.mxu0
        %v1633 = vsel %vm729, %v1489, 0
        %v1636 = vsel %vm729, %v1493, 0
        %1638 = vmatprep.subr.bf16.mxu0 0
        %1639 = vmatpush1.bf16.xpose.msra.mxu0 0
        %1640 = vmatprep.subr.bf16.mxu0 0
        %1641 = vmatpush1.bf16.xpose.msra.mxu0 0
        %1642 = vmatprep.subr.bf16.mxu0 0
        %1643 = vmatpush1.bf16.xpose.msra.mxu0 0
        %1644 = vmatprep.subr.bf16.mxu0 0
        %1645 = vmatpush1.bf16.xpose.msra.mxu0 0
        %1646 = vmatprep.subr.bf16.mxu0 0
        %1647 = vmatpush1.bf16.xpose.msra.mxu0 0
        %1648 = vmatprep.subr.bf16.mxu0 0
        %1649 = vmatpush1.bf16.xpose.msra.mxu0 0
        %1650 = vmatprep.subr.bf16.mxu0 0
        %1651 = vmatpush1.bf16.xpose.msra.mxu0 0
        %1652 = vmatprep.subr.bf16.mxu0 0
        %1653 = vmatpush1.bf16.xpose.msra.mxu0 %v1636
        %1654 = vmatprep.subr.bf16.mxu0 0
        %1655 = vmatpush2.bf16.xpose.msra.mxu0 0
        %1656 = vmatprep.subr.bf16.mxu0 0
        %1657 = vmatpush2.bf16.xpose.msra.mxu0 0
        %1658 = vmatprep.subr.bf16.mxu0 0
        %1659 = vmatpush2.bf16.xpose.msra.mxu0 0
        %1660 = vmatprep.subr.bf16.mxu0 0
        %1661 = vmatpush2.bf16.xpose.msra.mxu0 0
        %1662 = vmatprep.subr.bf16.mxu0 0
        %1663 = vmatpush2.bf16.xpose.msra.mxu0 0
        %1664 = vmatprep.subr.bf16.mxu0 0
        %1665 = vmatpush2.bf16.xpose.msra.mxu0 0
        %1666 = vmatprep.subr.bf16.mxu0 0
        %1667 = vmatpush2.bf16.xpose.msra.mxu0 0
        %1668 = vmatprep.subr.bf16.mxu0 0
        %1669 = vmatpush2.bf16.xpose.msra.mxu0 0
        %1670 = vmatprep.mubr.bf16.mxu0 0
        %1671 = vmatmul.mubr.bf16.gmra.mxu0 %v1633
        %v1672 = vpop.f32.mrf.mxu0
        %v1673 = vadd.f32 0.0, %v1672
        %v1674 = vpop.f32.mrf.mxu0
        %v1675 = vpop.f32.mrf.mxu0
        %v1676 = vpop.f32.mrf.mxu0
        %1677 = vdwg.mxu0
        %v1678 = vmul.f32 %v1535, 0.35355338
        %v1679 = vmul.f32 %v1581, 0.35355338
        %v1680 = vmul.f32 %v1627, 0.35355338
        %v1681 = vmul.f32 %v1673, 0.35355338
        %v1682 = vsel %vm1177, %v1678, -inf
        %1683 = vmax.xlane.f32.xlu0 %v1682
        %v1684 = vpop.xlane.xlu0 %1683
        %v1685 = vsel %vm1177, %v1679, -inf
        %1686 = vmax.xlane.f32.xlu0 %v1685
        %v1687 = vpop.xlane.xlu0 %1686
        %v1688 = vsel %vm1177, %v1680, -inf
        %1689 = vmax.xlane.f32.xlu0 %v1688
        %v1690 = vpop.xlane.xlu0 %1689
        %v1691 = vsel %vm1177, %v1681, -inf
        %1692 = vmax.xlane.f32.xlu0 %v1691
        %v1693 = vpop.xlane.xlu0 %1692
        %v1694 = vsub.f32 %v1678, %v1684
        %v1695 = vsub.f32 %v1679, %v1687
        %v1696 = vsub.f32 %v1680, %v1690
        %v1697 = vsub.f32 %v1681, %v1693
        %v1698 = vmul.f32 %v1694, 1.442695
        %v1699 = vpow.pop %v1698
        %v1700 = vmul.f32 %v1695, 1.442695
        %v1701 = vpow.pop %v1700
        %v1702 = vmul.f32 %v1696, 1.442695
        %v1703 = vpow.pop %v1702
        %v1704 = vmul.f32 %v1697, 1.442695
        %v1705 = vpow.pop %v1704
        %v1706 = vsel %vm1177, %v1699, 0.0
        %1707 = vadd.xlane.f32.xlu0 %v1706
        %v1708 = vpop.xlane.xlu0 %1707
        %v1709 = vsel %vm1177, %v1701, 0.0
        %1710 = vadd.xlane.f32.xlu0 %v1709
        %v1711 = vpop.xlane.xlu0 %1710
        %v1712 = vsel %vm1177, %v1703, 0.0
        %1713 = vadd.xlane.f32.xlu0 %v1712
        %v1714 = vpop.xlane.xlu0 %1713
        %v1715 = vsel %vm1177, %v1705, 0.0
        %1716 = vadd.xlane.f32.xlu0 %v1715
        %v1717 = vpop.xlane.xlu0 %1716
        %v1718 = vrcp.pop %v1708
        %v1719 = vrcp.pop %v1711
        %v1720 = vrcp.pop %v1714
        %v1721 = vrcp.pop %v1717
        %v1722 = vmul.f32 %v1699, %v1718
        %v1723 = vmul.f32 %v1701, %v1719
        %v1724 = vmul.f32 %v1703, %v1720
        %v1725 = vmul.f32 %v1705, %v1721
        %v1726 = vpack.c.bf16 %v1722, %v1722
        %v1727 = vpack.c.bf16 %v1723, %v1723
        %v1728 = vpack.c.bf16 %v1724, %v1724
        %v1729 = vpack.c.bf16 %v1725, %v1725
        %v1730 = vpack.c.bf16 %v1433, %v1430
        %v1731 = vpack.c.bf16 %v1471, %v1469
        %v1732 = vpack.c.bf16 %v1477, %v1475
        %v1733 = vpack.c.bf16 %v1483, %v1481
        %v1735 = vsel %vm1177, %v1726, 0
        %1737 = vmatprep.subr.bf16.mxu0 0
        %1738 = vmatpush1.bf16.msra.mxu0 0
        %1739 = vmatprep.subr.bf16.mxu0 0
        %1740 = vmatpush1.bf16.msra.mxu0 0
        %1741 = vmatprep.subr.bf16.mxu0 0
        %1742 = vmatpush1.bf16.msra.mxu0 0
        %1743 = vmatprep.subr.bf16.mxu0 0
        %1744 = vmatpush1.bf16.msra.mxu0 0
        %1745 = vmatprep.subr.bf16.mxu0 0
        %1746 = vmatpush1.bf16.msra.mxu0 0
        %1747 = vmatprep.subr.bf16.mxu0 0
        %1748 = vmatpush1.bf16.msra.mxu0 0
        %1749 = vmatprep.subr.bf16.mxu0 0
        %1750 = vmatpush1.bf16.msra.mxu0 0
        %1751 = vmatprep.subr.bf16.mxu0 0
        %1752 = vmatpush1.bf16.msra.mxu0 %v1730
        %1753 = vmatprep.subr.bf16.mxu0 0
        %1754 = vmatpush2.bf16.msra.mxu0 0
        %1755 = vmatprep.subr.bf16.mxu0 0
        %1756 = vmatpush2.bf16.msra.mxu0 0
        %1757 = vmatprep.subr.bf16.mxu0 0
        %1758 = vmatpush2.bf16.msra.mxu0 0
        %1759 = vmatprep.subr.bf16.mxu0 0
        %1760 = vmatpush2.bf16.msra.mxu0 0
        %1761 = vmatprep.subr.bf16.mxu0 0
        %1762 = vmatpush2.bf16.msra.mxu0 0
        %1763 = vmatprep.subr.bf16.mxu0 0
        %1764 = vmatpush2.bf16.msra.mxu0 0
        %1765 = vmatprep.subr.bf16.mxu0 0
        %1766 = vmatpush2.bf16.msra.mxu0 0
        %1767 = vmatprep.subr.bf16.mxu0 0
        %1768 = vmatpush2.bf16.msra.mxu0 0
        %1769 = vmatprep.mubr.bf16.mxu0 0
        %1770 = vmatmul.mubr.bf16.gmra.mxu0 %v1735
        %v1771 = vpop.f32.mrf.mxu0
        %v1772 = vadd.f32 0.0, %v1771
        %v1773 = vpop.f32.mrf.mxu0
        %v1774 = vpop.f32.mrf.mxu0
        %v1775 = vpop.f32.mrf.mxu0
        %1776 = vdwg.mxu0
        %v1778 = vsel %vm1177, %v1727, 0
        %1780 = vmatprep.subr.bf16.mxu0 0
        %1781 = vmatpush1.bf16.msra.mxu0 0
        %1782 = vmatprep.subr.bf16.mxu0 0
        %1783 = vmatpush1.bf16.msra.mxu0 0
        %1784 = vmatprep.subr.bf16.mxu0 0
        %1785 = vmatpush1.bf16.msra.mxu0 0
        %1786 = vmatprep.subr.bf16.mxu0 0
        %1787 = vmatpush1.bf16.msra.mxu0 0
        %1788 = vmatprep.subr.bf16.mxu0 0
        %1789 = vmatpush1.bf16.msra.mxu0 0
        %1790 = vmatprep.subr.bf16.mxu0 0
        %1791 = vmatpush1.bf16.msra.mxu0 0
        %1792 = vmatprep.subr.bf16.mxu0 0
        %1793 = vmatpush1.bf16.msra.mxu0 0
        %1794 = vmatprep.subr.bf16.mxu0 0
        %1795 = vmatpush1.bf16.msra.mxu0 %v1731
        %1796 = vmatprep.subr.bf16.mxu0 0
        %1797 = vmatpush2.bf16.msra.mxu0 0
        %1798 = vmatprep.subr.bf16.mxu0 0
        %1799 = vmatpush2.bf16.msra.mxu0 0
        %1800 = vmatprep.subr.bf16.mxu0 0
        %1801 = vmatpush2.bf16.msra.mxu0 0
        %1802 = vmatprep.subr.bf16.mxu0 0
        %1803 = vmatpush2.bf16.msra.mxu0 0
        %1804 = vmatprep.subr.bf16.mxu0 0
        %1805 = vmatpush2.bf16.msra.mxu0 0
        %1806 = vmatprep.subr.bf16.mxu0 0
        %1807 = vmatpush2.bf16.msra.mxu0 0
        %1808 = vmatprep.subr.bf16.mxu0 0
        %1809 = vmatpush2.bf16.msra.mxu0 0
        %1810 = vmatprep.subr.bf16.mxu0 0
        %1811 = vmatpush2.bf16.msra.mxu0 0
        %1812 = vmatprep.mubr.bf16.mxu0 0
        %1813 = vmatmul.mubr.bf16.gmra.mxu0 %v1778
        %v1814 = vpop.f32.mrf.mxu0
        %v1815 = vadd.f32 0.0, %v1814
        %v1816 = vpop.f32.mrf.mxu0
        %v1817 = vpop.f32.mrf.mxu0
        %v1818 = vpop.f32.mrf.mxu0
        %1819 = vdwg.mxu0
        %v1821 = vsel %vm1177, %v1728, 0
        %1823 = vmatprep.subr.bf16.mxu0 0
        %1824 = vmatpush1.bf16.msra.mxu0 0
        %1825 = vmatprep.subr.bf16.mxu0 0
        %1826 = vmatpush1.bf16.msra.mxu0 0
        %1827 = vmatprep.subr.bf16.mxu0 0
        %1828 = vmatpush1.bf16.msra.mxu0 0
        %1829 = vmatprep.subr.bf16.mxu0 0
        %1830 = vmatpush1.bf16.msra.mxu0 0
        %1831 = vmatprep.subr.bf16.mxu0 0
        %1832 = vmatpush1.bf16.msra.mxu0 0
        %1833 = vmatprep.subr.bf16.mxu0 0
        %1834 = vmatpush1.bf16.msra.mxu0 0
        %1835 = vmatprep.subr.bf16.mxu0 0
        %1836 = vmatpush1.bf16.msra.mxu0 0
        %1837 = vmatprep.subr.bf16.mxu0 0
        %1838 = vmatpush1.bf16.msra.mxu0 %v1732
        %1839 = vmatprep.subr.bf16.mxu0 0
        %1840 = vmatpush2.bf16.msra.mxu0 0
        %1841 = vmatprep.subr.bf16.mxu0 0
        %1842 = vmatpush2.bf16.msra.mxu0 0
        %1843 = vmatprep.subr.bf16.mxu0 0
        %1844 = vmatpush2.bf16.msra.mxu0 0
        %1845 = vmatprep.subr.bf16.mxu0 0
        %1846 = vmatpush2.bf16.msra.mxu0 0
        %1847 = vmatprep.subr.bf16.mxu0 0
        %1848 = vmatpush2.bf16.msra.mxu0 0
        %1849 = vmatprep.subr.bf16.mxu0 0
        %1850 = vmatpush2.bf16.msra.mxu0 0
        %1851 = vmatprep.subr.bf16.mxu0 0
        %1852 = vmatpush2.bf16.msra.mxu0 0
        %1853 = vmatprep.subr.bf16.mxu0 0
        %1854 = vmatpush2.bf16.msra.mxu0 0
        %1855 = vmatprep.mubr.bf16.mxu0 0
        %1856 = vmatmul.mubr.bf16.gmra.mxu0 %v1821
        %v1857 = vpop.f32.mrf.mxu0
        %v1858 = vadd.f32 0.0, %v1857
        %v1859 = vpop.f32.mrf.mxu0
        %v1860 = vpop.f32.mrf.mxu0
        %v1861 = vpop.f32.mrf.mxu0
        %1862 = vdwg.mxu0
        %v1864 = vsel %vm1177, %v1729, 0
        %1866 = vmatprep.subr.bf16.mxu0 0
        %1867 = vmatpush1.bf16.msra.mxu0 0
        %1868 = vmatprep.subr.bf16.mxu0 0
        %1869 = vmatpush1.bf16.msra.mxu0 0
        %1870 = vmatprep.subr.bf16.mxu0 0
        %1871 = vmatpush1.bf16.msra.mxu0 0
        %1872 = vmatprep.subr.bf16.mxu0 0
        %1873 = vmatpush1.bf16.msra.mxu0 0
        %1874 = vmatprep.subr.bf16.mxu0 0
        %1875 = vmatpush1.bf16.msra.mxu0 0
        %1876 = vmatprep.subr.bf16.mxu0 0
        %1877 = vmatpush1.bf16.msra.mxu0 0
        %1878 = vmatprep.subr.bf16.mxu0 0
        %1879 = vmatpush1.bf16.msra.mxu0 0
        %1880 = vmatprep.subr.bf16.mxu0 0
        %1881 = vmatpush1.bf16.msra.mxu0 %v1733
        %1882 = vmatprep.subr.bf16.mxu0 0
        %1883 = vmatpush2.bf16.msra.mxu0 0
        %1884 = vmatprep.subr.bf16.mxu0 0
        %1885 = vmatpush2.bf16.msra.mxu0 0
        %1886 = vmatprep.subr.bf16.mxu0 0
        %1887 = vmatpush2.bf16.msra.mxu0 0
        %1888 = vmatprep.subr.bf16.mxu0 0
        %1889 = vmatpush2.bf16.msra.mxu0 0
        %1890 = vmatprep.subr.bf16.mxu0 0
        %1891 = vmatpush2.bf16.msra.mxu0 0
        %1892 = vmatprep.subr.bf16.mxu0 0
        %1893 = vmatpush2.bf16.msra.mxu0 0
        %1894 = vmatprep.subr.bf16.mxu0 0
        %1895 = vmatpush2.bf16.msra.mxu0 0
        %1896 = vmatprep.subr.bf16.mxu0 0
        %1897 = vmatpush2.bf16.msra.mxu0 0
        %1898 = vmatprep.mubr.bf16.mxu0 0
        %1899 = vmatmul.mubr.bf16.gmra.mxu0 %v1864
        %v1900 = vpop.f32.mrf.mxu0
        %v1901 = vadd.f32 0.0, %v1900
        %v1902 = vpop.f32.mrf.mxu0
        %v1903 = vpop.f32.mrf.mxu0
        %v1904 = vpop.f32.mrf.mxu0
        %1905 = vdwg.mxu0
        %1907 = vrot.lane.b32.xlu0 %v1815, 8
        %v1908 = vpop.permute.xlu0 %1907
        %1911 = vrot.lane.b32.xlu0 %v1858, 16
        %v1912 = vpop.permute.xlu0 %1911
        %1915 = vrot.lane.b32.xlu0 %v1901, 24
        %v1916 = vpop.permute.xlu0 %1915
        %v1918 = vsel %vm729, %v1772, %v1908
        %v1919 = vsel %vm1177, %v1918, %v1912
        %v1920 = vsel %vm1179, %v1919, %v1916
        %v1921 = vpack.c.bf16 %v1920, %v1920
        %v1922 = vlaneseq
        %v1923 = vshrl.u32 %v1922, 7
        %v1924 = vsub.s32 1, %v1923
        %v1925 = vrot.slane %v584, %v1924
        %v1930 = vunpack.c.l.b16 %v567
        %v1931 = vunpack.c.l.b16 %v568
        %v1932 = vunpack.c.l.b16 %v569
        %v1933 = vunpack.c.l.b16 %v570
        %v1934 = vpack.c.b16 %v1931, %v1930
        %v1935 = vpack.c.b16 %v1933, %v1932
        %v1939 = vsel %vm604, %v1921, 0
        %1941 = vmatprep.subr.bf16.mxu0 0
        %1942 = vmatpush1.bf16.msra.mxu0 0
        %1943 = vmatprep.subr.bf16.mxu0 0
        %1944 = vmatpush1.bf16.msra.mxu0 0
        %1945 = vmatprep.subr.bf16.mxu0 0
        %1946 = vmatpush1.bf16.msra.mxu0 0
        %1947 = vmatprep.subr.bf16.mxu0 0
        %1948 = vmatpush1.bf16.msra.mxu0 0
        %1949 = vmatprep.subr.bf16.mxu0 0
        %1950 = vmatpush1.bf16.msra.mxu0 0
        %1951 = vmatprep.subr.bf16.mxu0 0
        %1952 = vmatpush1.bf16.msra.mxu0 0
        %1953 = vmatprep.subr.bf16.mxu0 0
        %1954 = vmatpush1.bf16.msra.mxu0 %v1935
        %1955 = vmatprep.subr.bf16.mxu0 0
        %1956 = vmatpush1.bf16.msra.mxu0 %v1934
        %1957 = vmatprep.subr.bf16.mxu0 0
        %1958 = vmatpush2.bf16.msra.mxu0 0
        %1959 = vmatprep.subr.bf16.mxu0 0
        %1960 = vmatpush2.bf16.msra.mxu0 0
        %1961 = vmatprep.subr.bf16.mxu0 0
        %1962 = vmatpush2.bf16.msra.mxu0 0
        %1963 = vmatprep.subr.bf16.mxu0 0
        %1964 = vmatpush2.bf16.msra.mxu0 0
        %1965 = vmatprep.subr.bf16.mxu0 0
        %1966 = vmatpush2.bf16.msra.mxu0 0
        %1967 = vmatprep.subr.bf16.mxu0 0
        %1968 = vmatpush2.bf16.msra.mxu0 0
        %1969 = vmatprep.subr.bf16.mxu0 0
        %1970 = vmatpush2.bf16.msra.mxu0 0
        %1971 = vmatprep.subr.bf16.mxu0 0
        %1972 = vmatpush2.bf16.msra.mxu0 0
        %1973 = vmatprep.mubr.bf16.mxu0 0
        %1974 = vmatmul.mubr.bf16.gmra.mxu0 %v1939
        %v1975 = vpop.f32.mrf.mxu0
        %v1976 = vadd.f32 %v1925, %v1975
        %v1977 = vpop.f32.mrf.mxu0
        %v1978 = vpop.f32.mrf.mxu0
        %v1979 = vpop.f32.mrf.mxu0
        %1980 = vdwg.mxu0
        %v1981 = vadd.f32 %v1265, %v1976
        %v1982 = vsel %vm604, %v1981, 0.0
        %1983 = vadd.xlane.f32.xlu0 %v1982
        %v1984 = vpop.xlane.xlu0 %1983
        %v1985 = vmul.f32 %v1984, %v1245
        %v1986 = vsub.f32 %v1981, %v1985
        %v1987 = vmul.f32 %v1986, %v1986
        %v1988 = vsel %vm604, %v1987, 0.0
        %1989 = vadd.xlane.f32.xlu0 %v1988
        %v1990 = vpop.xlane.xlu0 %1989
        %v1991 = vmul.f32 %v1990, %v1245
        %v1992 = vadd.f32 %v1991, 1e-05
        %v1993 = vrsqrt.pop %v1992
        %v1994 = vmul.f32 %v1986, %v1993
        %v1995 = vlaneseq
        %v1996 = vshrl.u32 %v1995, 7
        %v1997 = vsub.s32 4, %v1996
        %v1998 = vrot.slane %v584, %v1997
        %v1999 = vmul.f32 %v1994, %v1998
        %v2000 = vlaneseq
        %v2001 = vshrl.u32 %v2000, 7
        %v2002 = vsub.s32 5, %v2001
        %v2003 = vrot.slane %v584, %v2002
        %v2004 = vadd.f32 %v1999, %v2003
        %v2005 = vpack.c.bf16 %v2004, %v2004
        %v2007 = vlaneseq
        %v2008 = vshrl.u32 %v2007, 7
        %v2009 = vsub.s32 0, %v2008
        %v2010 = vrot.slane %v575, %v2009
        %v2016 = vunpack.c.l.b16 %v571
        %v2017 = vunpack.c.l.b16 %v572
        %v2018 = vunpack.c.l.b16 %v573
        %v2019 = vunpack.c.l.b16 %v574
        %v2020 = vpack.c.b16 %v2017, %v2016
        %v2021 = vpack.c.b16 %v2019, %v2018
        %v2025 = vsel %vm604, %v2005, 0
        %2027 = vmatprep.subr.bf16.mxu0 0
        %2028 = vmatpush1.bf16.msra.mxu0 0
        %2029 = vmatprep.subr.bf16.mxu0 0
        %2030 = vmatpush1.bf16.msra.mxu0 0
        %2031 = vmatprep.subr.bf16.mxu0 0
        %2032 = vmatpush1.bf16.msra.mxu0 0
        %2033 = vmatprep.subr.bf16.mxu0 0
        %2034 = vmatpush1.bf16.msra.mxu0 0
        %2035 = vmatprep.subr.bf16.mxu0 0
        %2036 = vmatpush1.bf16.msra.mxu0 0
        %2037 = vmatprep.subr.bf16.mxu0 0
        %2038 = vmatpush1.bf16.msra.mxu0 0
        %2039 = vmatprep.subr.bf16.mxu0 0
        %2040 = vmatpush1.bf16.msra.mxu0 %v2021
        %2041 = vmatprep.subr.bf16.mxu0 0
        %2042 = vmatpush1.bf16.msra.mxu0 %v2020
        %2043 = vmatprep.subr.bf16.mxu0 0
        %2044 = vmatpush2.bf16.msra.mxu0 0
        %2045 = vmatprep.subr.bf16.mxu0 0
        %2046 = vmatpush2.bf16.msra.mxu0 0
        %2047 = vmatprep.subr.bf16.mxu0 0
        %2048 = vmatpush2.bf16.msra.mxu0 0
        %2049 = vmatprep.subr.bf16.mxu0 0
        %2050 = vmatpush2.bf16.msra.mxu0 0
        %2051 = vmatprep.subr.bf16.mxu0 0
        %2052 = vmatpush2.bf16.msra.mxu0 0
        %2053 = vmatprep.subr.bf16.mxu0 0
        %2054 = vmatpush2.bf16.msra.mxu0 0
        %2055 = vmatprep.subr.bf16.mxu0 0
        %2056 = vmatpush2.bf16.msra.mxu0 0
        %2057 = vmatprep.subr.bf16.mxu0 0
        %2058 = vmatpush2.bf16.msra.mxu0 0
        %2059 = vmatprep.mubr.bf16.mxu0 0
        %2060 = vmatmul.mubr.bf16.gmra.mxu0 %v2025
        %v2061 = vpop.f32.mrf.mxu0
        %v2062 = vadd.f32 %v2010, %v2061
        %v2063 = vpop.f32.mrf.mxu0
        %v2064 = vpop.f32.mrf.mxu0
        %v2065 = vpop.f32.mrf.mxu0
        %2066 = vdwg.mxu0
        %v2067 = vmax.f32 %v2062, 0.0
        %v2068 = vpack.c.bf16 %v2067, %v2067
        %v2069 = vlaneseq
        %v2070 = vshrl.u32 %v2069, 7
        %v2071 = vsub.s32 2, %v2070
        %v2072 = vrot.slane %v585, %v2071
        %v2081 = vunpack.c.l.b16 %v576
        %v2082 = vunpack.c.l.b16 %v577
        %v2083 = vunpack.c.l.b16 %v578
        %v2084 = vunpack.c.l.b16 %v579
        %v2085 = vunpack.c.l.b16 %v580
        %v2086 = vunpack.c.l.b16 %v581
        %v2087 = vunpack.c.l.b16 %v582
        %v2088 = vunpack.c.l.b16 %v583
        %v2089 = vpack.c.b16 %v2082, %v2081
        %v2090 = vpack.c.b16 %v2084, %v2083
        %v2091 = vpack.c.b16 %v2086, %v2085
        %v2092 = vpack.c.b16 %v2088, %v2087
        %vm2097 = vcmask 523264
        %v2099 = vsel %vm2097, %v2068, 0
        %2101 = vmatprep.subr.bf16.mxu0 0
        %2102 = vmatpush1.bf16.msra.mxu0 0
        %2103 = vmatprep.subr.bf16.mxu0 0
        %2104 = vmatpush1.bf16.msra.mxu0 0
        %2105 = vmatprep.subr.bf16.mxu0 0
        %2106 = vmatpush1.bf16.msra.mxu0 0
        %2107 = vmatprep.subr.bf16.mxu0 0
        %2108 = vmatpush1.bf16.msra.mxu0 0
        %2109 = vmatprep.subr.bf16.mxu0 0
        %2110 = vmatpush1.bf16.msra.mxu0 %v2092
        %2111 = vmatprep.subr.bf16.mxu0 0
        %2112 = vmatpush1.bf16.msra.mxu0 %v2091
        %2113 = vmatprep.subr.bf16.mxu0 0
        %2114 = vmatpush1.bf16.msra.mxu0 %v2090
        %2115 = vmatprep.subr.bf16.mxu0 0
        %2116 = vmatpush1.bf16.msra.mxu0 %v2089
        %2117 = vmatprep.subr.bf16.mxu0 0
        %2118 = vmatpush2.bf16.msra.mxu0 0
        %2119 = vmatprep.subr.bf16.mxu0 0
        %2120 = vmatpush2.bf16.msra.mxu0 0
        %2121 = vmatprep.subr.bf16.mxu0 0
        %2122 = vmatpush2.bf16.msra.mxu0 0
        %2123 = vmatprep.subr.bf16.mxu0 0
        %2124 = vmatpush2.bf16.msra.mxu0 0
        %2125 = vmatprep.subr.bf16.mxu0 0
        %2126 = vmatpush2.bf16.msra.mxu0 0
        %2127 = vmatprep.subr.bf16.mxu0 0
        %2128 = vmatpush2.bf16.msra.mxu0 0
        %2129 = vmatprep.subr.bf16.mxu0 0
        %2130 = vmatpush2.bf16.msra.mxu0 0
        %2131 = vmatprep.subr.bf16.mxu0 0
        %2132 = vmatpush2.bf16.msra.mxu0 0
        %2133 = vmatprep.mubr.bf16.mxu0 0
        %2134 = vmatmul.mubr.bf16.gmra.mxu0 %v2099
        %v2135 = vpop.f32.mrf.mxu0
        %v2136 = vadd.f32 %v2072, %v2135
        %v2137 = vpop.f32.mrf.mxu0
        %v2138 = vpop.f32.mrf.mxu0
        %v2139 = vpop.f32.mrf.mxu0
        %2140 = vdwg.mxu0
        %v2141 = vadd.f32 %v2004, %v2136
        %v2142 = vsel %vm604, %v2141, 0.0
        %2143 = vadd.xlane.f32.xlu0 %v2142
        %v2144 = vpop.xlane.xlu0 %2143
        %v2145 = vmul.f32 %v2144, %v1245
        %v2146 = vsub.f32 %v2141, %v2145
        %v2147 = vmul.f32 %v2146, %v2146
        %v2148 = vsel %vm604, %v2147, 0.0
        %2149 = vadd.xlane.f32.xlu0 %v2148
        %v2150 = vpop.xlane.xlu0 %2149
        %v2151 = vmul.f32 %v2150, %v1245
        %v2152 = vadd.f32 %v2151, 1e-05
        %v2153 = vrsqrt.pop %v2152
        %v2154 = vmul.f32 %v2146, %v2153
        %v2155 = vlaneseq
        %v2156 = vshrl.u32 %v2155, 7
        %v2157 = vsub.s32 6, %v2156
        %v2158 = vrot.slane %v584, %v2157
        %v2159 = vmul.f32 %v2154, %v2158
        %v2160 = vlaneseq
        %v2161 = vshrl.u32 %v2160, 7
        %v2162 = vsub.s32 7, %v2161
        %v2163 = vrot.slane %v584, %v2162
        %v2164 = vadd.f32 %v2159, %v2163
        %v2165 = vsel %vm604, %v2164, 0.0
        %2166 = vadd.xlane.f32.xlu0 %v2165
        %v2167 = vpop.xlane.xlu0 %2166
        %v2168 = vmul.f32 %v2167, %v1245
        %v2169 = vsub.f32 %v2164, %v2168
        %v2170 = vmul.f32 %v2169, %v2169
        %v2171 = vsel %vm604, %v2170, 0.0
        %2172 = vadd.xlane.f32.xlu0 %v2171
        %v2173 = vpop.xlane.xlu0 %2172
        %v2174 = vmul.f32 %v2173, %v1245
        %v2175 = vadd.f32 %v2174, 1e-05
        %v2176 = vrsqrt.pop %v2175
        %v2177 = vmul.f32 %v2169, %v2176
        %v2178 = vlaneseq
        %v2179 = vshrl.u32 %v2178, 7
        %v2180 = vsub.s32 0, %v2179
        %v2181 = vrot.slane %v585, %v2180
        %v2182 = vmul.f32 %v2177, %v2181
        %v2183 = vlaneseq
        %v2184 = vshrl.u32 %v2183, 7
        %v2185 = vsub.s32 1, %v2184
        %v2186 = vrot.slane %v585, %v2185
        %v2187 = vadd.f32 %v2182, %v2186
        %v2189 = vrot.slane %v2187, 1
        %2190 = vrot.lane.b32.xlu0 %v2189, 32
        %v2191 = vpop.permute.xlu0 %2190
        %v2193 = vrot.slane %v2187, 2
        %2194 = vrot.lane.b32.xlu0 %v2193, 64
        %v2195 = vpop.permute.xlu0 %2194
        %v2197 = vrot.slane %v2187, 3
        %2198 = vrot.lane.b32.xlu0 %v2197, 96
        %v2199 = vpop.permute.xlu0 %2198
        %v2201 = vrot.slane %v2187, 4
        %v2203 = vrot.slane %v2187, 5
        %2204 = vrot.lane.b32.xlu0 %v2203, 32
        %v2205 = vpop.permute.xlu0 %2204
        %v2207 = vrot.slane %v2187, 6
        %2208 = vrot.lane.b32.xlu0 %v2207, 64
        %v2209 = vpop.permute.xlu0 %2208
        %v2211 = vrot.slane %v2187, 7
        %2212 = vrot.lane.b32.xlu0 %v2211, 96
        %v2213 = vpop.permute.xlu0 %2212
        %v2215 = vsel %vm604, %v2187, %v2191
        %v2216 = vsel %vm2097, %v2215, %v2195
        %vm2217 = vcmask 785408
        %v2218 = vsel %vm2217, %v2216, %v2199
        %v2219 = vsel %vm604, %v2201, %v2205
        %v2220 = vsel %vm2097, %v2219, %v2209
        %v2221 = vsel %vm2217, %v2220, %v2213
        %s2222 = scalar_lea.vmem %s4, 32
        %v2223 = vld [vmem:[%s2222] sm:$0xf]
        %v2224 = vld [vmem:[%s2222 + $0x4] sm:$0xf]
        %v2225 = vld [vmem:[%s2222 + $0x8] sm:$0xf]
        %v2226 = vld [vmem:[%s2222 + $0xc] sm:$0xf]
        %v2227 = vld [vmem:[%s2222 + $0x10] sm:$0xf]
        %v2228 = vld [vmem:[%s2222 + $0x14] sm:$0xf]
        %v2229 = vld [vmem:[%s2222 + $0x18] sm:$0xf]
        %v2230 = vld [vmem:[%s2222 + $0x1c] sm:$0xf]
        %s2231 = scalar_lea.vmem %s9, 2
        %v2232 = vld [vmem:[%s2231] sm:$0x3]
        %s2233 = scalar_lea.vmem %s5, 32
        %v2234 = vld [vmem:[%s2233] sm:$0xf]
        %v2235 = vld [vmem:[%s2233 + $0x4] sm:$0xf]
        %v2236 = vld [vmem:[%s2233 + $0x8] sm:$0xf]
        %v2237 = vld [vmem:[%s2233 + $0xc] sm:$0xf]
        %v2238 = vld [vmem:[%s2233 + $0x10] sm:$0xf]
        %v2239 = vld [vmem:[%s2233 + $0x14] sm:$0xf]
        %v2240 = vld [vmem:[%s2233 + $0x18] sm:$0xf]
        %v2241 = vld [vmem:[%s2233 + $0x1c] sm:$0xf]
        %s2242 = scalar_lea.vmem [#allocation10], 16
        %v2243 = vld [vmem:[%s2242] sm:$0xf]
        %v2244 = vld [vmem:[%s2242 + $0x4] sm:$0xf]
        %v2245 = vld [vmem:[%s2242 + $0x8] sm:$0xf]
        %v2246 = vld [vmem:[%s2242 + $0xc] sm:$0xf]
        %s2247 = scalar_lea.vmem [#allocation11], 1
        %v2248 = vld [vmem:[%s2247] sm:$0x1]
        %s2249 = scalar_lea.vmem %s8, 32
        %v2250 = vld [vmem:[%s2249] sm:$0xf]
        %v2251 = vld [vmem:[%s2249 + $0x4] sm:$0xf]
        %v2252 = vld [vmem:[%s2249 + $0x8] sm:$0xf]
        %v2253 = vld [vmem:[%s2249 + $0xc] sm:$0xf]
        %v2254 = vld [vmem:[%s2249 + $0x10] sm:$0xf]
        %v2255 = vld [vmem:[%s2249 + $0x14] sm:$0xf]
        %v2256 = vld [vmem:[%s2249 + $0x18] sm:$0xf]
        %v2257 = vld [vmem:[%s2249 + $0x1c] sm:$0xf]
        %s2258 = scalar_lea.vmem %s10, 16
        %v2259 = vld [vmem:[%s2258] sm:$0xff]
        %v2260 = vld [vmem:[%s2258 + $0x8] sm:$0x7]
        %v2261 = vadd.f32 %v2164, %v547
        %v2262 = vpack.c.bf16 %v2261, %v2261
        %v2263 = vlaneseq
        %v2264 = vshrl.u32 %v2263, 7
        %v2265 = vsub.s32 0, %v2264
        %v2266 = vrot.slane %v2232, %v2265
        %v2271 = vunpack.c.l.b16 %v2223
        %v2272 = vunpack.c.l.b16 %v2224
        %v2273 = vunpack.c.l.b16 %v2225
        %v2274 = vunpack.c.l.b16 %v2226
        %v2275 = vpack.c.b16 %v2272, %v2271
        %v2276 = vpack.c.b16 %v2274, %v2273
        %v2280 = vsel %vm604, %v2262, 0
        %2282 = vmatprep.subr.bf16.mxu0 0
        %2283 = vmatpush1.bf16.msra.mxu0 0
        %2284 = vmatprep.subr.bf16.mxu0 0
        %2285 = vmatpush1.bf16.msra.mxu0 0
        %2286 = vmatprep.subr.bf16.mxu0 0
        %2287 = vmatpush1.bf16.msra.mxu0 0
        %2288 = vmatprep.subr.bf16.mxu0 0
        %2289 = vmatpush1.bf16.msra.mxu0 0
        %2290 = vmatprep.subr.bf16.mxu0 0
        %2291 = vmatpush1.bf16.msra.mxu0 0
        %2292 = vmatprep.subr.bf16.mxu0 0
        %2293 = vmatpush1.bf16.msra.mxu0 0
        %2294 = vmatprep.subr.bf16.mxu0 0
        %2295 = vmatpush1.bf16.msra.mxu0 %v2276
        %2296 = vmatprep.subr.bf16.mxu0 0
        %2297 = vmatpush1.bf16.msra.mxu0 %v2275
        %2298 = vmatprep.subr.bf16.mxu0 0
        %2299 = vmatpush2.bf16.msra.mxu0 0
        %2300 = vmatprep.subr.bf16.mxu0 0
        %2301 = vmatpush2.bf16.msra.mxu0 0
        %2302 = vmatprep.subr.bf16.mxu0 0
        %2303 = vmatpush2.bf16.msra.mxu0 0
        %2304 = vmatprep.subr.bf16.mxu0 0
        %2305 = vmatpush2.bf16.msra.mxu0 0
        %2306 = vmatprep.subr.bf16.mxu0 0
        %2307 = vmatpush2.bf16.msra.mxu0 0
        %2308 = vmatprep.subr.bf16.mxu0 0
        %2309 = vmatpush2.bf16.msra.mxu0 0
        %2310 = vmatprep.subr.bf16.mxu0 0
        %2311 = vmatpush2.bf16.msra.mxu0 0
        %2312 = vmatprep.subr.bf16.mxu0 0
        %2313 = vmatpush2.bf16.msra.mxu0 0
        %2314 = vmatprep.mubr.bf16.mxu0 0
        %2315 = vmatmul.mubr.bf16.gmra.mxu0 %v2280
        %v2316 = vpop.f32.mrf.mxu0
        %v2317 = vadd.f32 %v2266, %v2316
        %v2318 = vpop.f32.mrf.mxu0
        %v2319 = vpop.f32.mrf.mxu0
        %v2320 = vpop.f32.mrf.mxu0
        %2321 = vdwg.mxu0
        %v2322 = vpack.c.bf16 %v2164, %v2164
        %2323 = vrot.lane.b32.xlu0 %v2275, 64
        %v2324 = vpop.permute.xlu0 %2323
        %2325 = vrot.lane.b32.xlu0 %v2276, 64
        %v2326 = vpop.permute.xlu0 %2325
        %2330 = vrot.lane.b32.xlu0 %v2266, 64
        %v2331 = vpop.permute.xlu0 %2330
        %v2334 = vsel %vm604, %v2322, 0
        %2336 = vmatprep.subr.bf16.mxu0 0
        %2337 = vmatpush1.bf16.msra.mxu0 0
        %2338 = vmatprep.subr.bf16.mxu0 0
        %2339 = vmatpush1.bf16.msra.mxu0 0
        %2340 = vmatprep.subr.bf16.mxu0 0
        %2341 = vmatpush1.bf16.msra.mxu0 0
        %2342 = vmatprep.subr.bf16.mxu0 0
        %2343 = vmatpush1.bf16.msra.mxu0 0
        %2344 = vmatprep.subr.bf16.mxu0 0
        %2345 = vmatpush1.bf16.msra.mxu0 0
        %2346 = vmatprep.subr.bf16.mxu0 0
        %2347 = vmatpush1.bf16.msra.mxu0 0
        %2348 = vmatprep.subr.bf16.mxu0 0
        %2349 = vmatpush1.bf16.msra.mxu0 %v2326
        %2350 = vmatprep.subr.bf16.mxu0 0
        %2351 = vmatpush1.bf16.msra.mxu0 %v2324
        %2352 = vmatprep.subr.bf16.mxu0 0
        %2353 = vmatpush2.bf16.msra.mxu0 0
        %2354 = vmatprep.subr.bf16.mxu0 0
        %2355 = vmatpush2.bf16.msra.mxu0 0
        %2356 = vmatprep.subr.bf16.mxu0 0
        %2357 = vmatpush2.bf16.msra.mxu0 0
        %2358 = vmatprep.subr.bf16.mxu0 0
        %2359 = vmatpush2.bf16.msra.mxu0 0
        %2360 = vmatprep.subr.bf16.mxu0 0
        %2361 = vmatpush2.bf16.msra.mxu0 0
        %2362 = vmatprep.subr.bf16.mxu0 0
        %2363 = vmatpush2.bf16.msra.mxu0 0
        %2364 = vmatprep.subr.bf16.mxu0 0
        %2365 = vmatpush2.bf16.msra.mxu0 0
        %2366 = vmatprep.subr.bf16.mxu0 0
        %2367 = vmatpush2.bf16.msra.mxu0 0
        %2368 = vmatprep.mubr.bf16.mxu0 0
        %2369 = vmatmul.mubr.bf16.gmra.mxu0 %v2334
        %v2370 = vpop.f32.mrf.mxu0
        %v2371 = vadd.f32 %v2331, %v2370
        %v2372 = vpop.f32.mrf.mxu0
        %v2373 = vpop.f32.mrf.mxu0
        %v2374 = vpop.f32.mrf.mxu0
        %2375 = vdwg.mxu0
        %2377 = vrot.lane.b32.xlu0 %v2317, 120
        %v2378 = vpop.permute.xlu0 %2377
        %2380 = vrot.lane.b32.xlu0 %v2317, 112
        %v2381 = vpop.permute.xlu0 %2380
        %2383 = vrot.lane.b32.xlu0 %v2317, 104
        %v2384 = vpop.permute.xlu0 %2383
        %2387 = vrot.lane.b32.xlu0 %v2371, 120
        %v2388 = vpop.permute.xlu0 %2387
        %2390 = vrot.lane.b32.xlu0 %v2371, 112
        %v2391 = vpop.permute.xlu0 %2390
        %2393 = vrot.lane.b32.xlu0 %v2371, 104
        %v2394 = vpop.permute.xlu0 %2393
        %v2396 = vpack.c.bf16 %v2317, %v2317
        %v2397 = vpack.c.bf16 %v2378, %v2378
        %v2398 = vpack.c.bf16 %v2381, %v2381
        %v2399 = vpack.c.bf16 %v2384, %v2384
        %2401 = vrot.lane.b32.xlu0 %v2396, 96
        %v2402 = vpop.permute.xlu0 %2401
        %v2404 = vsel %vm729, %v2396, 0
        %v2407 = vsel %vm729, %v2402, 0
        %2409 = vmatprep.subr.bf16.mxu0 0
        %2410 = vmatpush1.bf16.xpose.msra.mxu0 0
        %2411 = vmatprep.subr.bf16.mxu0 0
        %2412 = vmatpush1.bf16.xpose.msra.mxu0 0
        %2413 = vmatprep.subr.bf16.mxu0 0
        %2414 = vmatpush1.bf16.xpose.msra.mxu0 0
        %2415 = vmatprep.subr.bf16.mxu0 0
        %2416 = vmatpush1.bf16.xpose.msra.mxu0 0
        %2417 = vmatprep.subr.bf16.mxu0 0
        %2418 = vmatpush1.bf16.xpose.msra.mxu0 0
        %2419 = vmatprep.subr.bf16.mxu0 0
        %2420 = vmatpush1.bf16.xpose.msra.mxu0 0
        %2421 = vmatprep.subr.bf16.mxu0 0
        %2422 = vmatpush1.bf16.xpose.msra.mxu0 0
        %2423 = vmatprep.subr.bf16.mxu0 0
        %2424 = vmatpush1.bf16.xpose.msra.mxu0 %v2407
        %2425 = vmatprep.subr.bf16.mxu0 0
        %2426 = vmatpush2.bf16.xpose.msra.mxu0 0
        %2427 = vmatprep.subr.bf16.mxu0 0
        %2428 = vmatpush2.bf16.xpose.msra.mxu0 0
        %2429 = vmatprep.subr.bf16.mxu0 0
        %2430 = vmatpush2.bf16.xpose.msra.mxu0 0
        %2431 = vmatprep.subr.bf16.mxu0 0
        %2432 = vmatpush2.bf16.xpose.msra.mxu0 0
        %2433 = vmatprep.subr.bf16.mxu0 0
        %2434 = vmatpush2.bf16.xpose.msra.mxu0 0
        %2435 = vmatprep.subr.bf16.mxu0 0
        %2436 = vmatpush2.bf16.xpose.msra.mxu0 0
        %2437 = vmatprep.subr.bf16.mxu0 0
        %2438 = vmatpush2.bf16.xpose.msra.mxu0 0
        %2439 = vmatprep.subr.bf16.mxu0 0
        %2440 = vmatpush2.bf16.xpose.msra.mxu0 0
        %2441 = vmatprep.mubr.bf16.mxu0 0
        %2442 = vmatmul.mubr.bf16.gmra.mxu0 %v2404
        %v2443 = vpop.f32.mrf.mxu0
        %v2444 = vadd.f32 0.0, %v2443
        %v2445 = vpop.f32.mrf.mxu0
        %v2446 = vpop.f32.mrf.mxu0
        %v2447 = vpop.f32.mrf.mxu0
        %2448 = vdwg.mxu0
        %2450 = vrot.lane.b32.xlu0 %v2397, 96
        %v2451 = vpop.permute.xlu0 %2450
        %v2453 = vsel %vm729, %v2397, 0
        %v2456 = vsel %vm729, %v2451, 0
        %2458 = vmatprep.subr.bf16.mxu0 0
        %2459 = vmatpush1.bf16.xpose.msra.mxu0 0
        %2460 = vmatprep.subr.bf16.mxu0 0
        %2461 = vmatpush1.bf16.xpose.msra.mxu0 0
        %2462 = vmatprep.subr.bf16.mxu0 0
        %2463 = vmatpush1.bf16.xpose.msra.mxu0 0
        %2464 = vmatprep.subr.bf16.mxu0 0
        %2465 = vmatpush1.bf16.xpose.msra.mxu0 0
        %2466 = vmatprep.subr.bf16.mxu0 0
        %2467 = vmatpush1.bf16.xpose.msra.mxu0 0
        %2468 = vmatprep.subr.bf16.mxu0 0
        %2469 = vmatpush1.bf16.xpose.msra.mxu0 0
        %2470 = vmatprep.subr.bf16.mxu0 0
        %2471 = vmatpush1.bf16.xpose.msra.mxu0 0
        %2472 = vmatprep.subr.bf16.mxu0 0
        %2473 = vmatpush1.bf16.xpose.msra.mxu0 %v2456
        %2474 = vmatprep.subr.bf16.mxu0 0
        %2475 = vmatpush2.bf16.xpose.msra.mxu0 0
        %2476 = vmatprep.subr.bf16.mxu0 0
        %2477 = vmatpush2.bf16.xpose.msra.mxu0 0
        %2478 = vmatprep.subr.bf16.mxu0 0
        %2479 = vmatpush2.bf16.xpose.msra.mxu0 0
        %2480 = vmatprep.subr.bf16.mxu0 0
        %2481 = vmatpush2.bf16.xpose.msra.mxu0 0
        %2482 = vmatprep.subr.bf16.mxu0 0
        %2483 = vmatpush2.bf16.xpose.msra.mxu0 0
        %2484 = vmatprep.subr.bf16.mxu0 0
        %2485 = vmatpush2.bf16.xpose.msra.mxu0 0
        %2486 = vmatprep.subr.bf16.mxu0 0
        %2487 = vmatpush2.bf16.xpose.msra.mxu0 0
        %2488 = vmatprep.subr.bf16.mxu0 0
        %2489 = vmatpush2.bf16.xpose.msra.mxu0 0
        %2490 = vmatprep.mubr.bf16.mxu0 0
        %2491 = vmatmul.mubr.bf16.gmra.mxu0 %v2453
        %v2492 = vpop.f32.mrf.mxu0
        %v2493 = vadd.f32 0.0, %v2492
        %v2494 = vpop.f32.mrf.mxu0
        %v2495 = vpop.f32.mrf.mxu0
        %v2496 = vpop.f32.mrf.mxu0
        %2497 = vdwg.mxu0
        %2499 = vrot.lane.b32.xlu0 %v2398, 96
        %v2500 = vpop.permute.xlu0 %2499
        %v2502 = vsel %vm729, %v2398, 0
        %v2505 = vsel %vm729, %v2500, 0
        %2507 = vmatprep.subr.bf16.mxu0 0
        %2508 = vmatpush1.bf16.xpose.msra.mxu0 0
        %2509 = vmatprep.subr.bf16.mxu0 0
        %2510 = vmatpush1.bf16.xpose.msra.mxu0 0
        %2511 = vmatprep.subr.bf16.mxu0 0
        %2512 = vmatpush1.bf16.xpose.msra.mxu0 0
        %2513 = vmatprep.subr.bf16.mxu0 0
        %2514 = vmatpush1.bf16.xpose.msra.mxu0 0
        %2515 = vmatprep.subr.bf16.mxu0 0
        %2516 = vmatpush1.bf16.xpose.msra.mxu0 0
        %2517 = vmatprep.subr.bf16.mxu0 0
        %2518 = vmatpush1.bf16.xpose.msra.mxu0 0
        %2519 = vmatprep.subr.bf16.mxu0 0
        %2520 = vmatpush1.bf16.xpose.msra.mxu0 0
        %2521 = vmatprep.subr.bf16.mxu0 0
        %2522 = vmatpush1.bf16.xpose.msra.mxu0 %v2505
        %2523 = vmatprep.subr.bf16.mxu0 0
        %2524 = vmatpush2.bf16.xpose.msra.mxu0 0
        %2525 = vmatprep.subr.bf16.mxu0 0
        %2526 = vmatpush2.bf16.xpose.msra.mxu0 0
        %2527 = vmatprep.subr.bf16.mxu0 0
        %2528 = vmatpush2.bf16.xpose.msra.mxu0 0
        %2529 = vmatprep.subr.bf16.mxu0 0
        %2530 = vmatpush2.bf16.xpose.msra.mxu0 0
        %2531 = vmatprep.subr.bf16.mxu0 0
        %2532 = vmatpush2.bf16.xpose.msra.mxu0 0
        %2533 = vmatprep.subr.bf16.mxu0 0
        %2534 = vmatpush2.bf16.xpose.msra.mxu0 0
        %2535 = vmatprep.subr.bf16.mxu0 0
        %2536 = vmatpush2.bf16.xpose.msra.mxu0 0
        %2537 = vmatprep.subr.bf16.mxu0 0
        %2538 = vmatpush2.bf16.xpose.msra.mxu0 0
        %2539 = vmatprep.mubr.bf16.mxu0 0
        %2540 = vmatmul.mubr.bf16.gmra.mxu0 %v2502
        %v2541 = vpop.f32.mrf.mxu0
        %v2542 = vadd.f32 0.0, %v2541
        %v2543 = vpop.f32.mrf.mxu0
        %v2544 = vpop.f32.mrf.mxu0
        %v2545 = vpop.f32.mrf.mxu0
        %2546 = vdwg.mxu0
        %2548 = vrot.lane.b32.xlu0 %v2399, 96
        %v2549 = vpop.permute.xlu0 %2548
        %v2551 = vsel %vm729, %v2399, 0
        %v2554 = vsel %vm729, %v2549, 0
        %2556 = vmatprep.subr.bf16.mxu0 0
        %2557 = vmatpush1.bf16.xpose.msra.mxu0 0
        %2558 = vmatprep.subr.bf16.mxu0 0
        %2559 = vmatpush1.bf16.xpose.msra.mxu0 0
        %2560 = vmatprep.subr.bf16.mxu0 0
        %2561 = vmatpush1.bf16.xpose.msra.mxu0 0
        %2562 = vmatprep.subr.bf16.mxu0 0
        %2563 = vmatpush1.bf16.xpose.msra.mxu0 0
        %2564 = vmatprep.subr.bf16.mxu0 0
        %2565 = vmatpush1.bf16.xpose.msra.mxu0 0
        %2566 = vmatprep.subr.bf16.mxu0 0
        %2567 = vmatpush1.bf16.xpose.msra.mxu0 0
        %2568 = vmatprep.subr.bf16.mxu0 0
        %2569 = vmatpush1.bf16.xpose.msra.mxu0 0
        %2570 = vmatprep.subr.bf16.mxu0 0
        %2571 = vmatpush1.bf16.xpose.msra.mxu0 %v2554
        %2572 = vmatprep.subr.bf16.mxu0 0
        %2573 = vmatpush2.bf16.xpose.msra.mxu0 0
        %2574 = vmatprep.subr.bf16.mxu0 0
        %2575 = vmatpush2.bf16.xpose.msra.mxu0 0
        %2576 = vmatprep.subr.bf16.mxu0 0
        %2577 = vmatpush2.bf16.xpose.msra.mxu0 0
        %2578 = vmatprep.subr.bf16.mxu0 0
        %2579 = vmatpush2.bf16.xpose.msra.mxu0 0
        %2580 = vmatprep.subr.bf16.mxu0 0
        %2581 = vmatpush2.bf16.xpose.msra.mxu0 0
        %2582 = vmatprep.subr.bf16.mxu0 0
        %2583 = vmatpush2.bf16.xpose.msra.mxu0 0
        %2584 = vmatprep.subr.bf16.mxu0 0
        %2585 = vmatpush2.bf16.xpose.msra.mxu0 0
        %2586 = vmatprep.subr.bf16.mxu0 0
        %2587 = vmatpush2.bf16.xpose.msra.mxu0 0
        %2588 = vmatprep.mubr.bf16.mxu0 0
        %2589 = vmatmul.mubr.bf16.gmra.mxu0 %v2551
        %v2590 = vpop.f32.mrf.mxu0
        %v2591 = vadd.f32 0.0, %v2590
        %v2592 = vpop.f32.mrf.mxu0
        %v2593 = vpop.f32.mrf.mxu0
        %v2594 = vpop.f32.mrf.mxu0
        %2595 = vdwg.mxu0
        %v2596 = vmul.f32 %v2444, 0.35355338
        %v2597 = vmul.f32 %v2493, 0.35355338
        %v2598 = vmul.f32 %v2542, 0.35355338
        %v2599 = vmul.f32 %v2591, 0.35355338
        %v2600 = vsel %vm729, %v2596, -inf
        %2601 = vmax.xlane.f32.xlu0 %v2600
        %v2602 = vpop.xlane.xlu0 %2601
        %v2603 = vsel %vm729, %v2597, -inf
        %2604 = vmax.xlane.f32.xlu0 %v2603
        %v2605 = vpop.xlane.xlu0 %2604
        %v2606 = vsel %vm729, %v2598, -inf
        %2607 = vmax.xlane.f32.xlu0 %v2606
        %v2608 = vpop.xlane.xlu0 %2607
        %v2609 = vsel %vm729, %v2599, -inf
        %2610 = vmax.xlane.f32.xlu0 %v2609
        %v2611 = vpop.xlane.xlu0 %2610
        %v2612 = vsub.f32 %v2596, %v2602
        %v2613 = vsub.f32 %v2597, %v2605
        %v2614 = vsub.f32 %v2598, %v2608
        %v2615 = vsub.f32 %v2599, %v2611
        %v2616 = vmul.f32 %v2612, 1.442695
        %v2617 = vpow.pop %v2616
        %v2618 = vmul.f32 %v2613, 1.442695
        %v2619 = vpow.pop %v2618
        %v2620 = vmul.f32 %v2614, 1.442695
        %v2621 = vpow.pop %v2620
        %v2622 = vmul.f32 %v2615, 1.442695
        %v2623 = vpow.pop %v2622
        %v2624 = vsel %vm729, %v2617, 0.0
        %2625 = vadd.xlane.f32.xlu0 %v2624
        %v2626 = vpop.xlane.xlu0 %2625
        %v2627 = vsel %vm729, %v2619, 0.0
        %2628 = vadd.xlane.f32.xlu0 %v2627
        %v2629 = vpop.xlane.xlu0 %2628
        %v2630 = vsel %vm729, %v2621, 0.0
        %2631 = vadd.xlane.f32.xlu0 %v2630
        %v2632 = vpop.xlane.xlu0 %2631
        %v2633 = vsel %vm729, %v2623, 0.0
        %2634 = vadd.xlane.f32.xlu0 %v2633
        %v2635 = vpop.xlane.xlu0 %2634
        %v2636 = vrcp.pop %v2626
        %v2637 = vrcp.pop %v2629
        %v2638 = vrcp.pop %v2632
        %v2639 = vrcp.pop %v2635
        %v2640 = vmul.f32 %v2617, %v2636
        %v2641 = vmul.f32 %v2619, %v2637
        %v2642 = vmul.f32 %v2621, %v2638
        %v2643 = vmul.f32 %v2623, %v2639
        %v2644 = vpack.c.bf16 %v2640, %v2640
        %v2645 = vpack.c.bf16 %v2641, %v2641
        %v2646 = vpack.c.bf16 %v2642, %v2642
        %v2647 = vpack.c.bf16 %v2643, %v2643
        %v2648 = vpack.c.bf16 %v2371, %v2371
        %v2649 = vpack.c.bf16 %v2388, %v2388
        %v2650 = vpack.c.bf16 %v2391, %v2391
        %v2651 = vpack.c.bf16 %v2394, %v2394
        %v2653 = vsel %vm729, %v2644, 0
        %v2656 = vsel %vm982, %v2648, 0
        %2658 = vmatprep.subr.bf16.mxu0 0
        %2659 = vmatpush1.bf16.msra.mxu0 0
        %2660 = vmatprep.subr.bf16.mxu0 0
        %2661 = vmatpush1.bf16.msra.mxu0 0
        %2662 = vmatprep.subr.bf16.mxu0 0
        %2663 = vmatpush1.bf16.msra.mxu0 0
        %2664 = vmatprep.subr.bf16.mxu0 0
        %2665 = vmatpush1.bf16.msra.mxu0 0
        %2666 = vmatprep.subr.bf16.mxu0 0
        %2667 = vmatpush1.bf16.msra.mxu0 0
        %2668 = vmatprep.subr.bf16.mxu0 0
        %2669 = vmatpush1.bf16.msra.mxu0 0
        %2670 = vmatprep.subr.bf16.mxu0 0
        %2671 = vmatpush1.bf16.msra.mxu0 0
        %2672 = vmatprep.subr.bf16.mxu0 0
        %2673 = vmatpush1.bf16.msra.mxu0 %v2656
        %2674 = vmatprep.subr.bf16.mxu0 0
        %2675 = vmatpush2.bf16.msra.mxu0 0
        %2676 = vmatprep.subr.bf16.mxu0 0
        %2677 = vmatpush2.bf16.msra.mxu0 0
        %2678 = vmatprep.subr.bf16.mxu0 0
        %2679 = vmatpush2.bf16.msra.mxu0 0
        %2680 = vmatprep.subr.bf16.mxu0 0
        %2681 = vmatpush2.bf16.msra.mxu0 0
        %2682 = vmatprep.subr.bf16.mxu0 0
        %2683 = vmatpush2.bf16.msra.mxu0 0
        %2684 = vmatprep.subr.bf16.mxu0 0
        %2685 = vmatpush2.bf16.msra.mxu0 0
        %2686 = vmatprep.subr.bf16.mxu0 0
        %2687 = vmatpush2.bf16.msra.mxu0 0
        %2688 = vmatprep.subr.bf16.mxu0 0
        %2689 = vmatpush2.bf16.msra.mxu0 0
        %2690 = vmatprep.mubr.bf16.mxu0 0
        %2691 = vmatmul.mubr.bf16.gmra.mxu0 %v2653
        %v2692 = vpop.f32.mrf.mxu0
        %v2693 = vadd.f32 0.0, %v2692
        %v2694 = vpop.f32.mrf.mxu0
        %v2695 = vpop.f32.mrf.mxu0
        %v2696 = vpop.f32.mrf.mxu0
        %2697 = vdwg.mxu0
        %v2699 = vsel %vm729, %v2645, 0
        %v2702 = vsel %vm982, %v2649, 0
        %2704 = vmatprep.subr.bf16.mxu0 0
        %2705 = vmatpush1.bf16.msra.mxu0 0
        %2706 = vmatprep.subr.bf16.mxu0 0
        %2707 = vmatpush1.bf16.msra.mxu0 0
        %2708 = vmatprep.subr.bf16.mxu0 0
        %2709 = vmatpush1.bf16.msra.mxu0 0
        %2710 = vmatprep.subr.bf16.mxu0 0
        %2711 = vmatpush1.bf16.msra.mxu0 0
        %2712 = vmatprep.subr.bf16.mxu0 0
        %2713 = vmatpush1.bf16.msra.mxu0 0
        %2714 = vmatprep.subr.bf16.mxu0 0
        %2715 = vmatpush1.bf16.msra.mxu0 0
        %2716 = vmatprep.subr.bf16.mxu0 0
        %2717 = vmatpush1.bf16.msra.mxu0 0
        %2718 = vmatprep.subr.bf16.mxu0 0
        %2719 = vmatpush1.bf16.msra.mxu0 %v2702
        %2720 = vmatprep.subr.bf16.mxu0 0
        %2721 = vmatpush2.bf16.msra.mxu0 0
        %2722 = vmatprep.subr.bf16.mxu0 0
        %2723 = vmatpush2.bf16.msra.mxu0 0
        %2724 = vmatprep.subr.bf16.mxu0 0
        %2725 = vmatpush2.bf16.msra.mxu0 0
        %2726 = vmatprep.subr.bf16.mxu0 0
        %2727 = vmatpush2.bf16.msra.mxu0 0
        %2728 = vmatprep.subr.bf16.mxu0 0
        %2729 = vmatpush2.bf16.msra.mxu0 0
        %2730 = vmatprep.subr.bf16.mxu0 0
        %2731 = vmatpush2.bf16.msra.mxu0 0
        %2732 = vmatprep.subr.bf16.mxu0 0
        %2733 = vmatpush2.bf16.msra.mxu0 0
        %2734 = vmatprep.subr.bf16.mxu0 0
        %2735 = vmatpush2.bf16.msra.mxu0 0
        %2736 = vmatprep.mubr.bf16.mxu0 0
        %2737 = vmatmul.mubr.bf16.gmra.mxu0 %v2699
        %v2738 = vpop.f32.mrf.mxu0
        %v2739 = vadd.f32 0.0, %v2738
        %v2740 = vpop.f32.mrf.mxu0
        %v2741 = vpop.f32.mrf.mxu0
        %v2742 = vpop.f32.mrf.mxu0
        %2743 = vdwg.mxu0
        %v2745 = vsel %vm729, %v2646, 0
        %v2748 = vsel %vm982, %v2650, 0
        %2750 = vmatprep.subr.bf16.mxu0 0
        %2751 = vmatpush1.bf16.msra.mxu0 0
        %2752 = vmatprep.subr.bf16.mxu0 0
        %2753 = vmatpush1.bf16.msra.mxu0 0
        %2754 = vmatprep.subr.bf16.mxu0 0
        %2755 = vmatpush1.bf16.msra.mxu0 0
        %2756 = vmatprep.subr.bf16.mxu0 0
        %2757 = vmatpush1.bf16.msra.mxu0 0
        %2758 = vmatprep.subr.bf16.mxu0 0
        %2759 = vmatpush1.bf16.msra.mxu0 0
        %2760 = vmatprep.subr.bf16.mxu0 0
        %2761 = vmatpush1.bf16.msra.mxu0 0
        %2762 = vmatprep.subr.bf16.mxu0 0
        %2763 = vmatpush1.bf16.msra.mxu0 0
        %2764 = vmatprep.subr.bf16.mxu0 0
        %2765 = vmatpush1.bf16.msra.mxu0 %v2748
        %2766 = vmatprep.subr.bf16.mxu0 0
        %2767 = vmatpush2.bf16.msra.mxu0 0
        %2768 = vmatprep.subr.bf16.mxu0 0
        %2769 = vmatpush2.bf16.msra.mxu0 0
        %2770 = vmatprep.subr.bf16.mxu0 0
        %2771 = vmatpush2.bf16.msra.mxu0 0
        %2772 = vmatprep.subr.bf16.mxu0 0
        %2773 = vmatpush2.bf16.msra.mxu0 0
        %2774 = vmatprep.subr.bf16.mxu0 0
        %2775 = vmatpush2.bf16.msra.mxu0 0
        %2776 = vmatprep.subr.bf16.mxu0 0
        %2777 = vmatpush2.bf16.msra.mxu0 0
        %2778 = vmatprep.subr.bf16.mxu0 0
        %2779 = vmatpush2.bf16.msra.mxu0 0
        %2780 = vmatprep.subr.bf16.mxu0 0
        %2781 = vmatpush2.bf16.msra.mxu0 0
        %2782 = vmatprep.mubr.bf16.mxu0 0
        %2783 = vmatmul.mubr.bf16.gmra.mxu0 %v2745
        %v2784 = vpop.f32.mrf.mxu0
        %v2785 = vadd.f32 0.0, %v2784
        %v2786 = vpop.f32.mrf.mxu0
        %v2787 = vpop.f32.mrf.mxu0
        %v2788 = vpop.f32.mrf.mxu0
        %2789 = vdwg.mxu0
        %v2791 = vsel %vm729, %v2647, 0
        %v2794 = vsel %vm982, %v2651, 0
        %2796 = vmatprep.subr.bf16.mxu0 0
        %2797 = vmatpush1.bf16.msra.mxu0 0
        %2798 = vmatprep.subr.bf16.mxu0 0
        %2799 = vmatpush1.bf16.msra.mxu0 0
        %2800 = vmatprep.subr.bf16.mxu0 0
        %2801 = vmatpush1.bf16.msra.mxu0 0
        %2802 = vmatprep.subr.bf16.mxu0 0
        %2803 = vmatpush1.bf16.msra.mxu0 0
        %2804 = vmatprep.subr.bf16.mxu0 0
        %2805 = vmatpush1.bf16.msra.mxu0 0
        %2806 = vmatprep.subr.bf16.mxu0 0
        %2807 = vmatpush1.bf16.msra.mxu0 0
        %2808 = vmatprep.subr.bf16.mxu0 0
        %2809 = vmatpush1.bf16.msra.mxu0 0
        %2810 = vmatprep.subr.bf16.mxu0 0
        %2811 = vmatpush1.bf16.msra.mxu0 %v2794
        %2812 = vmatprep.subr.bf16.mxu0 0
        %2813 = vmatpush2.bf16.msra.mxu0 0
        %2814 = vmatprep.subr.bf16.mxu0 0
        %2815 = vmatpush2.bf16.msra.mxu0 0
        %2816 = vmatprep.subr.bf16.mxu0 0
        %2817 = vmatpush2.bf16.msra.mxu0 0
        %2818 = vmatprep.subr.bf16.mxu0 0
        %2819 = vmatpush2.bf16.msra.mxu0 0
        %2820 = vmatprep.subr.bf16.mxu0 0
        %2821 = vmatpush2.bf16.msra.mxu0 0
        %2822 = vmatprep.subr.bf16.mxu0 0
        %2823 = vmatpush2.bf16.msra.mxu0 0
        %2824 = vmatprep.subr.bf16.mxu0 0
        %2825 = vmatpush2.bf16.msra.mxu0 0
        %2826 = vmatprep.subr.bf16.mxu0 0
        %2827 = vmatpush2.bf16.msra.mxu0 0
        %2828 = vmatprep.mubr.bf16.mxu0 0
        %2829 = vmatmul.mubr.bf16.gmra.mxu0 %v2791
        %v2830 = vpop.f32.mrf.mxu0
        %v2831 = vadd.f32 0.0, %v2830
        %v2832 = vpop.f32.mrf.mxu0
        %v2833 = vpop.f32.mrf.mxu0
        %v2834 = vpop.f32.mrf.mxu0
        %2835 = vdwg.mxu0
        %2837 = vrot.lane.b32.xlu0 %v2739, 8
        %v2838 = vpop.permute.xlu0 %2837
        %2841 = vrot.lane.b32.xlu0 %v2785, 16
        %v2842 = vpop.permute.xlu0 %2841
        %2845 = vrot.lane.b32.xlu0 %v2831, 24
        %v2846 = vpop.permute.xlu0 %2845
        %v2848 = vsel %vm729, %v2693, %v2838
        %v2849 = vsel %vm1177, %v2848, %v2842
        %v2850 = vsel %vm1179, %v2849, %v2846
        %v2851 = vpack.c.bf16 %v2850, %v2850
        %v2852 = vlaneseq
        %v2853 = vshrl.u32 %v2852, 7
        %v2854 = vsub.s32 0, %v2853
        %v2855 = vrot.slane %v2259, %v2854
        %v2860 = vunpack.c.l.b16 %v2234
        %v2861 = vunpack.c.l.b16 %v2235
        %v2862 = vunpack.c.l.b16 %v2236
        %v2863 = vunpack.c.l.b16 %v2237
        %v2864 = vpack.c.b16 %v2861, %v2860
        %v2865 = vpack.c.b16 %v2863, %v2862
        %v2869 = vsel %vm604, %v2851, 0
        %2871 = vmatprep.subr.bf16.mxu0 0
        %2872 = vmatpush1.bf16.msra.mxu0 0
        %2873 = vmatprep.subr.bf16.mxu0 0
        %2874 = vmatpush1.bf16.msra.mxu0 0
        %2875 = vmatprep.subr.bf16.mxu0 0
        %2876 = vmatpush1.bf16.msra.mxu0 0
        %2877 = vmatprep.subr.bf16.mxu0 0
        %2878 = vmatpush1.bf16.msra.mxu0 0
        %2879 = vmatprep.subr.bf16.mxu0 0
        %2880 = vmatpush1.bf16.msra.mxu0 0
        %2881 = vmatprep.subr.bf16.mxu0 0
        %2882 = vmatpush1.bf16.msra.mxu0 0
        %2883 = vmatprep.subr.bf16.mxu0 0
        %2884 = vmatpush1.bf16.msra.mxu0 %v2865
        %2885 = vmatprep.subr.bf16.mxu0 0
        %2886 = vmatpush1.bf16.msra.mxu0 %v2864
        %2887 = vmatprep.subr.bf16.mxu0 0
        %2888 = vmatpush2.bf16.msra.mxu0 0
        %2889 = vmatprep.subr.bf16.mxu0 0
        %2890 = vmatpush2.bf16.msra.mxu0 0
        %2891 = vmatprep.subr.bf16.mxu0 0
        %2892 = vmatpush2.bf16.msra.mxu0 0
        %2893 = vmatprep.subr.bf16.mxu0 0
        %2894 = vmatpush2.bf16.msra.mxu0 0
        %2895 = vmatprep.subr.bf16.mxu0 0
        %2896 = vmatpush2.bf16.msra.mxu0 0
        %2897 = vmatprep.subr.bf16.mxu0 0
        %2898 = vmatpush2.bf16.msra.mxu0 0
        %2899 = vmatprep.subr.bf16.mxu0 0
        %2900 = vmatpush2.bf16.msra.mxu0 0
        %2901 = vmatprep.subr.bf16.mxu0 0
        %2902 = vmatpush2.bf16.msra.mxu0 0
        %2903 = vmatprep.mubr.bf16.mxu0 0
        %2904 = vmatmul.mubr.bf16.gmra.mxu0 %v2869
        %v2905 = vpop.f32.mrf.mxu0
        %v2906 = vadd.f32 %v2855, %v2905
        %v2907 = vpop.f32.mrf.mxu0
        %v2908 = vpop.f32.mrf.mxu0
        %v2909 = vpop.f32.mrf.mxu0
        %2910 = vdwg.mxu0
        %v2911 = vadd.f32 %v2164, %v2906
        %v2912 = vsel %vm604, %v2911, 0.0
        %2913 = vadd.xlane.f32.xlu0 %v2912
        %v2914 = vpop.xlane.xlu0 %2913
        %v2915 = vmul.f32 %v2914, %v1245
        %v2916 = vsub.f32 %v2911, %v2915
        %v2917 = vmul.f32 %v2916, %v2916
        %v2918 = vsel %vm604, %v2917, 0.0
        %2919 = vadd.xlane.f32.xlu0 %v2918
        %v2920 = vpop.xlane.xlu0 %2919
        %v2921 = vmul.f32 %v2920, %v1245
        %v2922 = vadd.f32 %v2921, 1e-05
        %v2923 = vrsqrt.pop %v2922
        %v2924 = vmul.f32 %v2916, %v2923
        %v2925 = vlaneseq
        %v2926 = vshrl.u32 %v2925, 7
        %v2927 = vsub.s32 2, %v2926
        %v2928 = vrot.slane %v2259, %v2927
        %v2929 = vmul.f32 %v2924, %v2928
        %v2930 = vlaneseq
        %v2931 = vshrl.u32 %v2930, 7
        %v2932 = vsub.s32 3, %v2931
        %v2933 = vrot.slane %v2259, %v2932
        %v2934 = vadd.f32 %v2929, %v2933
        %v2935 = vadd.f32 %v2934, %v547
        %v2936 = vpack.c.bf16 %v2935, %v2935
        %v2937 = vlaneseq
        %v2938 = vshrl.u32 %v2937, 7
        %v2939 = vsub.s32 1, %v2938
        %v2940 = vrot.slane %v2232, %v2939
        %v2945 = vunpack.c.l.b16 %v2227
        %v2946 = vunpack.c.l.b16 %v2228
        %v2947 = vunpack.c.l.b16 %v2229
        %v2948 = vunpack.c.l.b16 %v2230
        %v2949 = vpack.c.b16 %v2946, %v2945
        %v2950 = vpack.c.b16 %v2948, %v2947
        %v2954 = vsel %vm604, %v2936, 0
        %2956 = vmatprep.subr.bf16.mxu0 0
        %2957 = vmatpush1.bf16.msra.mxu0 0
        %2958 = vmatprep.subr.bf16.mxu0 0
        %2959 = vmatpush1.bf16.msra.mxu0 0
        %2960 = vmatprep.subr.bf16.mxu0 0
        %2961 = vmatpush1.bf16.msra.mxu0 0
        %2962 = vmatprep.subr.bf16.mxu0 0
        %2963 = vmatpush1.bf16.msra.mxu0 0
        %2964 = vmatprep.subr.bf16.mxu0 0
        %2965 = vmatpush1.bf16.msra.mxu0 0
        %2966 = vmatprep.subr.bf16.mxu0 0
        %2967 = vmatpush1.bf16.msra.mxu0 0
        %2968 = vmatprep.subr.bf16.mxu0 0
        %2969 = vmatpush1.bf16.msra.mxu0 %v2950
        %2970 = vmatprep.subr.bf16.mxu0 0
        %2971 = vmatpush1.bf16.msra.mxu0 %v2949
        %2972 = vmatprep.subr.bf16.mxu0 0
        %2973 = vmatpush2.bf16.msra.mxu0 0
        %2974 = vmatprep.subr.bf16.mxu0 0
        %2975 = vmatpush2.bf16.msra.mxu0 0
        %2976 = vmatprep.subr.bf16.mxu0 0
        %2977 = vmatpush2.bf16.msra.mxu0 0
        %2978 = vmatprep.subr.bf16.mxu0 0
        %2979 = vmatpush2.bf16.msra.mxu0 0
        %2980 = vmatprep.subr.bf16.mxu0 0
        %2981 = vmatpush2.bf16.msra.mxu0 0
        %2982 = vmatprep.subr.bf16.mxu0 0
        %2983 = vmatpush2.bf16.msra.mxu0 0
        %2984 = vmatprep.subr.bf16.mxu0 0
        %2985 = vmatpush2.bf16.msra.mxu0 0
        %2986 = vmatprep.subr.bf16.mxu0 0
        %2987 = vmatpush2.bf16.msra.mxu0 0
        %2988 = vmatprep.mubr.bf16.mxu0 0
        %2989 = vmatmul.mubr.bf16.gmra.mxu0 %v2954
        %v2990 = vpop.f32.mrf.mxu0
        %v2991 = vadd.f32 %v2940, %v2990
        %v2992 = vpop.f32.mrf.mxu0
        %v2993 = vpop.f32.mrf.mxu0
        %v2994 = vpop.f32.mrf.mxu0
        %2995 = vdwg.mxu0
        %2996 = vrot.lane.b32.xlu0 %v2949, 96
        %v2997 = vpop.permute.xlu0 %2996
        %2998 = vrot.lane.b32.xlu0 %v2950, 96
        %v2999 = vpop.permute.xlu0 %2998
        %3003 = vrot.lane.b32.xlu0 %v2940, 96
        %v3004 = vpop.permute.xlu0 %3003
        %3006 = vmatprep.subr.bf16.mxu0 0
        %3007 = vmatpush1.bf16.msra.mxu0 0
        %3008 = vmatprep.subr.bf16.mxu0 0
        %3009 = vmatpush1.bf16.msra.mxu0 0
        %3010 = vmatprep.subr.bf16.mxu0 0
        %3011 = vmatpush1.bf16.msra.mxu0 0
        %3012 = vmatprep.subr.bf16.mxu0 0
        %3013 = vmatpush1.bf16.msra.mxu0 0
        %3014 = vmatprep.subr.bf16.mxu0 0
        %3015 = vmatpush1.bf16.msra.mxu0 0
        %3016 = vmatprep.subr.bf16.mxu0 0
        %3017 = vmatpush1.bf16.msra.mxu0 0
        %3018 = vmatprep.subr.bf16.mxu0 0
        %3019 = vmatpush1.bf16.msra.mxu0 %v2999
        %3020 = vmatprep.subr.bf16.mxu0 0
        %3021 = vmatpush1.bf16.msra.mxu0 %v2997
        %3022 = vmatprep.subr.bf16.mxu0 0
        %3023 = vmatpush2.bf16.msra.mxu0 0
        %3024 = vmatprep.subr.bf16.mxu0 0
        %3025 = vmatpush2.bf16.msra.mxu0 0
        %3026 = vmatprep.subr.bf16.mxu0 0
        %3027 = vmatpush2.bf16.msra.mxu0 0
        %3028 = vmatprep.subr.bf16.mxu0 0
        %3029 = vmatpush2.bf16.msra.mxu0 0
        %3030 = vmatprep.subr.bf16.mxu0 0
        %3031 = vmatpush2.bf16.msra.mxu0 0
        %3032 = vmatprep.subr.bf16.mxu0 0
        %3033 = vmatpush2.bf16.msra.mxu0 0
        %3034 = vmatprep.subr.bf16.mxu0 0
        %3035 = vmatpush2.bf16.msra.mxu0 0
        %3036 = vmatprep.subr.bf16.mxu0 0
        %3037 = vmatpush2.bf16.msra.mxu0 0
        %3038 = vmatprep.mubr.bf16.mxu0 0
        %3039 = vmatmul.mubr.bf16.gmra.mxu0 %v1339
        %v3040 = vpop.f32.mrf.mxu0
        %v3041 = vadd.f32 %v3004, %v3040
        %v3042 = vpop.f32.mrf.mxu0
        %v3043 = vpop.f32.mrf.mxu0
        %v3044 = vadd.f32 %v3004, %v3043
        %v3045 = vpop.f32.mrf.mxu0
        %3046 = vdwg.mxu0
        %3047 = vrot.lane.b32.xlu0 %v2949, 64
        %v3048 = vpop.permute.xlu0 %3047
        %3049 = vrot.lane.b32.xlu0 %v2950, 64
        %v3050 = vpop.permute.xlu0 %3049
        %3053 = vrot.lane.b32.xlu0 %v2940, 64
        %v3054 = vpop.permute.xlu0 %3053
        %3056 = vmatprep.subr.bf16.mxu0 0
        %3057 = vmatpush1.bf16.msra.mxu0 0
        %3058 = vmatprep.subr.bf16.mxu0 0
        %3059 = vmatpush1.bf16.msra.mxu0 0
        %3060 = vmatprep.subr.bf16.mxu0 0
        %3061 = vmatpush1.bf16.msra.mxu0 0
        %3062 = vmatprep.subr.bf16.mxu0 0
        %3063 = vmatpush1.bf16.msra.mxu0 0
        %3064 = vmatprep.subr.bf16.mxu0 0
        %3065 = vmatpush1.bf16.msra.mxu0 0
        %3066 = vmatprep.subr.bf16.mxu0 0
        %3067 = vmatpush1.bf16.msra.mxu0 0
        %3068 = vmatprep.subr.bf16.mxu0 0
        %3069 = vmatpush1.bf16.msra.mxu0 %v3050
        %3070 = vmatprep.subr.bf16.mxu0 0
        %3071 = vmatpush1.bf16.msra.mxu0 %v3048
        %3072 = vmatprep.subr.bf16.mxu0 0
        %3073 = vmatpush2.bf16.msra.mxu0 0
        %3074 = vmatprep.subr.bf16.mxu0 0
        %3075 = vmatpush2.bf16.msra.mxu0 0
        %3076 = vmatprep.subr.bf16.mxu0 0
        %3077 = vmatpush2.bf16.msra.mxu0 0
        %3078 = vmatprep.subr.bf16.mxu0 0
        %3079 = vmatpush2.bf16.msra.mxu0 0
        %3080 = vmatprep.subr.bf16.mxu0 0
        %3081 = vmatpush2.bf16.msra.mxu0 0
        %3082 = vmatprep.subr.bf16.mxu0 0
        %3083 = vmatpush2.bf16.msra.mxu0 0
        %3084 = vmatprep.subr.bf16.mxu0 0
        %3085 = vmatpush2.bf16.msra.mxu0 0
        %3086 = vmatprep.subr.bf16.mxu0 0
        %3087 = vmatpush2.bf16.msra.mxu0 0
        %3088 = vmatprep.mubr.bf16.mxu0 0
        %3089 = vmatmul.mubr.bf16.gmra.mxu0 %v1393
        %v3090 = vpop.f32.mrf.mxu0
        %v3091 = vadd.f32 %v3054, %v3090
        %v3092 = vpop.f32.mrf.mxu0
        %v3093 = vpop.f32.mrf.mxu0
        %v3094 = vadd.f32 %v3054, %v3093
        %v3095 = vpop.f32.mrf.mxu0
        %3096 = vdwg.mxu0
        %3098 = vrot.lane.b32.xlu0 %v2991, 120
        %v3099 = vpop.permute.xlu0 %3098
        %3101 = vrot.lane.b32.xlu0 %v2991, 112
        %v3102 = vpop.permute.xlu0 %3101
        %3104 = vrot.lane.b32.xlu0 %v2991, 104
        %v3105 = vpop.permute.xlu0 %3104
        %3109 = vrot.lane.b32.xlu0 %v3041, 120
        %v3110 = vpop.permute.xlu0 %3109
        %3111 = vrot.lane.b32.xlu0 %v3044, 120
        %v3112 = vpop.permute.xlu0 %3111
        %3115 = vrot.lane.b32.xlu0 %v3041, 112
        %v3116 = vpop.permute.xlu0 %3115
        %3117 = vrot.lane.b32.xlu0 %v3044, 112
        %v3118 = vpop.permute.xlu0 %3117
        %3121 = vrot.lane.b32.xlu0 %v3041, 104
        %v3122 = vpop.permute.xlu0 %3121
        %3123 = vrot.lane.b32.xlu0 %v3044, 104
        %v3124 = vpop.permute.xlu0 %3123
        %3129 = vrot.lane.b32.xlu0 %v3091, 120
        %v3130 = vpop.permute.xlu0 %3129
        %3131 = vrot.lane.b32.xlu0 %v3094, 120
        %v3132 = vpop.permute.xlu0 %3131
        %3135 = vrot.lane.b32.xlu0 %v3091, 112
        %v3136 = vpop.permute.xlu0 %3135
        %3137 = vrot.lane.b32.xlu0 %v3094, 112
        %v3138 = vpop.permute.xlu0 %3137
        %3141 = vrot.lane.b32.xlu0 %v3091, 104
        %v3142 = vpop.permute.xlu0 %3141
        %3143 = vrot.lane.b32.xlu0 %v3094, 104
        %v3144 = vpop.permute.xlu0 %3143
        %v3147 = vpack.c.bf16 %v2991, %v2991
        %v3148 = vpack.c.bf16 %v3099, %v3099
        %v3149 = vpack.c.bf16 %v3102, %v3102
        %v3150 = vpack.c.bf16 %v3105, %v3105
        %v3151 = vpack.c.bf16 %v3044, %v3041
        %v3152 = vpack.c.bf16 %v3112, %v3110
        %v3153 = vpack.c.bf16 %v3118, %v3116
        %v3154 = vpack.c.bf16 %v3124, %v3122
        %v3156 = vsel %vm729, %v3147, 0
        %v3159 = vsel %vm729, %v3151, 0
        %3161 = vmatprep.subr.bf16.mxu0 0
        %3162 = vmatpush1.bf16.xpose.msra.mxu0 0
        %3163 = vmatprep.subr.bf16.mxu0 0
        %3164 = vmatpush1.bf16.xpose.msra.mxu0 0
        %3165 = vmatprep.subr.bf16.mxu0 0
        %3166 = vmatpush1.bf16.xpose.msra.mxu0 0
        %3167 = vmatprep.subr.bf16.mxu0 0
        %3168 = vmatpush1.bf16.xpose.msra.mxu0 0
        %3169 = vmatprep.subr.bf16.mxu0 0
        %3170 = vmatpush1.bf16.xpose.msra.mxu0 0
        %3171 = vmatprep.subr.bf16.mxu0 0
        %3172 = vmatpush1.bf16.xpose.msra.mxu0 0
        %3173 = vmatprep.subr.bf16.mxu0 0
        %3174 = vmatpush1.bf16.xpose.msra.mxu0 0
        %3175 = vmatprep.subr.bf16.mxu0 0
        %3176 = vmatpush1.bf16.xpose.msra.mxu0 %v3159
        %3177 = vmatprep.subr.bf16.mxu0 0
        %3178 = vmatpush2.bf16.xpose.msra.mxu0 0
        %3179 = vmatprep.subr.bf16.mxu0 0
        %3180 = vmatpush2.bf16.xpose.msra.mxu0 0
        %3181 = vmatprep.subr.bf16.mxu0 0
        %3182 = vmatpush2.bf16.xpose.msra.mxu0 0
        %3183 = vmatprep.subr.bf16.mxu0 0
        %3184 = vmatpush2.bf16.xpose.msra.mxu0 0
        %3185 = vmatprep.subr.bf16.mxu0 0
        %3186 = vmatpush2.bf16.xpose.msra.mxu0 0
        %3187 = vmatprep.subr.bf16.mxu0 0
        %3188 = vmatpush2.bf16.xpose.msra.mxu0 0
        %3189 = vmatprep.subr.bf16.mxu0 0
        %3190 = vmatpush2.bf16.xpose.msra.mxu0 0
        %3191 = vmatprep.subr.bf16.mxu0 0
        %3192 = vmatpush2.bf16.xpose.msra.mxu0 0
        %3193 = vmatprep.mubr.bf16.mxu0 0
        %3194 = vmatmul.mubr.bf16.gmra.mxu0 %v3156
        %v3195 = vpop.f32.mrf.mxu0
        %v3196 = vadd.f32 0.0, %v3195
        %v3197 = vpop.f32.mrf.mxu0
        %v3198 = vpop.f32.mrf.mxu0
        %v3199 = vpop.f32.mrf.mxu0
        %3200 = vdwg.mxu0
        %v3202 = vsel %vm729, %v3148, 0
        %v3205 = vsel %vm729, %v3152, 0
        %3207 = vmatprep.subr.bf16.mxu0 0
        %3208 = vmatpush1.bf16.xpose.msra.mxu0 0
        %3209 = vmatprep.subr.bf16.mxu0 0
        %3210 = vmatpush1.bf16.xpose.msra.mxu0 0
        %3211 = vmatprep.subr.bf16.mxu0 0
        %3212 = vmatpush1.bf16.xpose.msra.mxu0 0
        %3213 = vmatprep.subr.bf16.mxu0 0
        %3214 = vmatpush1.bf16.xpose.msra.mxu0 0
        %3215 = vmatprep.subr.bf16.mxu0 0
        %3216 = vmatpush1.bf16.xpose.msra.mxu0 0
        %3217 = vmatprep.subr.bf16.mxu0 0
        %3218 = vmatpush1.bf16.xpose.msra.mxu0 0
        %3219 = vmatprep.subr.bf16.mxu0 0
        %3220 = vmatpush1.bf16.xpose.msra.mxu0 0
        %3221 = vmatprep.subr.bf16.mxu0 0
        %3222 = vmatpush1.bf16.xpose.msra.mxu0 %v3205
        %3223 = vmatprep.subr.bf16.mxu0 0
        %3224 = vmatpush2.bf16.xpose.msra.mxu0 0
        %3225 = vmatprep.subr.bf16.mxu0 0
        %3226 = vmatpush2.bf16.xpose.msra.mxu0 0
        %3227 = vmatprep.subr.bf16.mxu0 0
        %3228 = vmatpush2.bf16.xpose.msra.mxu0 0
        %3229 = vmatprep.subr.bf16.mxu0 0
        %3230 = vmatpush2.bf16.xpose.msra.mxu0 0
        %3231 = vmatprep.subr.bf16.mxu0 0
        %3232 = vmatpush2.bf16.xpose.msra.mxu0 0
        %3233 = vmatprep.subr.bf16.mxu0 0
        %3234 = vmatpush2.bf16.xpose.msra.mxu0 0
        %3235 = vmatprep.subr.bf16.mxu0 0
        %3236 = vmatpush2.bf16.xpose.msra.mxu0 0
        %3237 = vmatprep.subr.bf16.mxu0 0
        %3238 = vmatpush2.bf16.xpose.msra.mxu0 0
        %3239 = vmatprep.mubr.bf16.mxu0 0
        %3240 = vmatmul.mubr.bf16.gmra.mxu0 %v3202
        %v3241 = vpop.f32.mrf.mxu0
        %v3242 = vadd.f32 0.0, %v3241
        %v3243 = vpop.f32.mrf.mxu0
        %v3244 = vpop.f32.mrf.mxu0
        %v3245 = vpop.f32.mrf.mxu0
        %3246 = vdwg.mxu0
        %v3248 = vsel %vm729, %v3149, 0
        %v3251 = vsel %vm729, %v3153, 0
        %3253 = vmatprep.subr.bf16.mxu0 0
        %3254 = vmatpush1.bf16.xpose.msra.mxu0 0
        %3255 = vmatprep.subr.bf16.mxu0 0
        %3256 = vmatpush1.bf16.xpose.msra.mxu0 0
        %3257 = vmatprep.subr.bf16.mxu0 0
        %3258 = vmatpush1.bf16.xpose.msra.mxu0 0
        %3259 = vmatprep.subr.bf16.mxu0 0
        %3260 = vmatpush1.bf16.xpose.msra.mxu0 0
        %3261 = vmatprep.subr.bf16.mxu0 0
        %3262 = vmatpush1.bf16.xpose.msra.mxu0 0
        %3263 = vmatprep.subr.bf16.mxu0 0
        %3264 = vmatpush1.bf16.xpose.msra.mxu0 0
        %3265 = vmatprep.subr.bf16.mxu0 0
        %3266 = vmatpush1.bf16.xpose.msra.mxu0 0
        %3267 = vmatprep.subr.bf16.mxu0 0
        %3268 = vmatpush1.bf16.xpose.msra.mxu0 %v3251
        %3269 = vmatprep.subr.bf16.mxu0 0
        %3270 = vmatpush2.bf16.xpose.msra.mxu0 0
        %3271 = vmatprep.subr.bf16.mxu0 0
        %3272 = vmatpush2.bf16.xpose.msra.mxu0 0
        %3273 = vmatprep.subr.bf16.mxu0 0
        %3274 = vmatpush2.bf16.xpose.msra.mxu0 0
        %3275 = vmatprep.subr.bf16.mxu0 0
        %3276 = vmatpush2.bf16.xpose.msra.mxu0 0
        %3277 = vmatprep.subr.bf16.mxu0 0
        %3278 = vmatpush2.bf16.xpose.msra.mxu0 0
        %3279 = vmatprep.subr.bf16.mxu0 0
        %3280 = vmatpush2.bf16.xpose.msra.mxu0 0
        %3281 = vmatprep.subr.bf16.mxu0 0
        %3282 = vmatpush2.bf16.xpose.msra.mxu0 0
        %3283 = vmatprep.subr.bf16.mxu0 0
        %3284 = vmatpush2.bf16.xpose.msra.mxu0 0
        %3285 = vmatprep.mubr.bf16.mxu0 0
        %3286 = vmatmul.mubr.bf16.gmra.mxu0 %v3248
        %v3287 = vpop.f32.mrf.mxu0
        %v3288 = vadd.f32 0.0, %v3287
        %v3289 = vpop.f32.mrf.mxu0
        %v3290 = vpop.f32.mrf.mxu0
        %v3291 = vpop.f32.mrf.mxu0
        %3292 = vdwg.mxu0
        %v3294 = vsel %vm729, %v3150, 0
        %v3297 = vsel %vm729, %v3154, 0
        %3299 = vmatprep.subr.bf16.mxu0 0
        %3300 = vmatpush1.bf16.xpose.msra.mxu0 0
        %3301 = vmatprep.subr.bf16.mxu0 0
        %3302 = vmatpush1.bf16.xpose.msra.mxu0 0
        %3303 = vmatprep.subr.bf16.mxu0 0
        %3304 = vmatpush1.bf16.xpose.msra.mxu0 0
        %3305 = vmatprep.subr.bf16.mxu0 0
        %3306 = vmatpush1.bf16.xpose.msra.mxu0 0
        %3307 = vmatprep.subr.bf16.mxu0 0
        %3308 = vmatpush1.bf16.xpose.msra.mxu0 0
        %3309 = vmatprep.subr.bf16.mxu0 0
        %3310 = vmatpush1.bf16.xpose.msra.mxu0 0
        %3311 = vmatprep.subr.bf16.mxu0 0
        %3312 = vmatpush1.bf16.xpose.msra.mxu0 0
        %3313 = vmatprep.subr.bf16.mxu0 0
        %3314 = vmatpush1.bf16.xpose.msra.mxu0 %v3297
        %3315 = vmatprep.subr.bf16.mxu0 0
        %3316 = vmatpush2.bf16.xpose.msra.mxu0 0
        %3317 = vmatprep.subr.bf16.mxu0 0
        %3318 = vmatpush2.bf16.xpose.msra.mxu0 0
        %3319 = vmatprep.subr.bf16.mxu0 0
        %3320 = vmatpush2.bf16.xpose.msra.mxu0 0
        %3321 = vmatprep.subr.bf16.mxu0 0
        %3322 = vmatpush2.bf16.xpose.msra.mxu0 0
        %3323 = vmatprep.subr.bf16.mxu0 0
        %3324 = vmatpush2.bf16.xpose.msra.mxu0 0
        %3325 = vmatprep.subr.bf16.mxu0 0
        %3326 = vmatpush2.bf16.xpose.msra.mxu0 0
        %3327 = vmatprep.subr.bf16.mxu0 0
        %3328 = vmatpush2.bf16.xpose.msra.mxu0 0
        %3329 = vmatprep.subr.bf16.mxu0 0
        %3330 = vmatpush2.bf16.xpose.msra.mxu0 0
        %3331 = vmatprep.mubr.bf16.mxu0 0
        %3332 = vmatmul.mubr.bf16.gmra.mxu0 %v3294
        %v3333 = vpop.f32.mrf.mxu0
        %v3334 = vadd.f32 0.0, %v3333
        %v3335 = vpop.f32.mrf.mxu0
        %v3336 = vpop.f32.mrf.mxu0
        %v3337 = vpop.f32.mrf.mxu0
        %3338 = vdwg.mxu0
        %v3339 = vmul.f32 %v3196, 0.35355338
        %v3340 = vmul.f32 %v3242, 0.35355338
        %v3341 = vmul.f32 %v3288, 0.35355338
        %v3342 = vmul.f32 %v3334, 0.35355338
        %v3343 = vsel %vm1177, %v3339, -inf
        %3344 = vmax.xlane.f32.xlu0 %v3343
        %v3345 = vpop.xlane.xlu0 %3344
        %v3346 = vsel %vm1177, %v3340, -inf
        %3347 = vmax.xlane.f32.xlu0 %v3346
        %v3348 = vpop.xlane.xlu0 %3347
        %v3349 = vsel %vm1177, %v3341, -inf
        %3350 = vmax.xlane.f32.xlu0 %v3349
        %v3351 = vpop.xlane.xlu0 %3350
        %v3352 = vsel %vm1177, %v3342, -inf
        %3353 = vmax.xlane.f32.xlu0 %v3352
        %v3354 = vpop.xlane.xlu0 %3353
        %v3355 = vsub.f32 %v3339, %v3345
        %v3356 = vsub.f32 %v3340, %v3348
        %v3357 = vsub.f32 %v3341, %v3351
        %v3358 = vsub.f32 %v3342, %v3354
        %v3359 = vmul.f32 %v3355, 1.442695
        %v3360 = vpow.pop %v3359
        %v3361 = vmul.f32 %v3356, 1.442695
        %v3362 = vpow.pop %v3361
        %v3363 = vmul.f32 %v3357, 1.442695
        %v3364 = vpow.pop %v3363
        %v3365 = vmul.f32 %v3358, 1.442695
        %v3366 = vpow.pop %v3365
        %v3367 = vsel %vm1177, %v3360, 0.0
        %3368 = vadd.xlane.f32.xlu0 %v3367
        %v3369 = vpop.xlane.xlu0 %3368
        %v3370 = vsel %vm1177, %v3362, 0.0
        %3371 = vadd.xlane.f32.xlu0 %v3370
        %v3372 = vpop.xlane.xlu0 %3371
        %v3373 = vsel %vm1177, %v3364, 0.0
        %3374 = vadd.xlane.f32.xlu0 %v3373
        %v3375 = vpop.xlane.xlu0 %3374
        %v3376 = vsel %vm1177, %v3366, 0.0
        %3377 = vadd.xlane.f32.xlu0 %v3376
        %v3378 = vpop.xlane.xlu0 %3377
        %v3379 = vrcp.pop %v3369
        %v3380 = vrcp.pop %v3372
        %v3381 = vrcp.pop %v3375
        %v3382 = vrcp.pop %v3378
        %v3383 = vmul.f32 %v3360, %v3379
        %v3384 = vmul.f32 %v3362, %v3380
        %v3385 = vmul.f32 %v3364, %v3381
        %v3386 = vmul.f32 %v3366, %v3382
        %v3387 = vpack.c.bf16 %v3383, %v3383
        %v3388 = vpack.c.bf16 %v3384, %v3384
        %v3389 = vpack.c.bf16 %v3385, %v3385
        %v3390 = vpack.c.bf16 %v3386, %v3386
        %v3391 = vpack.c.bf16 %v3094, %v3091
        %v3392 = vpack.c.bf16 %v3132, %v3130
        %v3393 = vpack.c.bf16 %v3138, %v3136
        %v3394 = vpack.c.bf16 %v3144, %v3142
        %v3396 = vsel %vm1177, %v3387, 0
        %3398 = vmatprep.subr.bf16.mxu0 0
        %3399 = vmatpush1.bf16.msra.mxu0 0
        %3400 = vmatprep.subr.bf16.mxu0 0
        %3401 = vmatpush1.bf16.msra.mxu0 0
        %3402 = vmatprep.subr.bf16.mxu0 0
        %3403 = vmatpush1.bf16.msra.mxu0 0
        %3404 = vmatprep.subr.bf16.mxu0 0
        %3405 = vmatpush1.bf16.msra.mxu0 0
        %3406 = vmatprep.subr.bf16.mxu0 0
        %3407 = vmatpush1.bf16.msra.mxu0 0
        %3408 = vmatprep.subr.bf16.mxu0 0
        %3409 = vmatpush1.bf16.msra.mxu0 0
        %3410 = vmatprep.subr.bf16.mxu0 0
        %3411 = vmatpush1.bf16.msra.mxu0 0
        %3412 = vmatprep.subr.bf16.mxu0 0
        %3413 = vmatpush1.bf16.msra.mxu0 %v3391
        %3414 = vmatprep.subr.bf16.mxu0 0
        %3415 = vmatpush2.bf16.msra.mxu0 0
        %3416 = vmatprep.subr.bf16.mxu0 0
        %3417 = vmatpush2.bf16.msra.mxu0 0
        %3418 = vmatprep.subr.bf16.mxu0 0
        %3419 = vmatpush2.bf16.msra.mxu0 0
        %3420 = vmatprep.subr.bf16.mxu0 0
        %3421 = vmatpush2.bf16.msra.mxu0 0
        %3422 = vmatprep.subr.bf16.mxu0 0
        %3423 = vmatpush2.bf16.msra.mxu0 0
        %3424 = vmatprep.subr.bf16.mxu0 0
        %3425 = vmatpush2.bf16.msra.mxu0 0
        %3426 = vmatprep.subr.bf16.mxu0 0
        %3427 = vmatpush2.bf16.msra.mxu0 0
        %3428 = vmatprep.subr.bf16.mxu0 0
        %3429 = vmatpush2.bf16.msra.mxu0 0
        %3430 = vmatprep.mubr.bf16.mxu0 0
        %3431 = vmatmul.mubr.bf16.gmra.mxu0 %v3396
        %v3432 = vpop.f32.mrf.mxu0
        %v3433 = vadd.f32 0.0, %v3432
        %v3434 = vpop.f32.mrf.mxu0
        %v3435 = vpop.f32.mrf.mxu0
        %v3436 = vpop.f32.mrf.mxu0
        %3437 = vdwg.mxu0
        %v3439 = vsel %vm1177, %v3388, 0
        %3441 = vmatprep.subr.bf16.mxu0 0
        %3442 = vmatpush1.bf16.msra.mxu0 0
        %3443 = vmatprep.subr.bf16.mxu0 0
        %3444 = vmatpush1.bf16.msra.mxu0 0
        %3445 = vmatprep.subr.bf16.mxu0 0
        %3446 = vmatpush1.bf16.msra.mxu0 0
        %3447 = vmatprep.subr.bf16.mxu0 0
        %3448 = vmatpush1.bf16.msra.mxu0 0
        %3449 = vmatprep.subr.bf16.mxu0 0
        %3450 = vmatpush1.bf16.msra.mxu0 0
        %3451 = vmatprep.subr.bf16.mxu0 0
        %3452 = vmatpush1.bf16.msra.mxu0 0
        %3453 = vmatprep.subr.bf16.mxu0 0
        %3454 = vmatpush1.bf16.msra.mxu0 0
        %3455 = vmatprep.subr.bf16.mxu0 0
        %3456 = vmatpush1.bf16.msra.mxu0 %v3392
        %3457 = vmatprep.subr.bf16.mxu0 0
        %3458 = vmatpush2.bf16.msra.mxu0 0
        %3459 = vmatprep.subr.bf16.mxu0 0
        %3460 = vmatpush2.bf16.msra.mxu0 0
        %3461 = vmatprep.subr.bf16.mxu0 0
        %3462 = vmatpush2.bf16.msra.mxu0 0
        %3463 = vmatprep.subr.bf16.mxu0 0
        %3464 = vmatpush2.bf16.msra.mxu0 0
        %3465 = vmatprep.subr.bf16.mxu0 0
        %3466 = vmatpush2.bf16.msra.mxu0 0
        %3467 = vmatprep.subr.bf16.mxu0 0
        %3468 = vmatpush2.bf16.msra.mxu0 0
        %3469 = vmatprep.subr.bf16.mxu0 0
        %3470 = vmatpush2.bf16.msra.mxu0 0
        %3471 = vmatprep.subr.bf16.mxu0 0
        %3472 = vmatpush2.bf16.msra.mxu0 0
        %3473 = vmatprep.mubr.bf16.mxu0 0
        %3474 = vmatmul.mubr.bf16.gmra.mxu0 %v3439
        %v3475 = vpop.f32.mrf.mxu0
        %v3476 = vadd.f32 0.0, %v3475
        %v3477 = vpop.f32.mrf.mxu0
        %v3478 = vpop.f32.mrf.mxu0
        %v3479 = vpop.f32.mrf.mxu0
        %3480 = vdwg.mxu0
        %v3482 = vsel %vm1177, %v3389, 0
        %3484 = vmatprep.subr.bf16.mxu0 0
        %3485 = vmatpush1.bf16.msra.mxu0 0
        %3486 = vmatprep.subr.bf16.mxu0 0
        %3487 = vmatpush1.bf16.msra.mxu0 0
        %3488 = vmatprep.subr.bf16.mxu0 0
        %3489 = vmatpush1.bf16.msra.mxu0 0
        %3490 = vmatprep.subr.bf16.mxu0 0
        %3491 = vmatpush1.bf16.msra.mxu0 0
        %3492 = vmatprep.subr.bf16.mxu0 0
        %3493 = vmatpush1.bf16.msra.mxu0 0
        %3494 = vmatprep.subr.bf16.mxu0 0
        %3495 = vmatpush1.bf16.msra.mxu0 0
        %3496 = vmatprep.subr.bf16.mxu0 0
        %3497 = vmatpush1.bf16.msra.mxu0 0
        %3498 = vmatprep.subr.bf16.mxu0 0
        %3499 = vmatpush1.bf16.msra.mxu0 %v3393
        %3500 = vmatprep.subr.bf16.mxu0 0
        %3501 = vmatpush2.bf16.msra.mxu0 0
        %3502 = vmatprep.subr.bf16.mxu0 0
        %3503 = vmatpush2.bf16.msra.mxu0 0
        %3504 = vmatprep.subr.bf16.mxu0 0
        %3505 = vmatpush2.bf16.msra.mxu0 0
        %3506 = vmatprep.subr.bf16.mxu0 0
        %3507 = vmatpush2.bf16.msra.mxu0 0
        %3508 = vmatprep.subr.bf16.mxu0 0
        %3509 = vmatpush2.bf16.msra.mxu0 0
        %3510 = vmatprep.subr.bf16.mxu0 0
        %3511 = vmatpush2.bf16.msra.mxu0 0
        %3512 = vmatprep.subr.bf16.mxu0 0
        %3513 = vmatpush2.bf16.msra.mxu0 0
        %3514 = vmatprep.subr.bf16.mxu0 0
        %3515 = vmatpush2.bf16.msra.mxu0 0
        %3516 = vmatprep.mubr.bf16.mxu0 0
        %3517 = vmatmul.mubr.bf16.gmra.mxu0 %v3482
        %v3518 = vpop.f32.mrf.mxu0
        %v3519 = vadd.f32 0.0, %v3518
        %v3520 = vpop.f32.mrf.mxu0
        %v3521 = vpop.f32.mrf.mxu0
        %v3522 = vpop.f32.mrf.mxu0
        %3523 = vdwg.mxu0
        %v3525 = vsel %vm1177, %v3390, 0
        %3527 = vmatprep.subr.bf16.mxu0 0
        %3528 = vmatpush1.bf16.msra.mxu0 0
        %3529 = vmatprep.subr.bf16.mxu0 0
        %3530 = vmatpush1.bf16.msra.mxu0 0
        %3531 = vmatprep.subr.bf16.mxu0 0
        %3532 = vmatpush1.bf16.msra.mxu0 0
        %3533 = vmatprep.subr.bf16.mxu0 0
        %3534 = vmatpush1.bf16.msra.mxu0 0
        %3535 = vmatprep.subr.bf16.mxu0 0
        %3536 = vmatpush1.bf16.msra.mxu0 0
        %3537 = vmatprep.subr.bf16.mxu0 0
        %3538 = vmatpush1.bf16.msra.mxu0 0
        %3539 = vmatprep.subr.bf16.mxu0 0
        %3540 = vmatpush1.bf16.msra.mxu0 0
        %3541 = vmatprep.subr.bf16.mxu0 0
        %3542 = vmatpush1.bf16.msra.mxu0 %v3394
        %3543 = vmatprep.subr.bf16.mxu0 0
        %3544 = vmatpush2.bf16.msra.mxu0 0
        %3545 = vmatprep.subr.bf16.mxu0 0
        %3546 = vmatpush2.bf16.msra.mxu0 0
        %3547 = vmatprep.subr.bf16.mxu0 0
        %3548 = vmatpush2.bf16.msra.mxu0 0
        %3549 = vmatprep.subr.bf16.mxu0 0
        %3550 = vmatpush2.bf16.msra.mxu0 0
        %3551 = vmatprep.subr.bf16.mxu0 0
        %3552 = vmatpush2.bf16.msra.mxu0 0
        %3553 = vmatprep.subr.bf16.mxu0 0
        %3554 = vmatpush2.bf16.msra.mxu0 0
        %3555 = vmatprep.subr.bf16.mxu0 0
        %3556 = vmatpush2.bf16.msra.mxu0 0
        %3557 = vmatprep.subr.bf16.mxu0 0
        %3558 = vmatpush2.bf16.msra.mxu0 0
        %3559 = vmatprep.mubr.bf16.mxu0 0
        %3560 = vmatmul.mubr.bf16.gmra.mxu0 %v3525
        %v3561 = vpop.f32.mrf.mxu0
        %v3562 = vadd.f32 0.0, %v3561
        %v3563 = vpop.f32.mrf.mxu0
        %v3564 = vpop.f32.mrf.mxu0
        %v3565 = vpop.f32.mrf.mxu0
        %3566 = vdwg.mxu0
        %3568 = vrot.lane.b32.xlu0 %v3476, 8
        %v3569 = vpop.permute.xlu0 %3568
        %3572 = vrot.lane.b32.xlu0 %v3519, 16
        %v3573 = vpop.permute.xlu0 %3572
        %3576 = vrot.lane.b32.xlu0 %v3562, 24
        %v3577 = vpop.permute.xlu0 %3576
        %v3579 = vsel %vm729, %v3433, %v3569
        %v3580 = vsel %vm1177, %v3579, %v3573
        %v3581 = vsel %vm1179, %v3580, %v3577
        %v3582 = vpack.c.bf16 %v3581, %v3581
        %v3583 = vlaneseq
        %v3584 = vshrl.u32 %v3583, 7
        %v3585 = vsub.s32 1, %v3584
        %v3586 = vrot.slane %v2259, %v3585
        %v3591 = vunpack.c.l.b16 %v2238
        %v3592 = vunpack.c.l.b16 %v2239
        %v3593 = vunpack.c.l.b16 %v2240
        %v3594 = vunpack.c.l.b16 %v2241
        %v3595 = vpack.c.b16 %v3592, %v3591
        %v3596 = vpack.c.b16 %v3594, %v3593
        %v3600 = vsel %vm604, %v3582, 0
        %3602 = vmatprep.subr.bf16.mxu0 0
        %3603 = vmatpush1.bf16.msra.mxu0 0
        %3604 = vmatprep.subr.bf16.mxu0 0
        %3605 = vmatpush1.bf16.msra.mxu0 0
        %3606 = vmatprep.subr.bf16.mxu0 0
        %3607 = vmatpush1.bf16.msra.mxu0 0
        %3608 = vmatprep.subr.bf16.mxu0 0
        %3609 = vmatpush1.bf16.msra.mxu0 0
        %3610 = vmatprep.subr.bf16.mxu0 0
        %3611 = vmatpush1.bf16.msra.mxu0 0
        %3612 = vmatprep.subr.bf16.mxu0 0
        %3613 = vmatpush1.bf16.msra.mxu0 0
        %3614 = vmatprep.subr.bf16.mxu0 0
        %3615 = vmatpush1.bf16.msra.mxu0 %v3596
        %3616 = vmatprep.subr.bf16.mxu0 0
        %3617 = vmatpush1.bf16.msra.mxu0 %v3595
        %3618 = vmatprep.subr.bf16.mxu0 0
        %3619 = vmatpush2.bf16.msra.mxu0 0
        %3620 = vmatprep.subr.bf16.mxu0 0
        %3621 = vmatpush2.bf16.msra.mxu0 0
        %3622 = vmatprep.subr.bf16.mxu0 0
        %3623 = vmatpush2.bf16.msra.mxu0 0
        %3624 = vmatprep.subr.bf16.mxu0 0
        %3625 = vmatpush2.bf16.msra.mxu0 0
        %3626 = vmatprep.subr.bf16.mxu0 0
        %3627 = vmatpush2.bf16.msra.mxu0 0
        %3628 = vmatprep.subr.bf16.mxu0 0
        %3629 = vmatpush2.bf16.msra.mxu0 0
        %3630 = vmatprep.subr.bf16.mxu0 0
        %3631 = vmatpush2.bf16.msra.mxu0 0
        %3632 = vmatprep.subr.bf16.mxu0 0
        %3633 = vmatpush2.bf16.msra.mxu0 0
        %3634 = vmatprep.mubr.bf16.mxu0 0
        %3635 = vmatmul.mubr.bf16.gmra.mxu0 %v3600
        %v3636 = vpop.f32.mrf.mxu0
        %v3637 = vadd.f32 %v3586, %v3636
        %v3638 = vpop.f32.mrf.mxu0
        %v3639 = vpop.f32.mrf.mxu0
        %v3640 = vpop.f32.mrf.mxu0
        %3641 = vdwg.mxu0
        %v3642 = vadd.f32 %v2934, %v3637
        %v3643 = vsel %vm604, %v3642, 0.0
        %3644 = vadd.xlane.f32.xlu0 %v3643
        %v3645 = vpop.xlane.xlu0 %3644
        %v3646 = vmul.f32 %v3645, %v1245
        %v3647 = vsub.f32 %v3642, %v3646
        %v3648 = vmul.f32 %v3647, %v3647
        %v3649 = vsel %vm604, %v3648, 0.0
        %3650 = vadd.xlane.f32.xlu0 %v3649
        %v3651 = vpop.xlane.xlu0 %3650
        %v3652 = vmul.f32 %v3651, %v1245
        %v3653 = vadd.f32 %v3652, 1e-05
        %v3654 = vrsqrt.pop %v3653
        %v3655 = vmul.f32 %v3647, %v3654
        %v3656 = vlaneseq
        %v3657 = vshrl.u32 %v3656, 7
        %v3658 = vsub.s32 4, %v3657
        %v3659 = vrot.slane %v2259, %v3658
        %v3660 = vmul.f32 %v3655, %v3659
        %v3661 = vlaneseq
        %v3662 = vshrl.u32 %v3661, 7
        %v3663 = vsub.s32 5, %v3662
        %v3664 = vrot.slane %v2259, %v3663
        %v3665 = vadd.f32 %v3660, %v3664
        %v3666 = vpack.c.bf16 %v3665, %v3665
        %v3668 = vlaneseq
        %v3669 = vshrl.u32 %v3668, 7
        %v3670 = vsub.s32 0, %v3669
        %v3671 = vrot.slane %v2248, %v3670
        %v3677 = vunpack.c.l.b16 %v2243
        %v3678 = vunpack.c.l.b16 %v2244
        %v3679 = vunpack.c.l.b16 %v2245
        %v3680 = vunpack.c.l.b16 %v2246
        %v3681 = vpack.c.b16 %v3678, %v3677
        %v3682 = vpack.c.b16 %v3680, %v3679
        %v3686 = vsel %vm604, %v3666, 0
        %3688 = vmatprep.subr.bf16.mxu0 0
        %3689 = vmatpush1.bf16.msra.mxu0 0
        %3690 = vmatprep.subr.bf16.mxu0 0
        %3691 = vmatpush1.bf16.msra.mxu0 0
        %3692 = vmatprep.subr.bf16.mxu0 0
        %3693 = vmatpush1.bf16.msra.mxu0 0
        %3694 = vmatprep.subr.bf16.mxu0 0
        %3695 = vmatpush1.bf16.msra.mxu0 0
        %3696 = vmatprep.subr.bf16.mxu0 0
        %3697 = vmatpush1.bf16.msra.mxu0 0
        %3698 = vmatprep.subr.bf16.mxu0 0
        %3699 = vmatpush1.bf16.msra.mxu0 0
        %3700 = vmatprep.subr.bf16.mxu0 0
        %3701 = vmatpush1.bf16.msra.mxu0 %v3682
        %3702 = vmatprep.subr.bf16.mxu0 0
        %3703 = vmatpush1.bf16.msra.mxu0 %v3681
        %3704 = vmatprep.subr.bf16.mxu0 0
        %3705 = vmatpush2.bf16.msra.mxu0 0
        %3706 = vmatprep.subr.bf16.mxu0 0
        %3707 = vmatpush2.bf16.msra.mxu0 0
        %3708 = vmatprep.subr.bf16.mxu0 0
        %3709 = vmatpush2.bf16.msra.mxu0 0
        %3710 = vmatprep.subr.bf16.mxu0 0
        %3711 = vmatpush2.bf16.msra.mxu0 0
        %3712 = vmatprep.subr.bf16.mxu0 0
        %3713 = vmatpush2.bf16.msra.mxu0 0
        %3714 = vmatprep.subr.bf16.mxu0 0
        %3715 = vmatpush2.bf16.msra.mxu0 0
        %3716 = vmatprep.subr.bf16.mxu0 0
        %3717 = vmatpush2.bf16.msra.mxu0 0
        %3718 = vmatprep.subr.bf16.mxu0 0
        %3719 = vmatpush2.bf16.msra.mxu0 0
        %3720 = vmatprep.mubr.bf16.mxu0 0
        %3721 = vmatmul.mubr.bf16.gmra.mxu0 %v3686
        %v3722 = vpop.f32.mrf.mxu0
        %v3723 = vadd.f32 %v3671, %v3722
        %v3724 = vpop.f32.mrf.mxu0
        %v3725 = vpop.f32.mrf.mxu0
        %v3726 = vpop.f32.mrf.mxu0
        %3727 = vdwg.mxu0
        %v3728 = vmax.f32 %v3723, 0.0
        %v3729 = vpack.c.bf16 %v3728, %v3728
        %v3730 = vlaneseq
        %v3731 = vshrl.u32 %v3730, 7
        %v3732 = vsub.s32 2, %v3731
        %v3733 = vrot.slane %v2260, %v3732
        %v3742 = vunpack.c.l.b16 %v2250
        %v3743 = vunpack.c.l.b16 %v2251
        %v3744 = vunpack.c.l.b16 %v2252
        %v3745 = vunpack.c.l.b16 %v2253
        %v3746 = vunpack.c.l.b16 %v2254
        %v3747 = vunpack.c.l.b16 %v2255
        %v3748 = vunpack.c.l.b16 %v2256
        %v3749 = vunpack.c.l.b16 %v2257
        %v3750 = vpack.c.b16 %v3743, %v3742
        %v3751 = vpack.c.b16 %v3745, %v3744
        %v3752 = vpack.c.b16 %v3747, %v3746
        %v3753 = vpack.c.b16 %v3749, %v3748
        %v3759 = vsel %vm2097, %v3729, 0
        %3761 = vmatprep.subr.bf16.mxu0 0
        %3762 = vmatpush1.bf16.msra.mxu0 0
        %3763 = vmatprep.subr.bf16.mxu0 0
        %3764 = vmatpush1.bf16.msra.mxu0 0
        %3765 = vmatprep.subr.bf16.mxu0 0
        %3766 = vmatpush1.bf16.msra.mxu0 0
        %3767 = vmatprep.subr.bf16.mxu0 0
        %3768 = vmatpush1.bf16.msra.mxu0 0
        %3769 = vmatprep.subr.bf16.mxu0 0
        %3770 = vmatpush1.bf16.msra.mxu0 %v3753
        %3771 = vmatprep.subr.bf16.mxu0 0
        %3772 = vmatpush1.bf16.msra.mxu0 %v3752
        %3773 = vmatprep.subr.bf16.mxu0 0
        %3774 = vmatpush1.bf16.msra.mxu0 %v3751
        %3775 = vmatprep.subr.bf16.mxu0 0
        %3776 = vmatpush1.bf16.msra.mxu0 %v3750
        %3777 = vmatprep.subr.bf16.mxu0 0
        %3778 = vmatpush2.bf16.msra.mxu0 0
        %3779 = vmatprep.subr.bf16.mxu0 0
        %3780 = vmatpush2.bf16.msra.mxu0 0
        %3781 = vmatprep.subr.bf16.mxu0 0
        %3782 = vmatpush2.bf16.msra.mxu0 0
        %3783 = vmatprep.subr.bf16.mxu0 0
        %3784 = vmatpush2.bf16.msra.mxu0 0
        %3785 = vmatprep.subr.bf16.mxu0 0
        %3786 = vmatpush2.bf16.msra.mxu0 0
        %3787 = vmatprep.subr.bf16.mxu0 0
        %3788 = vmatpush2.bf16.msra.mxu0 0
        %3789 = vmatprep.subr.bf16.mxu0 0
        %3790 = vmatpush2.bf16.msra.mxu0 0
        %3791 = vmatprep.subr.bf16.mxu0 0
        %3792 = vmatpush2.bf16.msra.mxu0 0
        %3793 = vmatprep.mubr.bf16.mxu0 0
        %3794 = vmatmul.mubr.bf16.gmra.mxu0 %v3759
        %v3795 = vpop.f32.mrf.mxu0
        %v3796 = vadd.f32 %v3733, %v3795
        %v3797 = vpop.f32.mrf.mxu0
        %v3798 = vpop.f32.mrf.mxu0
        %v3799 = vpop.f32.mrf.mxu0
        %3800 = vdwg.mxu0
        %v3801 = vadd.f32 %v3665, %v3796
        %v3802 = vsel %vm604, %v3801, 0.0
        %3803 = vadd.xlane.f32.xlu0 %v3802
        %v3804 = vpop.xlane.xlu0 %3803
        %v3805 = vmul.f32 %v3804, %v1245
        %v3806 = vsub.f32 %v3801, %v3805
        %v3807 = vmul.f32 %v3806, %v3806
        %v3808 = vsel %vm604, %v3807, 0.0
        %3809 = vadd.xlane.f32.xlu0 %v3808
        %v3810 = vpop.xlane.xlu0 %3809
        %v3811 = vmul.f32 %v3810, %v1245
        %v3812 = vadd.f32 %v3811, 1e-05
        %v3813 = vrsqrt.pop %v3812
        %v3814 = vmul.f32 %v3806, %v3813
        %v3815 = vlaneseq
        %v3816 = vshrl.u32 %v3815, 7
        %v3817 = vsub.s32 6, %v3816
        %v3818 = vrot.slane %v2259, %v3817
        %v3819 = vmul.f32 %v3814, %v3818
        %v3820 = vlaneseq
        %v3821 = vshrl.u32 %v3820, 7
        %v3822 = vsub.s32 7, %v3821
        %v3823 = vrot.slane %v2259, %v3822
        %v3824 = vadd.f32 %v3819, %v3823
        %v3825 = vsel %vm604, %v3824, 0.0
        %3826 = vadd.xlane.f32.xlu0 %v3825
        %v3827 = vpop.xlane.xlu0 %3826
        %v3828 = vmul.f32 %v3827, %v1245
        %v3829 = vsub.f32 %v3824, %v3828
        %v3830 = vmul.f32 %v3829, %v3829
        %v3831 = vsel %vm604, %v3830, 0.0
        %3832 = vadd.xlane.f32.xlu0 %v3831
        %v3833 = vpop.xlane.xlu0 %3832
        %v3834 = vmul.f32 %v3833, %v1245
        %v3835 = vadd.f32 %v3834, 1e-05
        %v3836 = vrsqrt.pop %v3835
        %v3837 = vmul.f32 %v3829, %v3836
        %v3838 = vlaneseq
        %v3839 = vshrl.u32 %v3838, 7
        %v3840 = vsub.s32 0, %v3839
        %v3841 = vrot.slane %v2260, %v3840
        %v3842 = vmul.f32 %v3837, %v3841
        %v3843 = vlaneseq
        %v3844 = vshrl.u32 %v3843, 7
        %v3845 = vsub.s32 1, %v3844
        %v3846 = vrot.slane %v2260, %v3845
        %v3847 = vadd.f32 %v3842, %v3846
        %v3849 = vrot.slane %v3847, 1
        %3850 = vrot.lane.b32.xlu0 %v3849, 32
        %v3851 = vpop.permute.xlu0 %3850
        %v3853 = vrot.slane %v3847, 2
        %3854 = vrot.lane.b32.xlu0 %v3853, 64
        %v3855 = vpop.permute.xlu0 %3854
        %v3857 = vrot.slane %v3847, 3
        %3858 = vrot.lane.b32.xlu0 %v3857, 96
        %v3859 = vpop.permute.xlu0 %3858
        %v3861 = vrot.slane %v3847, 4
        %v3863 = vrot.slane %v3847, 5
        %3864 = vrot.lane.b32.xlu0 %v3863, 32
        %v3865 = vpop.permute.xlu0 %3864
        %v3867 = vrot.slane %v3847, 6
        %3868 = vrot.lane.b32.xlu0 %v3867, 64
        %v3869 = vpop.permute.xlu0 %3868
        %v3871 = vrot.slane %v3847, 7
        %3872 = vrot.lane.b32.xlu0 %v3871, 96
        %v3873 = vpop.permute.xlu0 %3872
        %v3875 = vsel %vm604, %v3847, %v3851
        %v3876 = vsel %vm2097, %v3875, %v3855
        %v3877 = vsel %vm2217, %v3876, %v3859
        %v3878 = vsel %vm604, %v3861, %v3865
        %v3879 = vsel %vm2097, %v3878, %v3869
        %v3880 = vsel %vm2217, %v3879, %v3873
        %v3883 = vrot.slane %v3877, 7
        %v3884 = vrot.slane %v3880, 7
        %vm3887 = vcmask 1040384
        %v3888 = vsel %vm3887, %v2218, %v3883
        %v3889 = vsel %vm3887, %v2221, %v3884
        %v3892 = vcombine.low %v3888, %v3889
        %v3894 = vunpack.c.l.s4 1983009808
        %v3895 = vunpack.c.0.s8 %v3894
        %v3896 = vlaneseq
        %v3897 = vshrl.u32 %v3896, 7
        %v3898 = vsub.s32 %v3895, %v3897
        %v3899 = vrot.slane %v3892, %v3898
        %3901 = vst [vmem:[%s544] sm:$0xf] %v3899
        %s3902 = sand.u32 %s294, 1
        %s3903 = scalar_lea.sflag [#allocation4], %s3902
        %s3904 = sand.u32 %s294, 1
        %s3905 = smul.addr %s3904, 4
        %s3906 = scalar_lea.vmem [#allocation13], %s3905
        // Predicated region
        $region89: #{tpu_custom_call.1} parent=63 // pred_check
          %p3907 = pneg %p304
        $region90: #{tpu_custom_call.1} parent=63 // pred_check_branch
          %3909 = sbr.rel (%p3907) target = $region92
        $region91: #{tpu_custom_call.1} parent=63 // pred_region
          %s3911 = ssub.s32 64, 64
          %3912 = vsyncadd %s3903, %s3911
          %s3913 = smul.addr %s35, 2
          %s3914 = smul.addr %s3913, 32
          %s3915 = scalar_lea.hbm %s11, %s3914
          %s3917 = sshll.u32 %s3906, 4
          %s3918 = int_to_ptr.vmem [resolvable:$true] %s3917
          %3920 = dma.vmem_to_hbm [thread:$0]  %s3918, 64, %s3915, %s3903
        $region92: #{tpu_custom_call.1} parent=63 // pred_fallthru
          _
      $region64: #{tpu_custom_call.1} parent=5 // pred_fallthru
        _
      %p3921 = scmp.le.s32.totalorder 2, %s30
      // Predicated region
      $region93: #{tpu_custom_call.1} parent=5 // pred_check
        %p3922 = pneg %p3921
      $region94: #{tpu_custom_call.1} parent=5 // pred_check_branch
        %3924 = sbr.rel (%p3922) target = $region96
      $region95: #{tpu_custom_call.1} parent=5 // pred_region
        %s3925 = ssub.s32 %s30, 2
        // Predicated region
        $region97: #{tpu_custom_call.1} parent=95 // pred_check
          %p3926 = pneg %p310
        $region98: #{tpu_custom_call.1} parent=95 // pred_check_branch
          %3928 = sbr.rel (%p3926) target = $region100
        $region99: #{tpu_custom_call.1} parent=95 // pred_region
          %s3929 = sand.u32 %s295, 1
          %s3930 = scalar_lea.sflag [#allocation4], %s3929
          %s3931 = sand.u32 %s295, 1
          %s3932 = smul.addr %s3931, 4
          %s3933 = scalar_lea.vmem [#allocation13], %s3932
          %3934 = dma.done %s3930, 64
        $region100: #{tpu_custom_call.1} parent=95 // pred_fallthru
          _
      $region96: #{tpu_custom_call.1} parent=5 // pred_fallthru
        _
    $region6: #{tpu_custom_call.1} parent=1 // loop_footer
      %s34 = sadd.s32 1, %s30
    $region7: #{tpu_custom_call.1} parent=1 // loop_footer_branch
      %29 = sbr.rel target = $region3
    $region8: #{tpu_custom_call.1} parent=1 // loop_exit
      _
    %3935 = vsyncpa [#allocation3], 1
    %s3936 = scalar_lea.sflag [#allocation3], 1
    %3937 = vsyncpa %s3936, 1
    %3938 = vsyncpa [#allocation6], 1
    %s3939 = scalar_lea.sflag [#allocation6], 1
    %3940 = vsyncpa %s3939, 1
    %3941 = vsyncpa [#allocation9], 1
    %s3942 = scalar_lea.sflag [#allocation9], 1
    %3943 = vsyncpa %s3942, 1
    %3944 = vsyncpa [#allocation12], 1
    %3945 = vsyncpa [#allocation4], 1
    %s3946 = scalar_lea.sflag [#allocation4], 1
    %3947 = vsyncpa %s3946, 1

</llo_original>
